<compile_context>
chip_gen: v6e
topology: v6e:2x2x1
jax: 0.10.0
libtpu: 0.0.40
codegen_flags: <defaults>
</compile_context>

<pallas_src>
import functools
import math

import jax
import jax.numpy as jnp
from jax.experimental import pallas as pl
from jax.experimental.pallas import tpu as pltpu


def _silu(x):
    return x * jax.nn.sigmoid(x)


def _round_up(x, m):
    return (x + m - 1) // m * m


# ----------------------------- Pallas kernel -------------------------------

def cogn_kernel(idx_both_col_ref,   # (2*TE, 1) int32: [recv tile ; send tile]
                recv_row_ref,       # (1, TE)   int32: recv indices, lane layout
                h_edge_ref,         # (TE, De_p)    bf16  (streamed)
                h_node_bf_ref,      # (N_p, Dn_p)   bf16  (resident gather operand)
                we1_e_ref, we1_in_ref, we1_out_ref, be1_ref,
                we2_ref, be2_ref,
                wn1_ref, bn1_ref, wn2_ref, bn2_ref,
                h_edge_out_ref,     # (TE, Deo_p)   bf16  (streamed)
                node_mlp_out_ref,   # (N_p, Dn_p)   f32   (resident; residual in wrapper)
                acc_ref):           # scratch (N_p, Deo_p) f32
    i = pl.program_id(0)
    te = h_edge_ref.shape[0]
    n_p = h_node_bf_ref.shape[0]

    @pl.when(i == 0)
    def _():
        acc_ref[...] = jnp.zeros_like(acc_ref)

    # ---- fused gather of receiver + sender node features (one MXU matmul) --
    idx_col = idx_both_col_ref[...]                                   # (2TE, 1)
    iota_n = jax.lax.broadcasted_iota(jnp.int32, (2 * te, n_p), 1)
    onehot_both = (iota_n == idx_col).astype(jnp.bfloat16)            # (2TE, N_p)
    gathered = jnp.dot(onehot_both, h_node_bf_ref[...],
                       preferred_element_type=jnp.float32)            # (2TE, Dn_p)
    h_node_in = gathered[:te].astype(jnp.bfloat16)                    # recv (lossless)
    h_node_out = gathered[te:].astype(jnp.bfloat16)                   # send (lossless)

    # ---- edge MLP: layer 1 as split-weight "concat" matmul, then layer 2 ---
    z = (jnp.dot(h_edge_ref[...], we1_e_ref[...],
                 preferred_element_type=jnp.float32)
         + jnp.dot(h_node_in, we1_in_ref[...],
                   preferred_element_type=jnp.float32)
         + jnp.dot(h_node_out, we1_out_ref[...],
                   preferred_element_type=jnp.float32)
         + be1_ref[...])
    z = _silu(z)
    z = jnp.dot(z.astype(jnp.bfloat16), we2_ref[...],
                preferred_element_type=jnp.float32) + be2_ref[...]
    h_edge_new = _silu(z)                                             # (TE, Deo_p) f32
    h_edge_new_bf = h_edge_new.astype(jnp.bfloat16)
    h_edge_out_ref[...] = h_edge_new_bf                               # bf16 writeback

    # ---- scatter-sum: transposed one-hot built directly (no XLU transpose) -
    recv_row = recv_row_ref[...]                                      # (1, TE)
    iota_node = jax.lax.broadcasted_iota(jnp.int32, (n_p, te), 0)
    onehot_recv_t = (iota_node == recv_row).astype(jnp.bfloat16)      # (N_p, TE)
    acc_ref[...] += jnp.dot(onehot_recv_t, h_edge_new_bf,
                            preferred_element_type=jnp.float32)       # (N_p, Deo_p)

    # ---- node MLP only at the last edge tile (residual added in wrapper) ---
    @pl.when(i == pl.num_programs(0) - 1)
    def _():
        agg = acc_ref[...]
        zz = jnp.dot(agg.astype(jnp.bfloat16), wn1_ref[...],
                     preferred_element_type=jnp.float32) + bn1_ref[...]
        zz = _silu(zz)
        zz = jnp.dot(zz.astype(jnp.bfloat16), wn2_ref[...],
                     preferred_element_type=jnp.float32) + bn2_ref[...]
        node_mlp_out_ref[...] = _silu(zz)


# ------------------------------ JAX wrapper ---------------------------------

@functools.partial(jax.jit, static_argnames=("tile_e",))
def cogn_layer_forward(h_edge, h_node, h_global, edge_indices, batch, params,
                       *, tile_e=256):
    """Mirrors coGNLayer.forward; returns (h_edge_new, h_node_new, None, None)."""
    del h_global, batch  # unused by the reference forward

    E, De = h_edge.shape
    N, Dn = h_node.shape
    H = params["we2"].shape[0]
    De_out = params["we2"].shape[1]
    Dn_out = params["wn2"].shape[1]
    assert Dn_out == Dn, "node residual requires node_mlp output dim == Dn"

    De_p = _round_up(De, 128)
    Dn_p = _round_up(Dn, 128)
    H_p = _round_up(H, 128)
    Deo_p = _round_up(De_out, 128)
    N_p = _round_up(N, 128)
    E_p = _round_up(E, tile_e)
    nt = E_p // tile_e

    def pad2(x, r, c):
        return jnp.pad(x, ((0, r - x.shape[0]), (0, c - x.shape[1])))

    # Activations (bf16 for the MXU / HBM streams; residual is added in f32
    # in the wrapper, so no resident f32 node copy is needed).
    h_edge_p = pad2(h_edge.astype(jnp.float32), E_p, De_p).astype(jnp.bfloat16)
    h_node_bf = pad2(h_node.astype(jnp.float32), N_p, Dn_p).astype(jnp.bfloat16)

    # Edge indices: padded edges get -1 so they neither gather nor scatter.
    recv = edge_indices[0].astype(jnp.int32)
    send = edge_indices[1].astype(jnp.int32)
    recv_p = jnp.pad(recv, (0, E_p - E), constant_values=-1)
    send_p = jnp.pad(send, (0, E_p - E), constant_values=-1)
    # Column layout, per-tile interleave [recv tile ; send tile] -> one fused
    # gather matmul per tile.
    idx_both_col = jnp.concatenate(
        [recv_p.reshape(nt, tile_e), send_p.reshape(nt, tile_e)], axis=1
    ).reshape(nt * 2 * tile_e, 1)
    # Row (lane) layout for the scatter's transposed one-hot.
    recv_row = recv_p.reshape(1, E_p)

    # Weights: split first edge-MLP layer into h_edge / h_in / h_out blocks,
    # zero-pad to lane multiples, cast to bf16 (biases stay f32).
    w1 = params["we1"]                       # (De + 2*Dn, H)
    def pad_w(w, r, c):
        return pad2(w, r, c).astype(jnp.bfloat16)
    def pad_b(b, c):
        return jnp.pad(b, (0, c - b.shape[0])).reshape(1, c).astype(jnp.float32)

    we1_e = pad_w(w1[:De], De_p, H_p)
    we1_in = pad_w(w1[De:De + Dn], Dn_p, H_p)
    we1_out = pad_w(w1[De + Dn:], Dn_p, H_p)
    be1 = pad_b(params["be1"], H_p)
    we2 = pad_w(params["we2"], H_p, Deo_p)
    be2 = pad_b(params["be2"], Deo_p)
    wn1 = pad_w(params["wn1"], Deo_p, H_p)
    bn1 = pad_b(params["bn1"], H_p)
    wn2 = pad_w(params["wn2"], H_p, Dn_p)
    bn2 = pad_b(params["bn2"], Dn_p)

    # Resident blocks (constant index_map): single-buffered to halve their
    # VMEM footprint; per-tile streams keep the default double buffering.
    resident = pl.Buffered(1)
    def res_spec(shape):
        return pl.BlockSpec(shape, lambda i: (0, 0), pipeline_mode=resident)

    in_specs = [
        pl.BlockSpec((2 * tile_e, 1), lambda i: (i, 0)),   # idx_both_col (stream)
        pl.BlockSpec((1, tile_e), lambda i: (0, i)),       # recv_row     (stream)
        pl.BlockSpec((tile_e, De_p), lambda i: (i, 0)),    # h_edge tile  (stream)
        res_spec((N_p, Dn_p)),                             # h_node bf16 (resident)
        res_spec((De_p, H_p)),                             # we1_e
        res_spec((Dn_p, H_p)),                             # we1_in
        res_spec((Dn_p, H_p)),                             # we1_out
        res_spec((1, H_p)),                                # be1
        res_spec((H_p, Deo_p)),                            # we2
        res_spec((1, Deo_p)),                              # be2
        res_spec((Deo_p, H_p)),                            # wn1
        res_spec((1, H_p)),                                # bn1
        res_spec((H_p, Dn_p)),                             # wn2
        res_spec((1, Dn_p)),                               # bn2
    ]
    out_specs = (
        pl.BlockSpec((tile_e, Deo_p), lambda i: (i, 0)),   # h_edge_new (stream)
        res_spec((N_p, Dn_p)),                             # node-MLP out (resident)
    )

    # --- VMEM budget: residents x1 + streams x2 buffers + body intermediates.
    nbytes = lambda shape, dt: math.prod(shape) * jnp.dtype(dt).itemsize
    resident_bytes = (
        nbytes((N_p, Dn_p), jnp.bfloat16)                   # h_node_bf
        + nbytes((N_p, Dn_p), jnp.float32)                  # node-MLP out
        + nbytes((N_p, Deo_p), jnp.float32)                 # acc scratch
        + nbytes((De_p, H_p), jnp.bfloat16)
        + 2 * nbytes((Dn_p, H_p), jnp.bfloat16)
        + nbytes((H_p, Deo_p), jnp.bfloat16)
        + nbytes((Deo_p, H_p), jnp.bfloat16)
        + nbytes((H_p, Dn_p), jnp.bfloat16)
        + 2 * nbytes((1, H_p), jnp.float32)
        + nbytes((1, Deo_p), jnp.float32)
        + nbytes((1, Dn_p), jnp.float32))
    stream_bytes = 2 * (
        nbytes((2 * tile_e, 1), jnp.int32)
        + nbytes((1, tile_e), jnp.int32)
        + nbytes((tile_e, De_p), jnp.bfloat16)
        + nbytes((tile_e, Deo_p), jnp.bfloat16))
    interm_bytes = (3 * tile_e * N_p * 2                    # one-hot matrices
                    + 4 * tile_e * max(H_p, Dn_p, Deo_p) * 4)
    total_bytes = resident_bytes + stream_bytes + interm_bytes
    assert total_bytes <= 56 * 1024 * 1024, (
        f"VMEM footprint {total_bytes / 2**20:.1f} MiB too large; shrink "
        "tile_e or implement the large-N DMA-gather path (see TODO).")
    vmem_limit = int(min(max(total_bytes * 3 // 2, 32 * 1024 * 1024),
                         64 * 1024 * 1024))

    h_edge_new_p, node_mlp_out_p = pl.pallas_call(
        cogn_kernel,
        out_shape=(jax.ShapeDtypeStruct((E_p, Deo_p), jnp.bfloat16),
                   jax.ShapeDtypeStruct((N_p, Dn_p), jnp.float32)),
        grid_spec=pltpu.PrefetchScalarGridSpec(
            num_scalar_prefetch=0,
            grid=(nt,),
            in_specs=in_specs,
            out_specs=out_specs,
            scratch_shapes=[pltpu.VMEM((N_p, Deo_p), jnp.float32)],
        ),
        compiler_params=pltpu.CompilerParams(
            # Edge axis is a reduction axis (shared scatter accumulator);
            # it must stay "arbitrary" (see TODO for the v7x dual-TC split).
            dimension_semantics=("arbitrary",),
            vmem_limit_bytes=vmem_limit,
        ),
    )(idx_both_col, recv_row, h_edge_p, h_node_bf,
      we1_e, we1_in, we1_out, be1, we2, be2, wn1, bn1, wn2, bn2)

    h_edge_new = h_edge_new_p[:E, :De_out].astype(jnp.float32)
    # Residual add in f32 in the wrapper (no resident f32 node copy in-kernel).
    h_node_new = h_node.astype(jnp.float32) + node_mlp_out_p[:N, :Dn]
    return (h_edge_new, h_node_new, None, None)


# ------------------------- deterministic param init -------------------------

def init_params(key, De, Dn, H):
    """edge_mlp: MLP(De+2Dn -> H -> De, silu); node_mlp: MLP(De -> H -> Dn, silu)."""
    ks = jax.random.split(key, 4)

    def lin(k, fan_in, fan_out):
        bound = 1.0 / jnp.sqrt(jnp.float32(fan_in))
        kw, kb = jax.random.split(k)
        w = jax.random.uniform(kw, (fan_in, fan_out), jnp.float32, -bound, bound)
        b = jax.random.uniform(kb, (fan_out,), jnp.float32, -bound, bound)
        return w, b

    we1, be1 = lin(ks[0], De + 2 * Dn, H)      # edge MLP layer 1
    we2, be2 = lin(ks[1], H, De)               # edge MLP layer 2
    wn1, bn1 = lin(ks[2], De, H)               # node MLP layer 1
    wn2, bn2 = lin(ks[3], H, Dn)               # node MLP layer 2
    return {"we1": we1, "be1": be1, "we2": we2, "be2": be2,
            "wn1": wn1, "bn1": bn1, "wn2": wn2, "bn2": bn2}


# ----------------------------- pure-JAX reference ----------------------------

def cogn_reference(h_edge, h_node, edge_indices, params):
    idx = edge_indices
    h_in = h_node[idx[0]]
    h_out = h_node[idx[1]]
    concat = jnp.concatenate([h_edge, h_in, h_out], axis=-1)
    z = _silu(concat @ params["we1"] + params["be1"])
    h_edge_new = _silu(z @ params["we2"] + params["be2"])
    N = h_node.shape[0]
    agg = jnp.zeros((N, h_edge_new.shape[1]), jnp.float32).at[idx[0]].add(h_edge_new)
    z = _silu(agg @ params["wn1"] + params["bn1"])
    z = _silu(z @ params["wn2"] + params["bn2"])
    return h_edge_new, h_node + z


# --------------------------------- main --------------------------------------

if __name__ == "__main__":
    key = jax.random.PRNGKey(0)
    k_e, k_n, k_i, k_p = jax.random.split(key, 4)

    N_NODE, N_EDGE = 24, 300          # 2 edge tiles at default TE=256 (E padded to 512)
    De, Dn, H = 32, 32, 64

    h_edge = jax.random.normal(k_e, (N_EDGE, De), jnp.float32)
    h_node = jax.random.normal(k_n, (N_NODE, Dn), jnp.float32)
    edge_indices = jax.random.randint(k_i, (2, N_EDGE), 0, N_NODE, jnp.int32)
    batch = jnp.zeros((N_NODE,), jnp.int32)
    h_global = None  # unused by coGNLayer.forward

    params = init_params(k_p, De, Dn, H)

    h_edge_new, h_node_new, g, extra = cogn_layer_forward(
        h_edge, h_node, h_global, edge_indices, batch, params)
    jax.block_until_ready((h_edge_new, h_node_new))

    ref_edge, ref_node = cogn_reference(h_edge, h_node, edge_indices, params)
    assert h_edge_new.shape == ref_edge.shape
    assert h_node_new.shape == ref_node.shape
    # bf16 MXU path + bf16 h_edge_new writeback -> looser tolerance vs f32 ref.
    assert jnp.allclose(h_edge_new, ref_edge, atol=1e-1, rtol=1e-1), (
        float(jnp.max(jnp.abs(h_edge_new - ref_edge))))
    assert jnp.allclose(h_node_new, ref_node, atol=1e-1, rtol=1e-1), (
        float(jnp.max(jnp.abs(h_node_new - ref_node))))
    assert g is None and extra is None

    print("KERNEL_OK")
</pallas_src>

<mosaic_0001>
module attributes {stable_mosaic.version = 11 : i64} {
  func.func @cogn_kernel(%arg0: i32, %arg1: memref<512x1xi32, #tpu.memory_space<vmem>>, %arg2: memref<1x256xi32, #tpu.memory_space<vmem>>, %arg3: memref<256x128xbf16, #tpu.memory_space<vmem>>, %arg4: memref<128x128xbf16, #tpu.memory_space<vmem>>, %arg5: memref<128x128xbf16, #tpu.memory_space<vmem>>, %arg6: memref<128x128xbf16, #tpu.memory_space<vmem>>, %arg7: memref<128x128xbf16, #tpu.memory_space<vmem>>, %arg8: memref<1x128xf32, #tpu.memory_space<vmem>>, %arg9: memref<128x128xbf16, #tpu.memory_space<vmem>>, %arg10: memref<1x128xf32, #tpu.memory_space<vmem>>, %arg11: memref<128x128xbf16, #tpu.memory_space<vmem>>, %arg12: memref<1x128xf32, #tpu.memory_space<vmem>>, %arg13: memref<128x128xbf16, #tpu.memory_space<vmem>>, %arg14: memref<1x128xf32, #tpu.memory_space<vmem>>, %arg15: memref<256x128xbf16, #tpu.memory_space<vmem>>, %arg16: memref<128x128xf32, #tpu.memory_space<vmem>>, %arg17: memref<128x128xf32, #tpu.memory_space<vmem>>) attributes {dimension_semantics = [#tpu.dimension_semantics<arbitrary>], iteration_bounds = array<i64: 2>, scalar_prefetch = 0 : i64, scratch_operands = 1 : i64, tpu.core_type = #tpu.core_type<tc>, window_params = [{transform_indices = @transform_0, window_bounds = array<i64: 512, 1>}, {transform_indices = @transform_1, window_bounds = array<i64: 1, 256>}, {transform_indices = @transform_2, window_bounds = array<i64: 256, 128>}, {pipeline_mode = #tpu.pipeline_mode<synchronous>, transform_indices = @transform_3, window_bounds = array<i64: 128, 128>}, {pipeline_mode = #tpu.pipeline_mode<synchronous>, transform_indices = @transform_4, window_bounds = array<i64: 128, 128>}, {pipeline_mode = #tpu.pipeline_mode<synchronous>, transform_indices = @transform_5, window_bounds = array<i64: 128, 128>}, {pipeline_mode = #tpu.pipeline_mode<synchronous>, transform_indices = @transform_6, window_bounds = array<i64: 128, 128>}, {pipeline_mode = #tpu.pipeline_mode<synchronous>, transform_indices = @transform_7, window_bounds = array<i64: 1, 128>}, {pipeline_mode = #tpu.pipeline_mode<synchronous>, transform_indices = @transform_8, window_bounds = array<i64: 128, 128>}, {pipeline_mode = #tpu.pipeline_mode<synchronous>, transform_indices = @transform_9, window_bounds = array<i64: 1, 128>}, {pipeline_mode = #tpu.pipeline_mode<synchronous>, transform_indices = @transform_10, window_bounds = array<i64: 128, 128>}, {pipeline_mode = #tpu.pipeline_mode<synchronous>, transform_indices = @transform_11, window_bounds = array<i64: 1, 128>}, {pipeline_mode = #tpu.pipeline_mode<synchronous>, transform_indices = @transform_12, window_bounds = array<i64: 128, 128>}, {pipeline_mode = #tpu.pipeline_mode<synchronous>, transform_indices = @transform_13, window_bounds = array<i64: 1, 128>}, {transform_indices = @transform_14, window_bounds = array<i64: 256, 128>}, {pipeline_mode = #tpu.pipeline_mode<synchronous>, transform_indices = @transform_15, window_bounds = array<i64: 128, 128>}]} {
    %c0_i32 = arith.constant 0 : i32
    %0 = arith.cmpi eq, %arg0, %c0_i32 : i32
    %1 = arith.extui %0 : i1 to i32
    %c0_i32_0 = arith.constant 0 : i32
    %2 = arith.cmpi ne, %1, %c0_i32_0 : i32
    scf.if %2 {
      %cst_34 = arith.constant 0.000000e+00 : f32
      %62 = vector.broadcast %cst_34 : f32 to vector<128x128xf32>
      %c0_35 = arith.constant 0 : index
      %c0_36 = arith.constant 0 : index
      %63 = vector.load %arg17[%c0_35, %c0_36] : memref<128x128xf32, #tpu.memory_space<vmem>>, vector<128x128xf32>
      tpu.vector_store %arg17[%c0_35, %c0_36], %62 {strides = array<i32>} : memref<128x128xf32, #tpu.memory_space<vmem>>, vector<128x128xf32>,
    } else {
    }
    %c0 = arith.constant 0 : index
    %c0_1 = arith.constant 0 : index
    %3 = vector.load %arg1[%c0, %c0_1] : memref<512x1xi32, #tpu.memory_space<vmem>>, vector<512x1xi32>
    %4 = tpu.iota {dimensions = array<i32: 1>} : vector<512x128xi32>
    %5 = vector.broadcast %3 : vector<512x1xi32> to vector<512x128xi32>
    %6 = arith.cmpi eq, %4, %5 : vector<512x128xi32>
    %7 = arith.extui %6 : vector<512x128xi1> to vector<512x128xi32>
    %8 = arith.sitofp %7 : vector<512x128xi32> to vector<512x128xf32>
    %9 = arith.truncf %8 : vector<512x128xf32> to vector<512x128xbf16>
    %c0_2 = arith.constant 0 : index
    %c0_3 = arith.constant 0 : index
    %10 = vector.load %arg4[%c0_2, %c0_3] : memref<128x128xbf16, #tpu.memory_space<vmem>>, vector<128x128xbf16>
    %cst = arith.constant dense<0.000000e+00> : vector<512x128xf32>
    %11 = tpu.matmul %9, %10, %cst {dimension_numbers = #tpu.dot_dimension_numbers<[1], [0], [0], [1], [0, 0, 1, 1], [], []>} : vector<512x128xbf16>, vector<128x128xbf16>, vector<512x128xf32> -> vector<512x128xf32>
    %12 = vector.extract_strided_slice %11 {offsets = [0, 0], sizes = [256, 128], strides = [1, 1]} : vector<512x128xf32> to vector<256x128xf32>
    %13 = arith.truncf %12 : vector<256x128xf32> to vector<256x128xbf16>
    %14 = vector.extract_strided_slice %11 {offsets = [256, 0], sizes = [256, 128], strides = [1, 1]} : vector<512x128xf32> to vector<256x128xf32>
    %15 = arith.truncf %14 : vector<256x128xf32> to vector<256x128xbf16>
    %c0_4 = arith.constant 0 : index
    %c0_5 = arith.constant 0 : index
    %16 = vector.load %arg3[%c0_4, %c0_5] : memref<256x128xbf16, #tpu.memory_space<vmem>>, vector<256x128xbf16>
    %c0_6 = arith.constant 0 : index
    %c0_7 = arith.constant 0 : index
    %17 = vector.load %arg5[%c0_6, %c0_7] : memref<128x128xbf16, #tpu.memory_space<vmem>>, vector<128x128xbf16>
    %cst_8 = arith.constant dense<0.000000e+00> : vector<256x128xf32>
    %18 = tpu.matmul %16, %17, %cst_8 {dimension_numbers = #tpu.dot_dimension_numbers<[1], [0], [0], [1], [0, 0, 1, 1], [], []>} : vector<256x128xbf16>, vector<128x128xbf16>, vector<256x128xf32> -> vector<256x128xf32>
    %c0_9 = arith.constant 0 : index
    %c0_10 = arith.constant 0 : index
    %19 = vector.load %arg6[%c0_9, %c0_10] : memref<128x128xbf16, #tpu.memory_space<vmem>>, vector<128x128xbf16>
    %cst_11 = arith.constant dense<0.000000e+00> : vector<256x128xf32>
    %20 = tpu.matmul %13, %19, %cst_11 {dimension_numbers = #tpu.dot_dimension_numbers<[1], [0], [0], [1], [0, 0, 1, 1], [], []>} : vector<256x128xbf16>, vector<128x128xbf16>, vector<256x128xf32> -> vector<256x128xf32>
    %21 = arith.addf %18, %20 : vector<256x128xf32>
    %c0_12 = arith.constant 0 : index
    %c0_13 = arith.constant 0 : index
    %22 = vector.load %arg7[%c0_12, %c0_13] : memref<128x128xbf16, #tpu.memory_space<vmem>>, vector<128x128xbf16>
    %cst_14 = arith.constant dense<0.000000e+00> : vector<256x128xf32>
    %23 = tpu.matmul %15, %22, %cst_14 {dimension_numbers = #tpu.dot_dimension_numbers<[1], [0], [0], [1], [0, 0, 1, 1], [], []>} : vector<256x128xbf16>, vector<128x128xbf16>, vector<256x128xf32> -> vector<256x128xf32>
    %24 = arith.addf %21, %23 : vector<256x128xf32>
    %c0_15 = arith.constant 0 : index
    %c0_16 = arith.constant 0 : index
    %25 = vector.load %arg8[%c0_15, %c0_16] : memref<1x128xf32, #tpu.memory_space<vmem>>, vector<1x128xf32>
    %26 = vector.broadcast %25 : vector<1x128xf32> to vector<256x128xf32>
    %27 = arith.addf %24, %26 : vector<256x128xf32>
    %28 = arith.negf %27 : vector<256x128xf32>
    %29 = math.exp %28 : vector<256x128xf32>
    %cst_17 = arith.constant 1.000000e+00 : f32
    %30 = vector.broadcast %cst_17 : f32 to vector<256x128xf32>
    %31 = arith.addf %30, %29 : vector<256x128xf32>
    %32 = arith.divf %30, %31 : vector<256x128xf32>
    %33 = arith.mulf %27, %32 : vector<256x128xf32>
    %34 = arith.truncf %33 : vector<256x128xf32> to vector<256x128xbf16>
    %c0_18 = arith.constant 0 : index
    %c0_19 = arith.constant 0 : index
    %35 = vector.load %arg9[%c0_18, %c0_19] : memref<128x128xbf16, #tpu.memory_space<vmem>>, vector<128x128xbf16>
    %cst_20 = arith.constant dense<0.000000e+00> : vector<256x128xf32>
    %36 = tpu.matmul %34, %35, %cst_20 {dimension_numbers = #tpu.dot_dimension_numbers<[1], [0], [0], [1], [0, 0, 1, 1], [], []>} : vector<256x128xbf16>, vector<128x128xbf16>, vector<256x128xf32> -> vector<256x128xf32>
    %c0_21 = arith.constant 0 : index
    %c0_22 = arith.constant 0 : index
    %37 = vector.load %arg10[%c0_21, %c0_22] : memref<1x128xf32, #tpu.memory_space<vmem>>, vector<1x128xf32>
    %38 = vector.broadcast %37 : vector<1x128xf32> to vector<256x128xf32>
    %39 = arith.addf %36, %38 : vector<256x128xf32>
    %40 = arith.negf %39 : vector<256x128xf32>
    %41 = math.exp %40 : vector<256x128xf32>
    %cst_23 = arith.constant 1.000000e+00 : f32
    %42 = vector.broadcast %cst_23 : f32 to vector<256x128xf32>
    %43 = arith.addf %42, %41 : vector<256x128xf32>
    %44 = arith.divf %42, %43 : vector<256x128xf32>
    %45 = arith.mulf %39, %44 : vector<256x128xf32>
    %46 = arith.truncf %45 : vector<256x128xf32> to vector<256x128xbf16>
    %c0_24 = arith.constant 0 : index
    %c0_25 = arith.constant 0 : index
    %47 = vector.load %arg15[%c0_24, %c0_25] : memref<256x128xbf16, #tpu.memory_space<vmem>>, vector<256x128xbf16>
    tpu.vector_store %arg15[%c0_24, %c0_25], %46 {strides = array<i32>} : memref<256x128xbf16, #tpu.memory_space<vmem>>, vector<256x128xbf16>,
    %c0_26 = arith.constant 0 : index
    %c0_27 = arith.constant 0 : index
    %48 = vector.load %arg2[%c0_26, %c0_27] : memref<1x256xi32, #tpu.memory_space<vmem>>, vector<1x256xi32>
    %49 = tpu.iota {dimensions = array<i32: 0>} : vector<128x256xi32>
    %50 = vector.broadcast %48 : vector<1x256xi32> to vector<128x256xi32>
    %51 = arith.cmpi eq, %49, %50 : vector<128x256xi32>
    %52 = arith.extui %51 : vector<128x256xi1> to vector<128x256xi32>
    %53 = arith.sitofp %52 : vector<128x256xi32> to vector<128x256xf32>
    %54 = arith.truncf %53 : vector<128x256xf32> to vector<128x256xbf16>
    %c0_28 = arith.constant 0 : index
    %c0_29 = arith.constant 0 : index
    %55 = vector.load %arg17[%c0_28, %c0_29] : memref<128x128xf32, #tpu.memory_space<vmem>>, vector<128x128xf32>
    %cst_30 = arith.constant dense<0.000000e+00> : vector<128x128xf32>
    %56 = tpu.matmul %54, %46, %cst_30 {dimension_numbers = #tpu.dot_dimension_numbers<[1], [0], [0], [1], [0, 0, 1, 1], [], []>} : vector<128x256xbf16>, vector<256x128xbf16>, vector<128x128xf32> -> vector<128x128xf32>
    %57 = arith.addf %55, %56 : vector<128x128xf32>
    %c0_31 = arith.constant 0 : index
    %c0_32 = arith.constant 0 : index
    %58 = vector.load %arg17[%c0_31, %c0_32] : memref<128x128xf32, #tpu.memory_space<vmem>>, vector<128x128xf32>
    tpu.vector_store %arg17[%c0_31, %c0_32], %57 {strides = array<i32>} : memref<128x128xf32, #tpu.memory_space<vmem>>, vector<128x128xf32>,
    %c1_i32 = arith.constant 1 : i32
    %59 = arith.cmpi eq, %arg0, %c1_i32 : i32
    %60 = arith.extui %59 : i1 to i32
    %c0_i32_33 = arith.constant 0 : i32
    %61 = arith.cmpi ne, %60, %c0_i32_33 : i32
    scf.if %61 {
      %c0_34 = arith.constant 0 : index
      %c0_35 = arith.constant 0 : index
      %62 = vector.load %arg17[%c0_34, %c0_35] : memref<128x128xf32, #tpu.memory_space<vmem>>, vector<128x128xf32>
      %63 = arith.truncf %62 : vector<128x128xf32> to vector<128x128xbf16>
      %c0_36 = arith.constant 0 : index
      %c0_37 = arith.constant 0 : index
      %64 = vector.load %arg11[%c0_36, %c0_37] : memref<128x128xbf16, #tpu.memory_space<vmem>>, vector<128x128xbf16>
      %cst_38 = arith.constant dense<0.000000e+00> : vector<128x128xf32>
      %65 = tpu.matmul %63, %64, %cst_38 {dimension_numbers = #tpu.dot_dimension_numbers<[1], [0], [0], [1], [0, 0, 1, 1], [], []>} : vector<128x128xbf16>, vector<128x128xbf16>, vector<128x128xf32> -> vector<128x128xf32>
      %c0_39 = arith.constant 0 : index
      %c0_40 = arith.constant 0 : index
      %66 = vector.load %arg12[%c0_39, %c0_40] : memref<1x128xf32, #tpu.memory_space<vmem>>, vector<1x128xf32>
      %67 = vector.broadcast %66 : vector<1x128xf32> to vector<128x128xf32>
      %68 = arith.addf %65, %67 : vector<128x128xf32>
      %69 = arith.negf %68 : vector<128x128xf32>
      %70 = math.exp %69 : vector<128x128xf32>
      %cst_41 = arith.constant 1.000000e+00 : f32
      %71 = vector.broadcast %cst_41 : f32 to vector<128x128xf32>
      %72 = arith.addf %71, %70 : vector<128x128xf32>
      %73 = arith.divf %71, %72 : vector<128x128xf32>
      %74 = arith.mulf %68, %73 : vector<128x128xf32>
      %75 = arith.truncf %74 : vector<128x128xf32> to vector<128x128xbf16>
      %c0_42 = arith.constant 0 : index
      %c0_43 = arith.constant 0 : index
      %76 = vector.load %arg13[%c0_42, %c0_43] : memref<128x128xbf16, #tpu.memory_space<vmem>>, vector<128x128xbf16>
      %cst_44 = arith.constant dense<0.000000e+00> : vector<128x128xf32>
      %77 = tpu.matmul %75, %76, %cst_44 {dimension_numbers = #tpu.dot_dimension_numbers<[1], [0], [0], [1], [0, 0, 1, 1], [], []>} : vector<128x128xbf16>, vector<128x128xbf16>, vector<128x128xf32> -> vector<128x128xf32>
      %c0_45 = arith.constant 0 : index
      %c0_46 = arith.constant 0 : index
      %78 = vector.load %arg14[%c0_45, %c0_46] : memref<1x128xf32, #tpu.memory_space<vmem>>, vector<1x128xf32>
      %79 = vector.broadcast %78 : vector<1x128xf32> to vector<128x128xf32>
      %80 = arith.addf %77, %79 : vector<128x128xf32>
      %81 = arith.negf %80 : vector<128x128xf32>
      %82 = math.exp %81 : vector<128x128xf32>
      %cst_47 = arith.constant 1.000000e+00 : f32
      %83 = vector.broadcast %cst_47 : f32 to vector<128x128xf32>
      %84 = arith.addf %83, %82 : vector<128x128xf32>
      %85 = arith.divf %83, %84 : vector<128x128xf32>
      %86 = arith.mulf %80, %85 : vector<128x128xf32>
      %c0_48 = arith.constant 0 : index
      %c0_49 = arith.constant 0 : index
      %87 = vector.load %arg16[%c0_48, %c0_49] : memref<128x128xf32, #tpu.memory_space<vmem>>, vector<128x128xf32>
      tpu.vector_store %arg16[%c0_48, %c0_49], %86 {strides = array<i32>} : memref<128x128xf32, #tpu.memory_space<vmem>>, vector<128x128xf32>,
    } else {
    }
    return
  }
  func.func @transform_0(%arg0: i32) -> (i32, i32) {
    %c0_i32 = arith.constant 0 : i32
    %c0_i32_0 = arith.constant 0 : i32
    return %arg0, %c0_i32 : i32, i32
  }
  func.func @transform_1(%arg0: i32) -> (i32, i32) {
    %c0_i32 = arith.constant 0 : i32
    %c0_i32_0 = arith.constant 0 : i32
    return %c0_i32, %arg0 : i32, i32
  }
  func.func @transform_2(%arg0: i32) -> (i32, i32) {
    %c0_i32 = arith.constant 0 : i32
    %c0_i32_0 = arith.constant 0 : i32
    return %arg0, %c0_i32 : i32, i32
  }
  func.func @transform_3(%arg0: i32) -> (i32, i32) {
    %c0_i32 = arith.constant 0 : i32
    %c0_i32_0 = arith.constant 0 : i32
    %c0_i32_1 = arith.constant 0 : i32
    return %c0_i32, %c0_i32_0 : i32, i32
  }
  func.func @transform_4(%arg0: i32) -> (i32, i32) {
    %c0_i32 = arith.constant 0 : i32
    %c0_i32_0 = arith.constant 0 : i32
    %c0_i32_1 = arith.constant 0 : i32
    return %c0_i32, %c0_i32_0 : i32, i32
  }
  func.func @transform_5(%arg0: i32) -> (i32, i32) {
    %c0_i32 = arith.constant 0 : i32
    %c0_i32_0 = arith.constant 0 : i32
    %c0_i32_1 = arith.constant 0 : i32
    return %c0_i32, %c0_i32_0 : i32, i32
  }
  func.func @transform_6(%arg0: i32) -> (i32, i32) {
    %c0_i32 = arith.constant 0 : i32
    %c0_i32_0 = arith.constant 0 : i32
    %c0_i32_1 = arith.constant 0 : i32
    return %c0_i32, %c0_i32_0 : i32, i32
  }
  func.func @transform_7(%arg0: i32) -> (i32, i32) {
    %c0_i32 = arith.constant 0 : i32
    %c0_i32_0 = arith.constant 0 : i32
    %c0_i32_1 = arith.constant 0 : i32
    return %c0_i32, %c0_i32_0 : i32, i32
  }
  func.func @transform_8(%arg0: i32) -> (i32, i32) {
    %c0_i32 = arith.constant 0 : i32
    %c0_i32_0 = arith.constant 0 : i32
    %c0_i32_1 = arith.constant 0 : i32
    return %c0_i32, %c0_i32_0 : i32, i32
  }
  func.func @transform_9(%arg0: i32) -> (i32, i32) {
    %c0_i32 = arith.constant 0 : i32
    %c0_i32_0 = arith.constant 0 : i32
    %c0_i32_1 = arith.constant 0 : i32
    return %c0_i32, %c0_i32_0 : i32, i32
  }
  func.func @transform_10(%arg0: i32) -> (i32, i32) {
    %c0_i32 = arith.constant 0 : i32
    %c0_i32_0 = arith.constant 0 : i32
    %c0_i32_1 = arith.constant 0 : i32
    return %c0_i32, %c0_i32_0 : i32, i32
  }
  func.func @transform_11(%arg0: i32) -> (i32, i32) {
    %c0_i32 = arith.constant 0 : i32
    %c0_i32_0 = arith.constant 0 : i32
    %c0_i32_1 = arith.constant 0 : i32
    return %c0_i32, %c0_i32_0 : i32, i32
  }
  func.func @transform_12(%arg0: i32) -> (i32, i32) {
    %c0_i32 = arith.constant 0 : i32
    %c0_i32_0 = arith.constant 0 : i32
    %c0_i32_1 = arith.constant 0 : i32
    return %c0_i32, %c0_i32_0 : i32, i32
  }
  func.func @transform_13(%arg0: i32) -> (i32, i32) {
    %c0_i32 = arith.constant 0 : i32
    %c0_i32_0 = arith.constant 0 : i32
    %c0_i32_1 = arith.constant 0 : i32
    return %c0_i32, %c0_i32_0 : i32, i32
  }
  func.func @transform_14(%arg0: i32) -> (i32, i32) {
    %c0_i32 = arith.constant 0 : i32
    %c0_i32_0 = arith.constant 0 : i32
    return %arg0, %c0_i32 : i32, i32
  }
  func.func @transform_15(%arg0: i32) -> (i32, i32) {
    %c0_i32 = arith.constant 0 : i32
    %c0_i32_0 = arith.constant 0 : i32
    %c0_i32_1 = arith.constant 0 : i32
    return %c0_i32, %c0_i32_0 : i32, i32
  }
}

</mosaic_0001>

<llo_original>
// kernel: cogn_layer_forward.1
$region0: #{cogn_layer_forward.1}
  #allocation0 [shape = 'u32[]', space=smem, size = 0x4, offset = 0x4, fixed_abs, tag = 'smem constant byte address 0x4 - core index']
  #allocation1 [shape = 'u32[144,128]{1,0:T(1,128)}', space=vmem, size = 0x12000, scoped, tag = 'internal scratch']
  #allocation2 [shape = 'f32[128,128]{1,0:T(8,128)}', space=vmem, size = 0x10000, scoped, tag = 'scratch operand']
  %s0 = inlined_call_operand.vmem [shape: s32[1024,1], index: 0, kind: input, shape index: {}]
  %s1 = inlined_call_operand.vmem [shape: s32[1,512], index: 1, kind: input, shape index: {}]
  %s2 = inlined_call_operand.vmem [shape: bf16[512,128], index: 2, kind: input, shape index: {}]
  %s3 = inlined_call_operand.vmem [shape: bf16[128,128], index: 3, kind: input, shape index: {}]
  %s4 = inlined_call_operand.vmem [shape: bf16[128,128], index: 4, kind: input, shape index: {}]
  %s5 = inlined_call_operand.vmem [shape: bf16[128,128], index: 5, kind: input, shape index: {}]
  %s6 = inlined_call_operand.vmem [shape: bf16[128,128], index: 6, kind: input, shape index: {}]
  %s7 = inlined_call_operand.vmem [shape: f32[1,128], index: 7, kind: input, shape index: {}]
  %s8 = inlined_call_operand.vmem [shape: bf16[128,128], index: 8, kind: input, shape index: {}]
  %s9 = inlined_call_operand.vmem [shape: f32[1,128], index: 9, kind: input, shape index: {}]
  %s10 = inlined_call_operand.vmem [shape: bf16[128,128], index: 10, kind: input, shape index: {}]
  %s11 = inlined_call_operand.vmem [shape: f32[1,128], index: 11, kind: input, shape index: {}]
  %s12 = inlined_call_operand.vmem [shape: bf16[128,128], index: 12, kind: input, shape index: {}]
  %s13 = inlined_call_operand.vmem [shape: f32[1,128], index: 13, kind: input, shape index: {}]
  %s14 = inlined_call_operand.vmem [shape: bf16[512,128], index: 14, kind: output, shape index: {0}]
  %s15 = inlined_call_operand.vmem [shape: f32[128,128], index: 15, kind: output, shape index: {1}]
  %16 = xla_tuple %s14, %s15
  %s17 = sld [smem:[#allocation0]]
  $region105: #{cogn_layer_forward.1} parent=0
    _
  %s19 = ssub.s32 1, %s17
  %s20 = scalar_select 0, %s19, %s17
  loop: start=0, step=1, limit=4
  $region2: #{cogn_layer_forward.1} parent=0 // loop_pre_header
    _
  $region3: #{cogn_layer_forward.1} parent=0 // loop_header
    %s22 = sphi 0, %s26
    %p23 = scmp.ge.s32.totalorder %s22, 4
    %s32 = sphi 0, %s34
    %s35 = sphi 0, %s32
    %s36 = sphi 0, %s35
    %s52 = sphi 0, %s36
    %s58 = sphi 0, %s60
    %s61 = sphi 0, %s58
    %s62 = sphi 0, %s61
    %s78 = sphi 0, %s62
    %s84 = sphi 0, %s86
    %s87 = sphi 0, %s84
    %s88 = sphi 0, %s87
    %s104 = sphi 0, %s88
    %s108 = sphi 0, %s108
    %s110 = sphi 0, %s108
    %s111 = sphi 0, %s110
    %s125 = sphi 0, %s111
    %s129 = sphi 0, %s129
    %s131 = sphi 0, %s129
    %s132 = sphi 0, %s131
    %s146 = sphi 0, %s132
    %s150 = sphi 0, %s150
    %s152 = sphi 0, %s150
    %s153 = sphi 0, %s152
    %s167 = sphi 0, %s153
    %s171 = sphi 0, %s171
    %s173 = sphi 0, %s171
    %s174 = sphi 0, %s173
    %s188 = sphi 0, %s174
    %s192 = sphi 0, %s192
    %s194 = sphi 0, %s192
    %s195 = sphi 0, %s194
    %s209 = sphi 0, %s195
    %s213 = sphi 0, %s213
    %s215 = sphi 0, %s213
    %s216 = sphi 0, %s215
    %s230 = sphi 0, %s216
    %s234 = sphi 0, %s234
    %s236 = sphi 0, %s234
    %s237 = sphi 0, %s236
    %s251 = sphi 0, %s237
    %s255 = sphi 0, %s255
    %s257 = sphi 0, %s255
    %s258 = sphi 0, %s257
    %s272 = sphi 0, %s258
    %s276 = sphi 0, %s276
    %s278 = sphi 0, %s276
    %s279 = sphi 0, %s278
    %s293 = sphi 0, %s279
    %s297 = sphi 0, %s297
    %s299 = sphi 0, %s297
    %s300 = sphi 0, %s299
    %s314 = sphi 0, %s300
    %s318 = sphi 0, %s318
    %s320 = sphi 0, %s318
    %s321 = sphi 0, %s320
    %s335 = sphi 0, %s321
    %s341 = sphi 0, %s343
    %s344 = sphi 0, %s341
    %s345 = sphi 0, %s344
    %s361 = sphi 0, %s345
    %s365 = sphi 0, %s365
    %s367 = sphi 0, %s365
    %s368 = sphi 0, %s367
    %s382 = sphi 0, %s368
  $region4: #{cogn_layer_forward.1} parent=0 // loop_header_branch
    %25 = sbr.rel (%p23) target = $region8
  $region5: #{cogn_layer_forward.1} parent=0 // loop_body
    %s27 = ssub.s32 %s22, 1
    %s28 = ssub.s32 %s22, 2
    %s29 = sadd.s32 %s22, 1
    %s30 = ssub.s32 %s22, %s29
    %p31 = scmp.eq.s32.totalorder %s30, 0
    %s33 = sadd.s32 %s32, 1
    %s34 = scalar_select %p31, %s32, %s33
    %p37 = pneg %p31
    %p38 = scmp.eq.s32.totalorder %s22, 1
    %p39 = por %p37, %p38
    %p40 = scmp.ne.s32.totalorder %s32, %s35
    %p41 = scmp.eq.s32.totalorder %s22, 0
    %p42 = por %p40, %p41
    %p43 = scmp.ne.s32.totalorder %s32, %s35
    %p44 = scmp.eq.s32.totalorder %s27, 1
    %p45 = por %p43, %p44
    %p46 = scmp.ne.s32.totalorder %s35, %s36
    %p47 = scmp.eq.s32.totalorder %s27, 0
    %p48 = por %p46, %p47
    %p49 = scmp.ne.s32.totalorder %s35, %s36
    %p50 = scmp.eq.s32.totalorder %s28, 1
    %p51 = por %p49, %p50
    %p53 = scmp.ne.s32.totalorder %s36, %s52
    %p54 = scmp.eq.s32.totalorder %s28, 0
    %p55 = por %p53, %p54
    %s56 = ssub.s32 %s22, %s29
    %p57 = scmp.eq.s32.totalorder %s56, 0
    %s59 = sadd.s32 %s58, 1
    %s60 = scalar_select %p57, %s58, %s59
    %p63 = pneg %p57
    %p64 = scmp.eq.s32.totalorder %s22, 1
    %p65 = por %p63, %p64
    %p66 = scmp.ne.s32.totalorder %s58, %s61
    %p67 = scmp.eq.s32.totalorder %s22, 0
    %p68 = por %p66, %p67
    %p69 = scmp.ne.s32.totalorder %s58, %s61
    %p70 = scmp.eq.s32.totalorder %s27, 1
    %p71 = por %p69, %p70
    %p72 = scmp.ne.s32.totalorder %s61, %s62
    %p73 = scmp.eq.s32.totalorder %s27, 0
    %p74 = por %p72, %p73
    %p75 = scmp.ne.s32.totalorder %s61, %s62
    %p76 = scmp.eq.s32.totalorder %s28, 1
    %p77 = por %p75, %p76
    %p79 = scmp.ne.s32.totalorder %s62, %s78
    %p80 = scmp.eq.s32.totalorder %s28, 0
    %p81 = por %p79, %p80
    %s82 = ssub.s32 %s22, %s29
    %p83 = scmp.eq.s32.totalorder %s82, 0
    %s85 = sadd.s32 %s84, 1
    %s86 = scalar_select %p83, %s84, %s85
    %p89 = pneg %p83
    %p90 = scmp.eq.s32.totalorder %s22, 1
    %p91 = por %p89, %p90
    %p92 = scmp.ne.s32.totalorder %s84, %s87
    %p93 = scmp.eq.s32.totalorder %s22, 0
    %p94 = por %p92, %p93
    %p95 = scmp.ne.s32.totalorder %s84, %s87
    %p96 = scmp.eq.s32.totalorder %s27, 1
    %p97 = por %p95, %p96
    %p98 = scmp.ne.s32.totalorder %s87, %s88
    %p99 = scmp.eq.s32.totalorder %s27, 0
    %p100 = por %p98, %p99
    %p101 = scmp.ne.s32.totalorder %s87, %s88
    %p102 = scmp.eq.s32.totalorder %s28, 1
    %p103 = por %p101, %p102
    %p105 = scmp.ne.s32.totalorder %s88, %s104
    %p106 = scmp.eq.s32.totalorder %s28, 0
    %p107 = por %p105, %p106
    %s109 = sadd.s32 %s108, 1
    %p112 = scmp.eq.s32.totalorder %s22, 1
    %p113 = scmp.ne.s32.totalorder %s108, %s110
    %p114 = scmp.eq.s32.totalorder %s22, 0
    %p115 = por %p113, %p114
    %p116 = scmp.ne.s32.totalorder %s108, %s110
    %p117 = scmp.eq.s32.totalorder %s27, 1
    %p118 = por %p116, %p117
    %p119 = scmp.ne.s32.totalorder %s110, %s111
    %p120 = scmp.eq.s32.totalorder %s27, 0
    %p121 = por %p119, %p120
    %p122 = scmp.ne.s32.totalorder %s110, %s111
    %p123 = scmp.eq.s32.totalorder %s28, 1
    %p124 = por %p122, %p123
    %p126 = scmp.ne.s32.totalorder %s111, %s125
    %p127 = scmp.eq.s32.totalorder %s28, 0
    %p128 = por %p126, %p127
    %s130 = sadd.s32 %s129, 1
    %p133 = scmp.eq.s32.totalorder %s22, 1
    %p134 = scmp.ne.s32.totalorder %s129, %s131
    %p135 = scmp.eq.s32.totalorder %s22, 0
    %p136 = por %p134, %p135
    %p137 = scmp.ne.s32.totalorder %s129, %s131
    %p138 = scmp.eq.s32.totalorder %s27, 1
    %p139 = por %p137, %p138
    %p140 = scmp.ne.s32.totalorder %s131, %s132
    %p141 = scmp.eq.s32.totalorder %s27, 0
    %p142 = por %p140, %p141
    %p143 = scmp.ne.s32.totalorder %s131, %s132
    %p144 = scmp.eq.s32.totalorder %s28, 1
    %p145 = por %p143, %p144
    %p147 = scmp.ne.s32.totalorder %s132, %s146
    %p148 = scmp.eq.s32.totalorder %s28, 0
    %p149 = por %p147, %p148
    %s151 = sadd.s32 %s150, 1
    %p154 = scmp.eq.s32.totalorder %s22, 1
    %p155 = scmp.ne.s32.totalorder %s150, %s152
    %p156 = scmp.eq.s32.totalorder %s22, 0
    %p157 = por %p155, %p156
    %p158 = scmp.ne.s32.totalorder %s150, %s152
    %p159 = scmp.eq.s32.totalorder %s27, 1
    %p160 = por %p158, %p159
    %p161 = scmp.ne.s32.totalorder %s152, %s153
    %p162 = scmp.eq.s32.totalorder %s27, 0
    %p163 = por %p161, %p162
    %p164 = scmp.ne.s32.totalorder %s152, %s153
    %p165 = scmp.eq.s32.totalorder %s28, 1
    %p166 = por %p164, %p165
    %p168 = scmp.ne.s32.totalorder %s153, %s167
    %p169 = scmp.eq.s32.totalorder %s28, 0
    %p170 = por %p168, %p169
    %s172 = sadd.s32 %s171, 1
    %p175 = scmp.eq.s32.totalorder %s22, 1
    %p176 = scmp.ne.s32.totalorder %s171, %s173
    %p177 = scmp.eq.s32.totalorder %s22, 0
    %p178 = por %p176, %p177
    %p179 = scmp.ne.s32.totalorder %s171, %s173
    %p180 = scmp.eq.s32.totalorder %s27, 1
    %p181 = por %p179, %p180
    %p182 = scmp.ne.s32.totalorder %s173, %s174
    %p183 = scmp.eq.s32.totalorder %s27, 0
    %p184 = por %p182, %p183
    %p185 = scmp.ne.s32.totalorder %s173, %s174
    %p186 = scmp.eq.s32.totalorder %s28, 1
    %p187 = por %p185, %p186
    %p189 = scmp.ne.s32.totalorder %s174, %s188
    %p190 = scmp.eq.s32.totalorder %s28, 0
    %p191 = por %p189, %p190
    %s193 = sadd.s32 %s192, 1
    %p196 = scmp.eq.s32.totalorder %s22, 1
    %p197 = scmp.ne.s32.totalorder %s192, %s194
    %p198 = scmp.eq.s32.totalorder %s22, 0
    %p199 = por %p197, %p198
    %p200 = scmp.ne.s32.totalorder %s192, %s194
    %p201 = scmp.eq.s32.totalorder %s27, 1
    %p202 = por %p200, %p201
    %p203 = scmp.ne.s32.totalorder %s194, %s195
    %p204 = scmp.eq.s32.totalorder %s27, 0
    %p205 = por %p203, %p204
    %p206 = scmp.ne.s32.totalorder %s194, %s195
    %p207 = scmp.eq.s32.totalorder %s28, 1
    %p208 = por %p206, %p207
    %p210 = scmp.ne.s32.totalorder %s195, %s209
    %p211 = scmp.eq.s32.totalorder %s28, 0
    %p212 = por %p210, %p211
    %s214 = sadd.s32 %s213, 1
    %p217 = scmp.eq.s32.totalorder %s22, 1
    %p218 = scmp.ne.s32.totalorder %s213, %s215
    %p219 = scmp.eq.s32.totalorder %s22, 0
    %p220 = por %p218, %p219
    %p221 = scmp.ne.s32.totalorder %s213, %s215
    %p222 = scmp.eq.s32.totalorder %s27, 1
    %p223 = por %p221, %p222
    %p224 = scmp.ne.s32.totalorder %s215, %s216
    %p225 = scmp.eq.s32.totalorder %s27, 0
    %p226 = por %p224, %p225
    %p227 = scmp.ne.s32.totalorder %s215, %s216
    %p228 = scmp.eq.s32.totalorder %s28, 1
    %p229 = por %p227, %p228
    %p231 = scmp.ne.s32.totalorder %s216, %s230
    %p232 = scmp.eq.s32.totalorder %s28, 0
    %p233 = por %p231, %p232
    %s235 = sadd.s32 %s234, 1
    %p238 = scmp.eq.s32.totalorder %s22, 1
    %p239 = scmp.ne.s32.totalorder %s234, %s236
    %p240 = scmp.eq.s32.totalorder %s22, 0
    %p241 = por %p239, %p240
    %p242 = scmp.ne.s32.totalorder %s234, %s236
    %p243 = scmp.eq.s32.totalorder %s27, 1
    %p244 = por %p242, %p243
    %p245 = scmp.ne.s32.totalorder %s236, %s237
    %p246 = scmp.eq.s32.totalorder %s27, 0
    %p247 = por %p245, %p246
    %p248 = scmp.ne.s32.totalorder %s236, %s237
    %p249 = scmp.eq.s32.totalorder %s28, 1
    %p250 = por %p248, %p249
    %p252 = scmp.ne.s32.totalorder %s237, %s251
    %p253 = scmp.eq.s32.totalorder %s28, 0
    %p254 = por %p252, %p253
    %s256 = sadd.s32 %s255, 1
    %p259 = scmp.eq.s32.totalorder %s22, 1
    %p260 = scmp.ne.s32.totalorder %s255, %s257
    %p261 = scmp.eq.s32.totalorder %s22, 0
    %p262 = por %p260, %p261
    %p263 = scmp.ne.s32.totalorder %s255, %s257
    %p264 = scmp.eq.s32.totalorder %s27, 1
    %p265 = por %p263, %p264
    %p266 = scmp.ne.s32.totalorder %s257, %s258
    %p267 = scmp.eq.s32.totalorder %s27, 0
    %p268 = por %p266, %p267
    %p269 = scmp.ne.s32.totalorder %s257, %s258
    %p270 = scmp.eq.s32.totalorder %s28, 1
    %p271 = por %p269, %p270
    %p273 = scmp.ne.s32.totalorder %s258, %s272
    %p274 = scmp.eq.s32.totalorder %s28, 0
    %p275 = por %p273, %p274
    %s277 = sadd.s32 %s276, 1
    %p280 = scmp.eq.s32.totalorder %s22, 1
    %p281 = scmp.ne.s32.totalorder %s276, %s278
    %p282 = scmp.eq.s32.totalorder %s22, 0
    %p283 = por %p281, %p282
    %p284 = scmp.ne.s32.totalorder %s276, %s278
    %p285 = scmp.eq.s32.totalorder %s27, 1
    %p286 = por %p284, %p285
    %p287 = scmp.ne.s32.totalorder %s278, %s279
    %p288 = scmp.eq.s32.totalorder %s27, 0
    %p289 = por %p287, %p288
    %p290 = scmp.ne.s32.totalorder %s278, %s279
    %p291 = scmp.eq.s32.totalorder %s28, 1
    %p292 = por %p290, %p291
    %p294 = scmp.ne.s32.totalorder %s279, %s293
    %p295 = scmp.eq.s32.totalorder %s28, 0
    %p296 = por %p294, %p295
    %s298 = sadd.s32 %s297, 1
    %p301 = scmp.eq.s32.totalorder %s22, 1
    %p302 = scmp.ne.s32.totalorder %s297, %s299
    %p303 = scmp.eq.s32.totalorder %s22, 0
    %p304 = por %p302, %p303
    %p305 = scmp.ne.s32.totalorder %s297, %s299
    %p306 = scmp.eq.s32.totalorder %s27, 1
    %p307 = por %p305, %p306
    %p308 = scmp.ne.s32.totalorder %s299, %s300
    %p309 = scmp.eq.s32.totalorder %s27, 0
    %p310 = por %p308, %p309
    %p311 = scmp.ne.s32.totalorder %s299, %s300
    %p312 = scmp.eq.s32.totalorder %s28, 1
    %p313 = por %p311, %p312
    %p315 = scmp.ne.s32.totalorder %s300, %s314
    %p316 = scmp.eq.s32.totalorder %s28, 0
    %p317 = por %p315, %p316
    %s319 = sadd.s32 %s318, 1
    %p322 = scmp.eq.s32.totalorder %s22, 1
    %p323 = scmp.ne.s32.totalorder %s318, %s320
    %p324 = scmp.eq.s32.totalorder %s22, 0
    %p325 = por %p323, %p324
    %p326 = scmp.ne.s32.totalorder %s318, %s320
    %p327 = scmp.eq.s32.totalorder %s27, 1
    %p328 = por %p326, %p327
    %p329 = scmp.ne.s32.totalorder %s320, %s321
    %p330 = scmp.eq.s32.totalorder %s27, 0
    %p331 = por %p329, %p330
    %p332 = scmp.ne.s32.totalorder %s320, %s321
    %p333 = scmp.eq.s32.totalorder %s28, 1
    %p334 = por %p332, %p333
    %p336 = scmp.ne.s32.totalorder %s321, %s335
    %p337 = scmp.eq.s32.totalorder %s28, 0
    %p338 = por %p336, %p337
    %s339 = ssub.s32 %s22, %s29
    %p340 = scmp.eq.s32.totalorder %s339, 0
    %s342 = sadd.s32 %s341, 1
    %s343 = scalar_select %p340, %s341, %s342
    %p346 = pneg %p340
    %p347 = scmp.eq.s32.totalorder %s22, 1
    %p348 = por %p346, %p347
    %p349 = scmp.ne.s32.totalorder %s341, %s344
    %p350 = scmp.eq.s32.totalorder %s22, 0
    %p351 = por %p349, %p350
    %p352 = scmp.ne.s32.totalorder %s341, %s344
    %p353 = scmp.eq.s32.totalorder %s27, 1
    %p354 = por %p352, %p353
    %p355 = scmp.ne.s32.totalorder %s344, %s345
    %p356 = scmp.eq.s32.totalorder %s27, 0
    %p357 = por %p355, %p356
    %p358 = scmp.ne.s32.totalorder %s344, %s345
    %p359 = scmp.eq.s32.totalorder %s28, 1
    %p360 = por %p358, %p359
    %p362 = scmp.ne.s32.totalorder %s345, %s361
    %p363 = scmp.eq.s32.totalorder %s28, 0
    %p364 = por %p362, %p363
    %s366 = sadd.s32 %s365, 1
    %p369 = scmp.eq.s32.totalorder %s22, 1
    %p370 = scmp.ne.s32.totalorder %s365, %s367
    %p371 = scmp.eq.s32.totalorder %s22, 0
    %p372 = por %p370, %p371
    %p373 = scmp.ne.s32.totalorder %s365, %s367
    %p374 = scmp.eq.s32.totalorder %s27, 1
    %p375 = por %p373, %p374
    %p376 = scmp.ne.s32.totalorder %s367, %s368
    %p377 = scmp.eq.s32.totalorder %s27, 0
    %p378 = por %p376, %p377
    %p379 = scmp.ne.s32.totalorder %s367, %s368
    %p380 = scmp.eq.s32.totalorder %s28, 1
    %p381 = por %p379, %p380
    %p383 = scmp.ne.s32.totalorder %s368, %s382
    %p384 = scmp.eq.s32.totalorder %s28, 0
    %p385 = por %p383, %p384
    %p386 = scmp.le.s32.totalorder 1, %s22
    %p387 = scmp.lt.s32.totalorder %s22, 3
    %p388 = pnand %p386, %p387
    %p389 = pneg %p388
    // Predicated region
    $region9: #{cogn_layer_forward.1} parent=5 // pred_check
      _
    $region10: #{cogn_layer_forward.1} parent=5 // pred_check_branch
      %391 = sbr.rel (%p388) target = $region12
    $region11: #{cogn_layer_forward.1} parent=5 // pred_region
      %s392 = ssub.s32 %s22, 1
      // Predicated region
      $region13: #{cogn_layer_forward.1} parent=11 // pred_check
        %p393 = pneg %p121
      $region14: #{cogn_layer_forward.1} parent=11 // pred_check_branch
        %395 = sbr.rel (%p393) target = $region16
      $region15: #{cogn_layer_forward.1} parent=11 // pred_region
        _
      $region16: #{cogn_layer_forward.1} parent=11 // pred_fallthru
        _
      // Predicated region
      $region17: #{cogn_layer_forward.1} parent=11 // pred_check
        %p396 = pneg %p142
      $region18: #{cogn_layer_forward.1} parent=11 // pred_check_branch
        %398 = sbr.rel (%p396) target = $region20
      $region19: #{cogn_layer_forward.1} parent=11 // pred_region
        _
      $region20: #{cogn_layer_forward.1} parent=11 // pred_fallthru
        _
      // Predicated region
      $region21: #{cogn_layer_forward.1} parent=11 // pred_check
        %p399 = pneg %p163
      $region22: #{cogn_layer_forward.1} parent=11 // pred_check_branch
        %401 = sbr.rel (%p399) target = $region24
      $region23: #{cogn_layer_forward.1} parent=11 // pred_region
        _
      $region24: #{cogn_layer_forward.1} parent=11 // pred_fallthru
        _
      // Predicated region
      $region25: #{cogn_layer_forward.1} parent=11 // pred_check
        %p402 = pneg %p184
      $region26: #{cogn_layer_forward.1} parent=11 // pred_check_branch
        %404 = sbr.rel (%p402) target = $region28
      $region27: #{cogn_layer_forward.1} parent=11 // pred_region
        _
      $region28: #{cogn_layer_forward.1} parent=11 // pred_fallthru
        _
      // Predicated region
      $region29: #{cogn_layer_forward.1} parent=11 // pred_check
        %p405 = pneg %p205
      $region30: #{cogn_layer_forward.1} parent=11 // pred_check_branch
        %407 = sbr.rel (%p405) target = $region32
      $region31: #{cogn_layer_forward.1} parent=11 // pred_region
        _
      $region32: #{cogn_layer_forward.1} parent=11 // pred_fallthru
        _
      // Predicated region
      $region33: #{cogn_layer_forward.1} parent=11 // pred_check
        %p408 = pneg %p226
      $region34: #{cogn_layer_forward.1} parent=11 // pred_check_branch
        %410 = sbr.rel (%p408) target = $region36
      $region35: #{cogn_layer_forward.1} parent=11 // pred_region
        _
      $region36: #{cogn_layer_forward.1} parent=11 // pred_fallthru
        _
      // Predicated region
      $region37: #{cogn_layer_forward.1} parent=11 // pred_check
        %p411 = pneg %p247
      $region38: #{cogn_layer_forward.1} parent=11 // pred_check_branch
        %413 = sbr.rel (%p411) target = $region40
      $region39: #{cogn_layer_forward.1} parent=11 // pred_region
        _
      $region40: #{cogn_layer_forward.1} parent=11 // pred_fallthru
        _
      // Predicated region
      $region41: #{cogn_layer_forward.1} parent=11 // pred_check
        %p414 = pneg %p268
      $region42: #{cogn_layer_forward.1} parent=11 // pred_check_branch
        %416 = sbr.rel (%p414) target = $region44
      $region43: #{cogn_layer_forward.1} parent=11 // pred_region
        _
      $region44: #{cogn_layer_forward.1} parent=11 // pred_fallthru
        _
      // Predicated region
      $region45: #{cogn_layer_forward.1} parent=11 // pred_check
        %p417 = pneg %p289
      $region46: #{cogn_layer_forward.1} parent=11 // pred_check_branch
        %419 = sbr.rel (%p417) target = $region48
      $region47: #{cogn_layer_forward.1} parent=11 // pred_region
        _
      $region48: #{cogn_layer_forward.1} parent=11 // pred_fallthru
        _
      // Predicated region
      $region49: #{cogn_layer_forward.1} parent=11 // pred_check
        %p420 = pneg %p310
      $region50: #{cogn_layer_forward.1} parent=11 // pred_check_branch
        %422 = sbr.rel (%p420) target = $region52
      $region51: #{cogn_layer_forward.1} parent=11 // pred_region
        _
      $region52: #{cogn_layer_forward.1} parent=11 // pred_fallthru
        _
      // Predicated region
      $region53: #{cogn_layer_forward.1} parent=11 // pred_check
        %p423 = pneg %p331
      $region54: #{cogn_layer_forward.1} parent=11 // pred_check_branch
        %425 = sbr.rel (%p423) target = $region56
      $region55: #{cogn_layer_forward.1} parent=11 // pred_region
        _
      $region56: #{cogn_layer_forward.1} parent=11 // pred_fallthru
        _
    $region12: #{cogn_layer_forward.1} parent=5 // pred_fallthru
      _
    %p426 = scmp.lt.s32.totalorder %s22, 2
    // Predicated region
    $region57: #{cogn_layer_forward.1} parent=5 // pred_check
      %p427 = pneg %p426
    $region58: #{cogn_layer_forward.1} parent=5 // pred_check_branch
      %429 = sbr.rel (%p427) target = $region60
    $region59: #{cogn_layer_forward.1} parent=5 // pred_region
      // Predicated region
      $region61: #{cogn_layer_forward.1} parent=59 // pred_check
        %p430 = pneg %p42
      $region62: #{cogn_layer_forward.1} parent=59 // pred_check_branch
        %432 = sbr.rel (%p430) target = $region64
      $region63: #{cogn_layer_forward.1} parent=59 // pred_region
        %s433 = smul.u32 64, %s22
        %p434 = scmp.lt.s32.totalorder %s433, 127
        %s435 = scalar_select %p434, %s433, 127
        %s436 = smul.addr %s435, 8
        %s437 = scalar_lea.vmem %s0, %s436
        %s438 = smul.u32 64, %s22
      $region64: #{cogn_layer_forward.1} parent=59 // pred_fallthru
        _
      // Predicated region
      $region65: #{cogn_layer_forward.1} parent=59 // pred_check
        %p439 = pneg %p68
      $region66: #{cogn_layer_forward.1} parent=59 // pred_check_branch
        %441 = sbr.rel (%p439) target = $region68
      $region67: #{cogn_layer_forward.1} parent=59 // pred_region
        %s442 = smul.u32 2, %s22
        %p443 = scmp.lt.s32.totalorder %s442, 3
        %s444 = scalar_select %p443, %s442, 3
        %s445 = scalar_lea.vmem %s1, %s444
        %s446 = smul.u32 2, %s22
      $region68: #{cogn_layer_forward.1} parent=59 // pred_fallthru
        _
      // Predicated region
      $region69: #{cogn_layer_forward.1} parent=59 // pred_check
        %p447 = pneg %p94
      $region70: #{cogn_layer_forward.1} parent=59 // pred_check_branch
        %449 = sbr.rel (%p447) target = $region72
      $region71: #{cogn_layer_forward.1} parent=59 // pred_region
        %s450 = smul.u32 32, %s22
        %p451 = scmp.lt.s32.totalorder %s450, 63
        %s452 = scalar_select %p451, %s450, 63
        %s453 = smul.addr %s452, 4
        %s454 = scalar_lea.vmem %s2, %s453
        %s455 = smul.u32 32, %s22
      $region72: #{cogn_layer_forward.1} parent=59 // pred_fallthru
        _
    $region60: #{cogn_layer_forward.1} parent=5 // pred_fallthru
      _
    %p456 = scmp.le.s32.totalorder 1, %s22
    %p457 = scmp.lt.s32.totalorder %s22, 3
    %p458 = pnand %p456, %p457
    %p459 = pneg %p458
    // Predicated region
    $region73: #{cogn_layer_forward.1} parent=5 // pred_check
      _
    $region74: #{cogn_layer_forward.1} parent=5 // pred_check_branch
      %461 = sbr.rel (%p458) target = $region76
    $region75: #{cogn_layer_forward.1} parent=5 // pred_region
      %s462 = ssub.s32 %s22, 1
      %s463 = smul.u32 64, %s27
      %p464 = scmp.lt.s32.totalorder %s463, 127
      %s465 = scalar_select %p464, %s463, 127
      %s466 = smul.addr %s465, 8
      %s467 = scalar_lea.vmem %s0, %s466
      %p468 = pneg %p48
      %p469 = pneg %p45
      %s470 = smul.u32 2, %s27
      %p471 = scmp.lt.s32.totalorder %s470, 3
      %s472 = scalar_select %p471, %s470, 3
      %s473 = scalar_lea.vmem %s1, %s472
      %p474 = pneg %p74
      %p475 = pneg %p71
      %s476 = smul.u32 32, %s27
      %p477 = scmp.lt.s32.totalorder %s476, 63
      %s478 = scalar_select %p477, %s476, 63
      %s479 = smul.addr %s478, 4
      %s480 = scalar_lea.vmem %s2, %s479
      %p481 = pneg %p100
      %p482 = pneg %p97
      %p483 = pneg %p121
      %p484 = pneg %p118
      %p485 = pneg %p142
      %p486 = pneg %p139
      %p487 = pneg %p163
      %p488 = pneg %p160
      %p489 = pneg %p184
      %p490 = pneg %p181
      %p491 = pneg %p205
      %p492 = pneg %p202
      %p493 = pneg %p226
      %p494 = pneg %p223
      %p495 = pneg %p247
      %p496 = pneg %p244
      %p497 = pneg %p268
      %p498 = pneg %p265
      %p499 = pneg %p289
      %p500 = pneg %p286
      %p501 = pneg %p310
      %p502 = pneg %p307
      %p503 = pneg %p331
      %p504 = pneg %p328
      %p505 = pneg %p357
      %p506 = pneg %p354
      %s507 = smul.u32 32, %s27
      %p508 = scmp.lt.s32.totalorder %s507, 63
      %s509 = scalar_select %p508, %s507, 63
      %s510 = smul.addr %s509, 4
      %s511 = scalar_lea.vmem %s14, %s510
      %p512 = pneg %p378
      %p513 = pneg %p375
      %s514 = smul.u32 64, %s27
      %p515 = scmp.lt.s32.totalorder %s514, 127
      %s516 = scalar_select %p515, %s514, 127
      %s517 = smul.addr %s516, 8
      %s518 = scalar_lea.vmem %s0, %s517
      %s519 = smul.u32 64, %s27
      %s520 = smul.u32 2, %s27
      %p521 = scmp.lt.s32.totalorder %s520, 3
      %s522 = scalar_select %p521, %s520, 3
      %s523 = scalar_lea.vmem %s1, %s522
      %s524 = smul.u32 2, %s27
      %s525 = smul.u32 32, %s27
      %p526 = scmp.lt.s32.totalorder %s525, 63
      %s527 = scalar_select %p526, %s525, 63
      %s528 = smul.addr %s527, 4
      %s529 = scalar_lea.vmem %s2, %s528
      %s530 = smul.u32 32, %s27
      %s531 = smul.u32 32, %s27
      %p532 = scmp.lt.s32.totalorder %s531, 63
      %s533 = scalar_select %p532, %s531, 63
      %s534 = smul.addr %s533, 4
      %s535 = scalar_lea.vmem %s14, %s534
      %s536 = smul.u32 32, %s27
      %p538 = scmp.eq.s32.totalorder %s27, 0
      // Predicated region
      $region77: #{cogn_layer_forward.1} parent=75 // pred_check
        %p539 = pneg %p538
      $region78: #{cogn_layer_forward.1} parent=75 // pred_check_branch
        %541 = sbr.rel (%p539) target = $region80
      $region79: #{cogn_layer_forward.1} parent=75 // pred_region
        %542 = vst [vmem:[#allocation2] sm:$0xff] 0.0
        %543 = vst [vmem:[#allocation2 + $0x8] sm:$0xff] 0.0
        %544 = vst [vmem:[#allocation2 + $0x10] sm:$0xff] 0.0
        %545 = vst [vmem:[#allocation2 + $0x18] sm:$0xff] 0.0
        %546 = vst [vmem:[#allocation2 + $0x20] sm:$0xff] 0.0
        %547 = vst [vmem:[#allocation2 + $0x28] sm:$0xff] 0.0
        %548 = vst [vmem:[#allocation2 + $0x30] sm:$0xff] 0.0
        %549 = vst [vmem:[#allocation2 + $0x38] sm:$0xff] 0.0
        %550 = vst [vmem:[#allocation2 + $0x40] sm:$0xff] 0.0
        %551 = vst [vmem:[#allocation2 + $0x48] sm:$0xff] 0.0
        %552 = vst [vmem:[#allocation2 + $0x50] sm:$0xff] 0.0
        %553 = vst [vmem:[#allocation2 + $0x58] sm:$0xff] 0.0
        %554 = vst [vmem:[#allocation2 + $0x60] sm:$0xff] 0.0
        %555 = vst [vmem:[#allocation2 + $0x68] sm:$0xff] 0.0
        %556 = vst [vmem:[#allocation2 + $0x70] sm:$0xff] 0.0
        %557 = vst [vmem:[#allocation2 + $0x78] sm:$0xff] 0.0
      $region80: #{cogn_layer_forward.1} parent=75 // pred_fallthru
        _
      %v558 = vld [vmem:[%s518] sm:$0xff]
      %v559 = vld [vmem:[%s518 + $0x8] sm:$0xff]
      %v560 = vld [vmem:[%s518 + $0x10] sm:$0xff]
      %v561 = vld [vmem:[%s518 + $0x18] sm:$0xff]
      %v562 = vld [vmem:[%s518 + $0x20] sm:$0xff]
      %v563 = vld [vmem:[%s518 + $0x28] sm:$0xff]
      %v564 = vld [vmem:[%s518 + $0x30] sm:$0xff]
      %v565 = vld [vmem:[%s518 + $0x38] sm:$0xff]
      %v566 = vld [vmem:[%s518 + $0x40] sm:$0xff]
      %v567 = vld [vmem:[%s518 + $0x48] sm:$0xff]
      %v568 = vld [vmem:[%s518 + $0x50] sm:$0xff]
      %v569 = vld [vmem:[%s518 + $0x58] sm:$0xff]
      %v570 = vld [vmem:[%s518 + $0x60] sm:$0xff]
      %v571 = vld [vmem:[%s518 + $0x68] sm:$0xff]
      %v572 = vld [vmem:[%s518 + $0x70] sm:$0xff]
      %v573 = vld [vmem:[%s518 + $0x78] sm:$0xff]
      %v574 = vld [vmem:[%s518 + $0x80] sm:$0xff]
      %v575 = vld [vmem:[%s518 + $0x88] sm:$0xff]
      %v576 = vld [vmem:[%s518 + $0x90] sm:$0xff]
      %v577 = vld [vmem:[%s518 + $0x98] sm:$0xff]
      %v578 = vld [vmem:[%s518 + $0xa0] sm:$0xff]
      %v579 = vld [vmem:[%s518 + $0xa8] sm:$0xff]
      %v580 = vld [vmem:[%s518 + $0xb0] sm:$0xff]
      %v581 = vld [vmem:[%s518 + $0xb8] sm:$0xff]
      %v582 = vld [vmem:[%s518 + $0xc0] sm:$0xff]
      %v583 = vld [vmem:[%s518 + $0xc8] sm:$0xff]
      %v584 = vld [vmem:[%s518 + $0xd0] sm:$0xff]
      %v585 = vld [vmem:[%s518 + $0xd8] sm:$0xff]
      %v586 = vld [vmem:[%s518 + $0xe0] sm:$0xff]
      %v587 = vld [vmem:[%s518 + $0xe8] sm:$0xff]
      %v588 = vld [vmem:[%s518 + $0xf0] sm:$0xff]
      %v589 = vld [vmem:[%s518 + $0xf8] sm:$0xff]
      %v590 = vld [vmem:[%s518 + $0x100] sm:$0xff]
      %v591 = vld [vmem:[%s518 + $0x108] sm:$0xff]
      %v592 = vld [vmem:[%s518 + $0x110] sm:$0xff]
      %v593 = vld [vmem:[%s518 + $0x118] sm:$0xff]
      %v594 = vld [vmem:[%s518 + $0x120] sm:$0xff]
      %v595 = vld [vmem:[%s518 + $0x128] sm:$0xff]
      %v596 = vld [vmem:[%s518 + $0x130] sm:$0xff]
      %v597 = vld [vmem:[%s518 + $0x138] sm:$0xff]
      %v598 = vld [vmem:[%s518 + $0x140] sm:$0xff]
      %v599 = vld [vmem:[%s518 + $0x148] sm:$0xff]
      %v600 = vld [vmem:[%s518 + $0x150] sm:$0xff]
      %v601 = vld [vmem:[%s518 + $0x158] sm:$0xff]
      %v602 = vld [vmem:[%s518 + $0x160] sm:$0xff]
      %v603 = vld [vmem:[%s518 + $0x168] sm:$0xff]
      %v604 = vld [vmem:[%s518 + $0x170] sm:$0xff]
      %v605 = vld [vmem:[%s518 + $0x178] sm:$0xff]
      %v606 = vld [vmem:[%s518 + $0x180] sm:$0xff]
      %v607 = vld [vmem:[%s518 + $0x188] sm:$0xff]
      %v608 = vld [vmem:[%s518 + $0x190] sm:$0xff]
      %v609 = vld [vmem:[%s518 + $0x198] sm:$0xff]
      %v610 = vld [vmem:[%s518 + $0x1a0] sm:$0xff]
      %v611 = vld [vmem:[%s518 + $0x1a8] sm:$0xff]
      %v612 = vld [vmem:[%s518 + $0x1b0] sm:$0xff]
      %v613 = vld [vmem:[%s518 + $0x1b8] sm:$0xff]
      %v614 = vld [vmem:[%s518 + $0x1c0] sm:$0xff]
      %v615 = vld [vmem:[%s518 + $0x1c8] sm:$0xff]
      %v616 = vld [vmem:[%s518 + $0x1d0] sm:$0xff]
      %v617 = vld [vmem:[%s518 + $0x1d8] sm:$0xff]
      %v618 = vld [vmem:[%s518 + $0x1e0] sm:$0xff]
      %v619 = vld [vmem:[%s518 + $0x1e8] sm:$0xff]
      %v620 = vld [vmem:[%s518 + $0x1f0] sm:$0xff]
      %v621 = vld [vmem:[%s518 + $0x1f8] sm:$0xff]
      %v622 = vlaneseq
      %v623 = vand.u32 %v622, 127
      %624 = vset.pattern.permute.xlu0 0
      %625 = vperm.xlu0 %624, %v558
      %v626 = vpop.permute.xlu0 %625
      %627 = vset.pattern.permute.xlu0 0
      %628 = vperm.xlu0 %627, %v559
      %v629 = vpop.permute.xlu0 %628
      %630 = vset.pattern.permute.xlu0 0
      %631 = vperm.xlu0 %630, %v560
      %v632 = vpop.permute.xlu0 %631
      %633 = vset.pattern.permute.xlu0 0
      %634 = vperm.xlu0 %633, %v561
      %v635 = vpop.permute.xlu0 %634
      %636 = vset.pattern.permute.xlu0 0
      %637 = vperm.xlu0 %636, %v562
      %v638 = vpop.permute.xlu0 %637
      %639 = vset.pattern.permute.xlu0 0
      %640 = vperm.xlu0 %639, %v563
      %v641 = vpop.permute.xlu0 %640
      %642 = vset.pattern.permute.xlu0 0
      %643 = vperm.xlu0 %642, %v564
      %v644 = vpop.permute.xlu0 %643
      %645 = vset.pattern.permute.xlu0 0
      %646 = vperm.xlu0 %645, %v565
      %v647 = vpop.permute.xlu0 %646
      %648 = vset.pattern.permute.xlu0 0
      %649 = vperm.xlu0 %648, %v566
      %v650 = vpop.permute.xlu0 %649
      %651 = vset.pattern.permute.xlu0 0
      %652 = vperm.xlu0 %651, %v567
      %v653 = vpop.permute.xlu0 %652
      %654 = vset.pattern.permute.xlu0 0
      %655 = vperm.xlu0 %654, %v568
      %v656 = vpop.permute.xlu0 %655
      %657 = vset.pattern.permute.xlu0 0
      %658 = vperm.xlu0 %657, %v569
      %v659 = vpop.permute.xlu0 %658
      %660 = vset.pattern.permute.xlu0 0
      %661 = vperm.xlu0 %660, %v570
      %v662 = vpop.permute.xlu0 %661
      %663 = vset.pattern.permute.xlu0 0
      %664 = vperm.xlu0 %663, %v571
      %v665 = vpop.permute.xlu0 %664
      %666 = vset.pattern.permute.xlu0 0
      %667 = vperm.xlu0 %666, %v572
      %v668 = vpop.permute.xlu0 %667
      %669 = vset.pattern.permute.xlu0 0
      %670 = vperm.xlu0 %669, %v573
      %v671 = vpop.permute.xlu0 %670
      %672 = vset.pattern.permute.xlu0 0
      %673 = vperm.xlu0 %672, %v574
      %v674 = vpop.permute.xlu0 %673
      %675 = vset.pattern.permute.xlu0 0
      %676 = vperm.xlu0 %675, %v575
      %v677 = vpop.permute.xlu0 %676
      %678 = vset.pattern.permute.xlu0 0
      %679 = vperm.xlu0 %678, %v576
      %v680 = vpop.permute.xlu0 %679
      %681 = vset.pattern.permute.xlu0 0
      %682 = vperm.xlu0 %681, %v577
      %v683 = vpop.permute.xlu0 %682
      %684 = vset.pattern.permute.xlu0 0
      %685 = vperm.xlu0 %684, %v578
      %v686 = vpop.permute.xlu0 %685
      %687 = vset.pattern.permute.xlu0 0
      %688 = vperm.xlu0 %687, %v579
      %v689 = vpop.permute.xlu0 %688
      %690 = vset.pattern.permute.xlu0 0
      %691 = vperm.xlu0 %690, %v580
      %v692 = vpop.permute.xlu0 %691
      %693 = vset.pattern.permute.xlu0 0
      %694 = vperm.xlu0 %693, %v581
      %v695 = vpop.permute.xlu0 %694
      %696 = vset.pattern.permute.xlu0 0
      %697 = vperm.xlu0 %696, %v582
      %v698 = vpop.permute.xlu0 %697
      %699 = vset.pattern.permute.xlu0 0
      %700 = vperm.xlu0 %699, %v583
      %v701 = vpop.permute.xlu0 %700
      %702 = vset.pattern.permute.xlu0 0
      %703 = vperm.xlu0 %702, %v584
      %v704 = vpop.permute.xlu0 %703
      %705 = vset.pattern.permute.xlu0 0
      %706 = vperm.xlu0 %705, %v585
      %v707 = vpop.permute.xlu0 %706
      %708 = vset.pattern.permute.xlu0 0
      %709 = vperm.xlu0 %708, %v586
      %v710 = vpop.permute.xlu0 %709
      %711 = vset.pattern.permute.xlu0 0
      %712 = vperm.xlu0 %711, %v587
      %v713 = vpop.permute.xlu0 %712
      %714 = vset.pattern.permute.xlu0 0
      %715 = vperm.xlu0 %714, %v588
      %v716 = vpop.permute.xlu0 %715
      %717 = vset.pattern.permute.xlu0 0
      %718 = vperm.xlu0 %717, %v589
      %v719 = vpop.permute.xlu0 %718
      %720 = vset.pattern.permute.xlu0 0
      %721 = vperm.xlu0 %720, %v590
      %v722 = vpop.permute.xlu0 %721
      %723 = vset.pattern.permute.xlu0 0
      %724 = vperm.xlu0 %723, %v591
      %v725 = vpop.permute.xlu0 %724
      %726 = vset.pattern.permute.xlu0 0
      %727 = vperm.xlu0 %726, %v592
      %v728 = vpop.permute.xlu0 %727
      %729 = vset.pattern.permute.xlu0 0
      %730 = vperm.xlu0 %729, %v593
      %v731 = vpop.permute.xlu0 %730
      %732 = vset.pattern.permute.xlu0 0
      %733 = vperm.xlu0 %732, %v594
      %v734 = vpop.permute.xlu0 %733
      %735 = vset.pattern.permute.xlu0 0
      %736 = vperm.xlu0 %735, %v595
      %v737 = vpop.permute.xlu0 %736
      %738 = vset.pattern.permute.xlu0 0
      %739 = vperm.xlu0 %738, %v596
      %v740 = vpop.permute.xlu0 %739
      %741 = vset.pattern.permute.xlu0 0
      %742 = vperm.xlu0 %741, %v597
      %v743 = vpop.permute.xlu0 %742
      %744 = vset.pattern.permute.xlu0 0
      %745 = vperm.xlu0 %744, %v598
      %v746 = vpop.permute.xlu0 %745
      %747 = vset.pattern.permute.xlu0 0
      %748 = vperm.xlu0 %747, %v599
      %v749 = vpop.permute.xlu0 %748
      %750 = vset.pattern.permute.xlu0 0
      %751 = vperm.xlu0 %750, %v600
      %v752 = vpop.permute.xlu0 %751
      %753 = vset.pattern.permute.xlu0 0
      %754 = vperm.xlu0 %753, %v601
      %v755 = vpop.permute.xlu0 %754
      %756 = vset.pattern.permute.xlu0 0
      %757 = vperm.xlu0 %756, %v602
      %v758 = vpop.permute.xlu0 %757
      %759 = vset.pattern.permute.xlu0 0
      %760 = vperm.xlu0 %759, %v603
      %v761 = vpop.permute.xlu0 %760
      %762 = vset.pattern.permute.xlu0 0
      %763 = vperm.xlu0 %762, %v604
      %v764 = vpop.permute.xlu0 %763
      %765 = vset.pattern.permute.xlu0 0
      %766 = vperm.xlu0 %765, %v605
      %v767 = vpop.permute.xlu0 %766
      %768 = vset.pattern.permute.xlu0 0
      %769 = vperm.xlu0 %768, %v606
      %v770 = vpop.permute.xlu0 %769
      %771 = vset.pattern.permute.xlu0 0
      %772 = vperm.xlu0 %771, %v607
      %v773 = vpop.permute.xlu0 %772
      %774 = vset.pattern.permute.xlu0 0
      %775 = vperm.xlu0 %774, %v608
      %v776 = vpop.permute.xlu0 %775
      %777 = vset.pattern.permute.xlu0 0
      %778 = vperm.xlu0 %777, %v609
      %v779 = vpop.permute.xlu0 %778
      %780 = vset.pattern.permute.xlu0 0
      %781 = vperm.xlu0 %780, %v610
      %v782 = vpop.permute.xlu0 %781
      %783 = vset.pattern.permute.xlu0 0
      %784 = vperm.xlu0 %783, %v611
      %v785 = vpop.permute.xlu0 %784
      %786 = vset.pattern.permute.xlu0 0
      %787 = vperm.xlu0 %786, %v612
      %v788 = vpop.permute.xlu0 %787
      %789 = vset.pattern.permute.xlu0 0
      %790 = vperm.xlu0 %789, %v613
      %v791 = vpop.permute.xlu0 %790
      %792 = vset.pattern.permute.xlu0 0
      %793 = vperm.xlu0 %792, %v614
      %v794 = vpop.permute.xlu0 %793
      %795 = vset.pattern.permute.xlu0 0
      %796 = vperm.xlu0 %795, %v615
      %v797 = vpop.permute.xlu0 %796
      %798 = vset.pattern.permute.xlu0 0
      %799 = vperm.xlu0 %798, %v616
      %v800 = vpop.permute.xlu0 %799
      %801 = vset.pattern.permute.xlu0 0
      %802 = vperm.xlu0 %801, %v617
      %v803 = vpop.permute.xlu0 %802
      %804 = vset.pattern.permute.xlu0 0
      %805 = vperm.xlu0 %804, %v618
      %v806 = vpop.permute.xlu0 %805
      %807 = vset.pattern.permute.xlu0 0
      %808 = vperm.xlu0 %807, %v619
      %v809 = vpop.permute.xlu0 %808
      %810 = vset.pattern.permute.xlu0 0
      %811 = vperm.xlu0 %810, %v620
      %v812 = vpop.permute.xlu0 %811
      %813 = vset.pattern.permute.xlu0 0
      %814 = vperm.xlu0 %813, %v621
      %v815 = vpop.permute.xlu0 %814
      %vm816 = vcmp.eq.s32.totalorder %v623, %v626
      %vm817 = vcmp.eq.s32.totalorder %v623, %v629
      %vm818 = vcmp.eq.s32.totalorder %v623, %v632
      %vm819 = vcmp.eq.s32.totalorder %v623, %v635
      %vm820 = vcmp.eq.s32.totalorder %v623, %v638
      %vm821 = vcmp.eq.s32.totalorder %v623, %v641
      %vm822 = vcmp.eq.s32.totalorder %v623, %v644
      %vm823 = vcmp.eq.s32.totalorder %v623, %v647
      %vm824 = vcmp.eq.s32.totalorder %v623, %v650
      %vm825 = vcmp.eq.s32.totalorder %v623, %v653
      %vm826 = vcmp.eq.s32.totalorder %v623, %v656
      %vm827 = vcmp.eq.s32.totalorder %v623, %v659
      %vm828 = vcmp.eq.s32.totalorder %v623, %v662
      %vm829 = vcmp.eq.s32.totalorder %v623, %v665
      %vm830 = vcmp.eq.s32.totalorder %v623, %v668
      %vm831 = vcmp.eq.s32.totalorder %v623, %v671
      %vm832 = vcmp.eq.s32.totalorder %v623, %v674
      %vm833 = vcmp.eq.s32.totalorder %v623, %v677
      %vm834 = vcmp.eq.s32.totalorder %v623, %v680
      %vm835 = vcmp.eq.s32.totalorder %v623, %v683
      %vm836 = vcmp.eq.s32.totalorder %v623, %v686
      %vm837 = vcmp.eq.s32.totalorder %v623, %v689
      %vm838 = vcmp.eq.s32.totalorder %v623, %v692
      %vm839 = vcmp.eq.s32.totalorder %v623, %v695
      %vm840 = vcmp.eq.s32.totalorder %v623, %v698
      %vm841 = vcmp.eq.s32.totalorder %v623, %v701
      %vm842 = vcmp.eq.s32.totalorder %v623, %v704
      %vm843 = vcmp.eq.s32.totalorder %v623, %v707
      %vm844 = vcmp.eq.s32.totalorder %v623, %v710
      %vm845 = vcmp.eq.s32.totalorder %v623, %v713
      %vm846 = vcmp.eq.s32.totalorder %v623, %v716
      %vm847 = vcmp.eq.s32.totalorder %v623, %v719
      %vm848 = vcmp.eq.s32.totalorder %v623, %v722
      %vm849 = vcmp.eq.s32.totalorder %v623, %v725
      %vm850 = vcmp.eq.s32.totalorder %v623, %v728
      %vm851 = vcmp.eq.s32.totalorder %v623, %v731
      %vm852 = vcmp.eq.s32.totalorder %v623, %v734
      %vm853 = vcmp.eq.s32.totalorder %v623, %v737
      %vm854 = vcmp.eq.s32.totalorder %v623, %v740
      %vm855 = vcmp.eq.s32.totalorder %v623, %v743
      %vm856 = vcmp.eq.s32.totalorder %v623, %v746
      %vm857 = vcmp.eq.s32.totalorder %v623, %v749
      %vm858 = vcmp.eq.s32.totalorder %v623, %v752
      %vm859 = vcmp.eq.s32.totalorder %v623, %v755
      %vm860 = vcmp.eq.s32.totalorder %v623, %v758
      %vm861 = vcmp.eq.s32.totalorder %v623, %v761
      %vm862 = vcmp.eq.s32.totalorder %v623, %v764
      %vm863 = vcmp.eq.s32.totalorder %v623, %v767
      %vm864 = vcmp.eq.s32.totalorder %v623, %v770
      %vm865 = vcmp.eq.s32.totalorder %v623, %v773
      %vm866 = vcmp.eq.s32.totalorder %v623, %v776
      %vm867 = vcmp.eq.s32.totalorder %v623, %v779
      %vm868 = vcmp.eq.s32.totalorder %v623, %v782
      %vm869 = vcmp.eq.s32.totalorder %v623, %v785
      %vm870 = vcmp.eq.s32.totalorder %v623, %v788
      %vm871 = vcmp.eq.s32.totalorder %v623, %v791
      %vm872 = vcmp.eq.s32.totalorder %v623, %v794
      %vm873 = vcmp.eq.s32.totalorder %v623, %v797
      %vm874 = vcmp.eq.s32.totalorder %v623, %v800
      %vm875 = vcmp.eq.s32.totalorder %v623, %v803
      %vm876 = vcmp.eq.s32.totalorder %v623, %v806
      %vm877 = vcmp.eq.s32.totalorder %v623, %v809
      %vm878 = vcmp.eq.s32.totalorder %v623, %v812
      %vm879 = vcmp.eq.s32.totalorder %v623, %v815
      %v880 = vsel %vm816, 1, 0
      %v881 = vsel %vm817, 1, 0
      %v882 = vsel %vm818, 1, 0
      %v883 = vsel %vm819, 1, 0
      %v884 = vsel %vm820, 1, 0
      %v885 = vsel %vm821, 1, 0
      %v886 = vsel %vm822, 1, 0
      %v887 = vsel %vm823, 1, 0
      %v888 = vsel %vm824, 1, 0
      %v889 = vsel %vm825, 1, 0
      %v890 = vsel %vm826, 1, 0
      %v891 = vsel %vm827, 1, 0
      %v892 = vsel %vm828, 1, 0
      %v893 = vsel %vm829, 1, 0
      %v894 = vsel %vm830, 1, 0
      %v895 = vsel %vm831, 1, 0
      %v896 = vsel %vm832, 1, 0
      %v897 = vsel %vm833, 1, 0
      %v898 = vsel %vm834, 1, 0
      %v899 = vsel %vm835, 1, 0
      %v900 = vsel %vm836, 1, 0
      %v901 = vsel %vm837, 1, 0
      %v902 = vsel %vm838, 1, 0
      %v903 = vsel %vm839, 1, 0
      %v904 = vsel %vm840, 1, 0
      %v905 = vsel %vm841, 1, 0
      %v906 = vsel %vm842, 1, 0
      %v907 = vsel %vm843, 1, 0
      %v908 = vsel %vm844, 1, 0
      %v909 = vsel %vm845, 1, 0
      %v910 = vsel %vm846, 1, 0
      %v911 = vsel %vm847, 1, 0
      %v912 = vsel %vm848, 1, 0
      %v913 = vsel %vm849, 1, 0
      %v914 = vsel %vm850, 1, 0
      %v915 = vsel %vm851, 1, 0
      %v916 = vsel %vm852, 1, 0
      %v917 = vsel %vm853, 1, 0
      %v918 = vsel %vm854, 1, 0
      %v919 = vsel %vm855, 1, 0
      %v920 = vsel %vm856, 1, 0
      %v921 = vsel %vm857, 1, 0
      %v922 = vsel %vm858, 1, 0
      %v923 = vsel %vm859, 1, 0
      %v924 = vsel %vm860, 1, 0
      %v925 = vsel %vm861, 1, 0
      %v926 = vsel %vm862, 1, 0
      %v927 = vsel %vm863, 1, 0
      %v928 = vsel %vm864, 1, 0
      %v929 = vsel %vm865, 1, 0
      %v930 = vsel %vm866, 1, 0
      %v931 = vsel %vm867, 1, 0
      %v932 = vsel %vm868, 1, 0
      %v933 = vsel %vm869, 1, 0
      %v934 = vsel %vm870, 1, 0
      %v935 = vsel %vm871, 1, 0
      %v936 = vsel %vm872, 1, 0
      %v937 = vsel %vm873, 1, 0
      %v938 = vsel %vm874, 1, 0
      %v939 = vsel %vm875, 1, 0
      %v940 = vsel %vm876, 1, 0
      %v941 = vsel %vm877, 1, 0
      %v942 = vsel %vm878, 1, 0
      %v943 = vsel %vm879, 1, 0
      %v944 = vcvt.s32.f32 %v880
      %v945 = vcvt.s32.f32 %v881
      %v946 = vcvt.s32.f32 %v882
      %v947 = vcvt.s32.f32 %v883
      %v948 = vcvt.s32.f32 %v884
      %v949 = vcvt.s32.f32 %v885
      %v950 = vcvt.s32.f32 %v886
      %v951 = vcvt.s32.f32 %v887
      %v952 = vcvt.s32.f32 %v888
      %v953 = vcvt.s32.f32 %v889
      %v954 = vcvt.s32.f32 %v890
      %v955 = vcvt.s32.f32 %v891
      %v956 = vcvt.s32.f32 %v892
      %v957 = vcvt.s32.f32 %v893
      %v958 = vcvt.s32.f32 %v894
      %v959 = vcvt.s32.f32 %v895
      %v960 = vcvt.s32.f32 %v896
      %v961 = vcvt.s32.f32 %v897
      %v962 = vcvt.s32.f32 %v898
      %v963 = vcvt.s32.f32 %v899
      %v964 = vcvt.s32.f32 %v900
      %v965 = vcvt.s32.f32 %v901
      %v966 = vcvt.s32.f32 %v902
      %v967 = vcvt.s32.f32 %v903
      %v968 = vcvt.s32.f32 %v904
      %v969 = vcvt.s32.f32 %v905
      %v970 = vcvt.s32.f32 %v906
      %v971 = vcvt.s32.f32 %v907
      %v972 = vcvt.s32.f32 %v908
      %v973 = vcvt.s32.f32 %v909
      %v974 = vcvt.s32.f32 %v910
      %v975 = vcvt.s32.f32 %v911
      %v976 = vcvt.s32.f32 %v912
      %v977 = vcvt.s32.f32 %v913
      %v978 = vcvt.s32.f32 %v914
      %v979 = vcvt.s32.f32 %v915
      %v980 = vcvt.s32.f32 %v916
      %v981 = vcvt.s32.f32 %v917
      %v982 = vcvt.s32.f32 %v918
      %v983 = vcvt.s32.f32 %v919
      %v984 = vcvt.s32.f32 %v920
      %v985 = vcvt.s32.f32 %v921
      %v986 = vcvt.s32.f32 %v922
      %v987 = vcvt.s32.f32 %v923
      %v988 = vcvt.s32.f32 %v924
      %v989 = vcvt.s32.f32 %v925
      %v990 = vcvt.s32.f32 %v926
      %v991 = vcvt.s32.f32 %v927
      %v992 = vcvt.s32.f32 %v928
      %v993 = vcvt.s32.f32 %v929
      %v994 = vcvt.s32.f32 %v930
      %v995 = vcvt.s32.f32 %v931
      %v996 = vcvt.s32.f32 %v932
      %v997 = vcvt.s32.f32 %v933
      %v998 = vcvt.s32.f32 %v934
      %v999 = vcvt.s32.f32 %v935
      %v1000 = vcvt.s32.f32 %v936
      %v1001 = vcvt.s32.f32 %v937
      %v1002 = vcvt.s32.f32 %v938
      %v1003 = vcvt.s32.f32 %v939
      %v1004 = vcvt.s32.f32 %v940
      %v1005 = vcvt.s32.f32 %v941
      %v1006 = vcvt.s32.f32 %v942
      %v1007 = vcvt.s32.f32 %v943
      %v1008 = vpack.c.bf16 %v945, %v944
      %v1009 = vpack.c.bf16 %v947, %v946
      %v1010 = vpack.c.bf16 %v949, %v948
      %v1011 = vpack.c.bf16 %v951, %v950
      %v1012 = vpack.c.bf16 %v953, %v952
      %v1013 = vpack.c.bf16 %v955, %v954
      %v1014 = vpack.c.bf16 %v957, %v956
      %v1015 = vpack.c.bf16 %v959, %v958
      %v1016 = vpack.c.bf16 %v961, %v960
      %v1017 = vpack.c.bf16 %v963, %v962
      %v1018 = vpack.c.bf16 %v965, %v964
      %v1019 = vpack.c.bf16 %v967, %v966
      %v1020 = vpack.c.bf16 %v969, %v968
      %v1021 = vpack.c.bf16 %v971, %v970
      %v1022 = vpack.c.bf16 %v973, %v972
      %v1023 = vpack.c.bf16 %v975, %v974
      %v1024 = vpack.c.bf16 %v977, %v976
      %v1025 = vpack.c.bf16 %v979, %v978
      %v1026 = vpack.c.bf16 %v981, %v980
      %v1027 = vpack.c.bf16 %v983, %v982
      %v1028 = vpack.c.bf16 %v985, %v984
      %v1029 = vpack.c.bf16 %v987, %v986
      %v1030 = vpack.c.bf16 %v989, %v988
      %v1031 = vpack.c.bf16 %v991, %v990
      %v1032 = vpack.c.bf16 %v993, %v992
      %v1033 = vpack.c.bf16 %v995, %v994
      %v1034 = vpack.c.bf16 %v997, %v996
      %v1035 = vpack.c.bf16 %v999, %v998
      %v1036 = vpack.c.bf16 %v1001, %v1000
      %v1037 = vpack.c.bf16 %v1003, %v1002
      %v1038 = vpack.c.bf16 %v1005, %v1004
      %v1039 = vpack.c.bf16 %v1007, %v1006
      %v1040 = vld [vmem:[%s3] sm:$0xf]
      %v1041 = vld [vmem:[%s3 + $0x4] sm:$0xf]
      %v1042 = vld [vmem:[%s3 + $0x8] sm:$0xf]
      %v1043 = vld [vmem:[%s3 + $0xc] sm:$0xf]
      %v1044 = vld [vmem:[%s3 + $0x10] sm:$0xf]
      %v1045 = vld [vmem:[%s3 + $0x14] sm:$0xf]
      %v1046 = vld [vmem:[%s3 + $0x18] sm:$0xf]
      %v1047 = vld [vmem:[%s3 + $0x1c] sm:$0xf]
      %v1048 = vld [vmem:[%s3 + $0x20] sm:$0xf]
      %v1049 = vld [vmem:[%s3 + $0x24] sm:$0xf]
      %v1050 = vld [vmem:[%s3 + $0x28] sm:$0xf]
      %v1051 = vld [vmem:[%s3 + $0x2c] sm:$0xf]
      %v1052 = vld [vmem:[%s3 + $0x30] sm:$0xf]
      %v1053 = vld [vmem:[%s3 + $0x34] sm:$0xf]
      %v1054 = vld [vmem:[%s3 + $0x38] sm:$0xf]
      %v1055 = vld [vmem:[%s3 + $0x3c] sm:$0xf]
      %v1072 = vunpack.c.l.b16 %v1040
      %v1073 = vunpack.c.l.b16 %v1041
      %v1074 = vunpack.c.l.b16 %v1042
      %v1075 = vunpack.c.l.b16 %v1043
      %v1076 = vunpack.c.l.b16 %v1044
      %v1077 = vunpack.c.l.b16 %v1045
      %v1078 = vunpack.c.l.b16 %v1046
      %v1079 = vunpack.c.l.b16 %v1047
      %v1080 = vunpack.c.l.b16 %v1048
      %v1081 = vunpack.c.l.b16 %v1049
      %v1082 = vunpack.c.l.b16 %v1050
      %v1083 = vunpack.c.l.b16 %v1051
      %v1084 = vunpack.c.l.b16 %v1052
      %v1085 = vunpack.c.l.b16 %v1053
      %v1086 = vunpack.c.l.b16 %v1054
      %v1087 = vunpack.c.l.b16 %v1055
      %v1088 = vpack.c.b16 %v1073, %v1072
      %v1089 = vpack.c.b16 %v1075, %v1074
      %v1090 = vpack.c.b16 %v1077, %v1076
      %v1091 = vpack.c.b16 %v1079, %v1078
      %v1092 = vpack.c.b16 %v1081, %v1080
      %v1093 = vpack.c.b16 %v1083, %v1082
      %v1094 = vpack.c.b16 %v1085, %v1084
      %v1095 = vpack.c.b16 %v1087, %v1086
      %1104 = vmatprep.subr.bf16.mxu0 0
      %1105 = vmatpush1.bf16.msra.mxu0 %v1095
      %1106 = vmatprep.subr.bf16.mxu0 0
      %1107 = vmatpush1.bf16.msra.mxu0 %v1094
      %1108 = vmatprep.subr.bf16.mxu0 0
      %1109 = vmatpush1.bf16.msra.mxu0 %v1093
      %1110 = vmatprep.subr.bf16.mxu0 0
      %1111 = vmatpush1.bf16.msra.mxu0 %v1092
      %1112 = vmatprep.subr.bf16.mxu0 0
      %1113 = vmatpush1.bf16.msra.mxu0 %v1091
      %1114 = vmatprep.subr.bf16.mxu0 0
      %1115 = vmatpush1.bf16.msra.mxu0 %v1090
      %1116 = vmatprep.subr.bf16.mxu0 0
      %1117 = vmatpush1.bf16.msra.mxu0 %v1089
      %1118 = vmatprep.subr.bf16.mxu0 0
      %1119 = vmatpush1.bf16.msra.mxu0 %v1088
      %1120 = vmatprep.subr.bf16.mxu0 0
      %1121 = vmatpush2.bf16.msra.mxu0 0
      %1122 = vmatprep.subr.bf16.mxu0 0
      %1123 = vmatpush2.bf16.msra.mxu0 0
      %1124 = vmatprep.subr.bf16.mxu0 0
      %1125 = vmatpush2.bf16.msra.mxu0 0
      %1126 = vmatprep.subr.bf16.mxu0 0
      %1127 = vmatpush2.bf16.msra.mxu0 0
      %1128 = vmatprep.subr.bf16.mxu0 0
      %1129 = vmatpush2.bf16.msra.mxu0 0
      %1130 = vmatprep.subr.bf16.mxu0 0
      %1131 = vmatpush2.bf16.msra.mxu0 0
      %1132 = vmatprep.subr.bf16.mxu0 0
      %1133 = vmatpush2.bf16.msra.mxu0 0
      %1134 = vmatprep.subr.bf16.mxu0 0
      %1135 = vmatpush2.bf16.msra.mxu0 0
      %1136 = vmatprep.mubr.bf16.mxu0 0
      %1137 = vmatmul.mubr.bf16.gmra.mxu0 %v1008
      %v1138 = vpop.f32.mrf.mxu0
      %v1139 = vadd.f32 0.0, %v1138
      %v1140 = vpop.f32.mrf.mxu0
      %v1141 = vpop.f32.mrf.mxu0
      %v1142 = vadd.f32 0.0, %v1141
      %v1143 = vpop.f32.mrf.mxu0
      %1144 = vmatprep.mubr.bf16.mxu0 0
      %1145 = vmatmul.mubr.bf16.gmra.mxu0 %v1009
      %v1146 = vpop.f32.mrf.mxu0
      %v1147 = vadd.f32 0.0, %v1146
      %v1148 = vpop.f32.mrf.mxu0
      %v1149 = vpop.f32.mrf.mxu0
      %v1150 = vadd.f32 0.0, %v1149
      %v1151 = vpop.f32.mrf.mxu0
      %1152 = vmatprep.mubr.bf16.mxu0 0
      %1153 = vmatmul.mubr.bf16.gmra.mxu0 %v1010
      %v1154 = vpop.f32.mrf.mxu0
      %v1155 = vadd.f32 0.0, %v1154
      %v1156 = vpop.f32.mrf.mxu0
      %v1157 = vpop.f32.mrf.mxu0
      %v1158 = vadd.f32 0.0, %v1157
      %v1159 = vpop.f32.mrf.mxu0
      %1160 = vmatprep.mubr.bf16.mxu0 0
      %1161 = vmatmul.mubr.bf16.gmra.mxu0 %v1011
      %v1162 = vpop.f32.mrf.mxu0
      %v1163 = vadd.f32 0.0, %v1162
      %v1164 = vpop.f32.mrf.mxu0
      %v1165 = vpop.f32.mrf.mxu0
      %v1166 = vadd.f32 0.0, %v1165
      %v1167 = vpop.f32.mrf.mxu0
      %1168 = vmatprep.mubr.bf16.mxu0 0
      %1169 = vmatmul.mubr.bf16.gmra.mxu0 %v1012
      %v1170 = vpop.f32.mrf.mxu0
      %v1171 = vadd.f32 0.0, %v1170
      %v1172 = vpop.f32.mrf.mxu0
      %v1173 = vpop.f32.mrf.mxu0
      %v1174 = vadd.f32 0.0, %v1173
      %v1175 = vpop.f32.mrf.mxu0
      %1176 = vmatprep.mubr.bf16.mxu0 0
      %1177 = vmatmul.mubr.bf16.gmra.mxu0 %v1013
      %v1178 = vpop.f32.mrf.mxu0
      %v1179 = vadd.f32 0.0, %v1178
      %v1180 = vpop.f32.mrf.mxu0
      %v1181 = vpop.f32.mrf.mxu0
      %v1182 = vadd.f32 0.0, %v1181
      %v1183 = vpop.f32.mrf.mxu0
      %1184 = vmatprep.mubr.bf16.mxu0 0
      %1185 = vmatmul.mubr.bf16.gmra.mxu0 %v1014
      %v1186 = vpop.f32.mrf.mxu0
      %v1187 = vadd.f32 0.0, %v1186
      %v1188 = vpop.f32.mrf.mxu0
      %v1189 = vpop.f32.mrf.mxu0
      %v1190 = vadd.f32 0.0, %v1189
      %v1191 = vpop.f32.mrf.mxu0
      %1192 = vmatprep.mubr.bf16.mxu0 0
      %1193 = vmatmul.mubr.bf16.gmra.mxu0 %v1015
      %v1194 = vpop.f32.mrf.mxu0
      %v1195 = vadd.f32 0.0, %v1194
      %v1196 = vpop.f32.mrf.mxu0
      %v1197 = vpop.f32.mrf.mxu0
      %v1198 = vadd.f32 0.0, %v1197
      %v1199 = vpop.f32.mrf.mxu0
      %1200 = vmatprep.mubr.bf16.mxu0 0
      %1201 = vmatmul.mubr.bf16.gmra.mxu0 %v1016
      %v1202 = vpop.f32.mrf.mxu0
      %v1203 = vadd.f32 0.0, %v1202
      %v1204 = vpop.f32.mrf.mxu0
      %v1205 = vpop.f32.mrf.mxu0
      %v1206 = vadd.f32 0.0, %v1205
      %v1207 = vpop.f32.mrf.mxu0
      %1208 = vmatprep.mubr.bf16.mxu0 0
      %1209 = vmatmul.mubr.bf16.gmra.mxu0 %v1017
      %v1210 = vpop.f32.mrf.mxu0
      %v1211 = vadd.f32 0.0, %v1210
      %v1212 = vpop.f32.mrf.mxu0
      %v1213 = vpop.f32.mrf.mxu0
      %v1214 = vadd.f32 0.0, %v1213
      %v1215 = vpop.f32.mrf.mxu0
      %1216 = vmatprep.mubr.bf16.mxu0 0
      %1217 = vmatmul.mubr.bf16.gmra.mxu0 %v1018
      %v1218 = vpop.f32.mrf.mxu0
      %v1219 = vadd.f32 0.0, %v1218
      %v1220 = vpop.f32.mrf.mxu0
      %v1221 = vpop.f32.mrf.mxu0
      %v1222 = vadd.f32 0.0, %v1221
      %v1223 = vpop.f32.mrf.mxu0
      %1224 = vmatprep.mubr.bf16.mxu0 0
      %1225 = vmatmul.mubr.bf16.gmra.mxu0 %v1019
      %v1226 = vpop.f32.mrf.mxu0
      %v1227 = vadd.f32 0.0, %v1226
      %v1228 = vpop.f32.mrf.mxu0
      %v1229 = vpop.f32.mrf.mxu0
      %v1230 = vadd.f32 0.0, %v1229
      %v1231 = vpop.f32.mrf.mxu0
      %1232 = vmatprep.mubr.bf16.mxu0 0
      %1233 = vmatmul.mubr.bf16.gmra.mxu0 %v1020
      %v1234 = vpop.f32.mrf.mxu0
      %v1235 = vadd.f32 0.0, %v1234
      %v1236 = vpop.f32.mrf.mxu0
      %v1237 = vpop.f32.mrf.mxu0
      %v1238 = vadd.f32 0.0, %v1237
      %v1239 = vpop.f32.mrf.mxu0
      %1240 = vmatprep.mubr.bf16.mxu0 0
      %1241 = vmatmul.mubr.bf16.gmra.mxu0 %v1021
      %v1242 = vpop.f32.mrf.mxu0
      %v1243 = vadd.f32 0.0, %v1242
      %v1244 = vpop.f32.mrf.mxu0
      %v1245 = vpop.f32.mrf.mxu0
      %v1246 = vadd.f32 0.0, %v1245
      %v1247 = vpop.f32.mrf.mxu0
      %1248 = vmatprep.mubr.bf16.mxu0 0
      %1249 = vmatmul.mubr.bf16.gmra.mxu0 %v1022
      %v1250 = vpop.f32.mrf.mxu0
      %v1251 = vadd.f32 0.0, %v1250
      %v1252 = vpop.f32.mrf.mxu0
      %v1253 = vpop.f32.mrf.mxu0
      %v1254 = vadd.f32 0.0, %v1253
      %v1255 = vpop.f32.mrf.mxu0
      %1256 = vmatprep.mubr.bf16.mxu0 0
      %1257 = vmatmul.mubr.bf16.gmra.mxu0 %v1023
      %v1258 = vpop.f32.mrf.mxu0
      %v1259 = vadd.f32 0.0, %v1258
      %v1260 = vpop.f32.mrf.mxu0
      %v1261 = vpop.f32.mrf.mxu0
      %v1262 = vadd.f32 0.0, %v1261
      %v1263 = vpop.f32.mrf.mxu0
      %1264 = vmatprep.mubr.bf16.mxu0 0
      %1265 = vmatmul.mubr.bf16.gmra.mxu0 %v1024
      %v1266 = vpop.f32.mrf.mxu0
      %v1267 = vadd.f32 0.0, %v1266
      %v1268 = vpop.f32.mrf.mxu0
      %v1269 = vpop.f32.mrf.mxu0
      %v1270 = vadd.f32 0.0, %v1269
      %v1271 = vpop.f32.mrf.mxu0
      %1272 = vmatprep.mubr.bf16.mxu0 0
      %1273 = vmatmul.mubr.bf16.gmra.mxu0 %v1025
      %v1274 = vpop.f32.mrf.mxu0
      %v1275 = vadd.f32 0.0, %v1274
      %v1276 = vpop.f32.mrf.mxu0
      %v1277 = vpop.f32.mrf.mxu0
      %v1278 = vadd.f32 0.0, %v1277
      %v1279 = vpop.f32.mrf.mxu0
      %1280 = vmatprep.mubr.bf16.mxu0 0
      %1281 = vmatmul.mubr.bf16.gmra.mxu0 %v1026
      %v1282 = vpop.f32.mrf.mxu0
      %v1283 = vadd.f32 0.0, %v1282
      %v1284 = vpop.f32.mrf.mxu0
      %v1285 = vpop.f32.mrf.mxu0
      %v1286 = vadd.f32 0.0, %v1285
      %v1287 = vpop.f32.mrf.mxu0
      %1288 = vmatprep.mubr.bf16.mxu0 0
      %1289 = vmatmul.mubr.bf16.gmra.mxu0 %v1027
      %v1290 = vpop.f32.mrf.mxu0
      %v1291 = vadd.f32 0.0, %v1290
      %v1292 = vpop.f32.mrf.mxu0
      %v1293 = vpop.f32.mrf.mxu0
      %v1294 = vadd.f32 0.0, %v1293
      %v1295 = vpop.f32.mrf.mxu0
      %1296 = vmatprep.mubr.bf16.mxu0 0
      %1297 = vmatmul.mubr.bf16.gmra.mxu0 %v1028
      %v1298 = vpop.f32.mrf.mxu0
      %v1299 = vadd.f32 0.0, %v1298
      %v1300 = vpop.f32.mrf.mxu0
      %v1301 = vpop.f32.mrf.mxu0
      %v1302 = vadd.f32 0.0, %v1301
      %v1303 = vpop.f32.mrf.mxu0
      %1304 = vmatprep.mubr.bf16.mxu0 0
      %1305 = vmatmul.mubr.bf16.gmra.mxu0 %v1029
      %v1306 = vpop.f32.mrf.mxu0
      %v1307 = vadd.f32 0.0, %v1306
      %v1308 = vpop.f32.mrf.mxu0
      %v1309 = vpop.f32.mrf.mxu0
      %v1310 = vadd.f32 0.0, %v1309
      %v1311 = vpop.f32.mrf.mxu0
      %1312 = vmatprep.mubr.bf16.mxu0 0
      %1313 = vmatmul.mubr.bf16.gmra.mxu0 %v1030
      %v1314 = vpop.f32.mrf.mxu0
      %v1315 = vadd.f32 0.0, %v1314
      %v1316 = vpop.f32.mrf.mxu0
      %v1317 = vpop.f32.mrf.mxu0
      %v1318 = vadd.f32 0.0, %v1317
      %v1319 = vpop.f32.mrf.mxu0
      %1320 = vmatprep.mubr.bf16.mxu0 0
      %1321 = vmatmul.mubr.bf16.gmra.mxu0 %v1031
      %v1322 = vpop.f32.mrf.mxu0
      %v1323 = vadd.f32 0.0, %v1322
      %v1324 = vpop.f32.mrf.mxu0
      %v1325 = vpop.f32.mrf.mxu0
      %v1326 = vadd.f32 0.0, %v1325
      %v1327 = vpop.f32.mrf.mxu0
      %1328 = vmatprep.mubr.bf16.mxu0 0
      %1329 = vmatmul.mubr.bf16.gmra.mxu0 %v1032
      %v1330 = vpop.f32.mrf.mxu0
      %v1331 = vadd.f32 0.0, %v1330
      %v1332 = vpop.f32.mrf.mxu0
      %v1333 = vpop.f32.mrf.mxu0
      %v1334 = vadd.f32 0.0, %v1333
      %v1335 = vpop.f32.mrf.mxu0
      %1336 = vmatprep.mubr.bf16.mxu0 0
      %1337 = vmatmul.mubr.bf16.gmra.mxu0 %v1033
      %v1338 = vpop.f32.mrf.mxu0
      %v1339 = vadd.f32 0.0, %v1338
      %v1340 = vpop.f32.mrf.mxu0
      %v1341 = vpop.f32.mrf.mxu0
      %v1342 = vadd.f32 0.0, %v1341
      %v1343 = vpop.f32.mrf.mxu0
      %1344 = vmatprep.mubr.bf16.mxu0 0
      %1345 = vmatmul.mubr.bf16.gmra.mxu0 %v1034
      %v1346 = vpop.f32.mrf.mxu0
      %v1347 = vadd.f32 0.0, %v1346
      %v1348 = vpop.f32.mrf.mxu0
      %v1349 = vpop.f32.mrf.mxu0
      %v1350 = vadd.f32 0.0, %v1349
      %v1351 = vpop.f32.mrf.mxu0
      %1352 = vmatprep.mubr.bf16.mxu0 0
      %1353 = vmatmul.mubr.bf16.gmra.mxu0 %v1035
      %v1354 = vpop.f32.mrf.mxu0
      %v1355 = vadd.f32 0.0, %v1354
      %v1356 = vpop.f32.mrf.mxu0
      %v1357 = vpop.f32.mrf.mxu0
      %v1358 = vadd.f32 0.0, %v1357
      %v1359 = vpop.f32.mrf.mxu0
      %1360 = vmatprep.mubr.bf16.mxu0 0
      %1361 = vmatmul.mubr.bf16.gmra.mxu0 %v1036
      %v1362 = vpop.f32.mrf.mxu0
      %v1363 = vadd.f32 0.0, %v1362
      %v1364 = vpop.f32.mrf.mxu0
      %v1365 = vpop.f32.mrf.mxu0
      %v1366 = vadd.f32 0.0, %v1365
      %v1367 = vpop.f32.mrf.mxu0
      %1368 = vmatprep.mubr.bf16.mxu0 0
      %1369 = vmatmul.mubr.bf16.gmra.mxu0 %v1037
      %v1370 = vpop.f32.mrf.mxu0
      %v1371 = vadd.f32 0.0, %v1370
      %v1372 = vpop.f32.mrf.mxu0
      %v1373 = vpop.f32.mrf.mxu0
      %v1374 = vadd.f32 0.0, %v1373
      %v1375 = vpop.f32.mrf.mxu0
      %1376 = vmatprep.mubr.bf16.mxu0 0
      %1377 = vmatmul.mubr.bf16.gmra.mxu0 %v1038
      %v1378 = vpop.f32.mrf.mxu0
      %v1379 = vadd.f32 0.0, %v1378
      %v1380 = vpop.f32.mrf.mxu0
      %v1381 = vpop.f32.mrf.mxu0
      %v1382 = vadd.f32 0.0, %v1381
      %v1383 = vpop.f32.mrf.mxu0
      %1384 = vmatprep.mubr.bf16.mxu0 0
      %1385 = vmatmul.mubr.bf16.gmra.mxu0 %v1039
      %v1386 = vpop.f32.mrf.mxu0
      %v1387 = vadd.f32 0.0, %v1386
      %v1388 = vpop.f32.mrf.mxu0
      %v1389 = vpop.f32.mrf.mxu0
      %v1390 = vadd.f32 0.0, %v1389
      %v1391 = vpop.f32.mrf.mxu0
      %1392 = vdwg.mxu0
      %v1393 = vpack.c.bf16 %v1142, %v1139
      %v1394 = vpack.c.bf16 %v1150, %v1147
      %v1395 = vpack.c.bf16 %v1158, %v1155
      %v1396 = vpack.c.bf16 %v1166, %v1163
      %v1397 = vpack.c.bf16 %v1174, %v1171
      %v1398 = vpack.c.bf16 %v1182, %v1179
      %v1399 = vpack.c.bf16 %v1190, %v1187
      %v1400 = vpack.c.bf16 %v1198, %v1195
      %v1401 = vpack.c.bf16 %v1206, %v1203
      %v1402 = vpack.c.bf16 %v1214, %v1211
      %v1403 = vpack.c.bf16 %v1222, %v1219
      %v1404 = vpack.c.bf16 %v1230, %v1227
      %v1405 = vpack.c.bf16 %v1238, %v1235
      %v1406 = vpack.c.bf16 %v1246, %v1243
      %v1407 = vpack.c.bf16 %v1254, %v1251
      %v1408 = vpack.c.bf16 %v1262, %v1259
      %v1409 = vpack.c.bf16 %v1270, %v1267
      %v1410 = vpack.c.bf16 %v1278, %v1275
      %v1411 = vpack.c.bf16 %v1286, %v1283
      %v1412 = vpack.c.bf16 %v1294, %v1291
      %v1413 = vpack.c.bf16 %v1302, %v1299
      %v1414 = vpack.c.bf16 %v1310, %v1307
      %v1415 = vpack.c.bf16 %v1318, %v1315
      %v1416 = vpack.c.bf16 %v1326, %v1323
      %v1417 = vpack.c.bf16 %v1334, %v1331
      %v1418 = vpack.c.bf16 %v1342, %v1339
      %v1419 = vpack.c.bf16 %v1350, %v1347
      %v1420 = vpack.c.bf16 %v1358, %v1355
      %v1421 = vpack.c.bf16 %v1366, %v1363
      %v1422 = vpack.c.bf16 %v1374, %v1371
      %v1423 = vpack.c.bf16 %v1382, %v1379
      %v1424 = vpack.c.bf16 %v1390, %v1387
      %v1425 = vld [vmem:[%s529] sm:$0xf]
      %v1426 = vld [vmem:[%s529 + $0x4] sm:$0xf]
      %v1427 = vld [vmem:[%s529 + $0x8] sm:$0xf]
      %v1428 = vld [vmem:[%s529 + $0xc] sm:$0xf]
      %v1429 = vld [vmem:[%s529 + $0x10] sm:$0xf]
      %v1430 = vld [vmem:[%s529 + $0x14] sm:$0xf]
      %v1431 = vld [vmem:[%s529 + $0x18] sm:$0xf]
      %v1432 = vld [vmem:[%s529 + $0x1c] sm:$0xf]
      %v1433 = vld [vmem:[%s529 + $0x20] sm:$0xf]
      %v1434 = vld [vmem:[%s529 + $0x24] sm:$0xf]
      %v1435 = vld [vmem:[%s529 + $0x28] sm:$0xf]
      %v1436 = vld [vmem:[%s529 + $0x2c] sm:$0xf]
      %v1437 = vld [vmem:[%s529 + $0x30] sm:$0xf]
      %v1438 = vld [vmem:[%s529 + $0x34] sm:$0xf]
      %v1439 = vld [vmem:[%s529 + $0x38] sm:$0xf]
      %v1440 = vld [vmem:[%s529 + $0x3c] sm:$0xf]
      %v1441 = vld [vmem:[%s529 + $0x40] sm:$0xf]
      %v1442 = vld [vmem:[%s529 + $0x44] sm:$0xf]
      %v1443 = vld [vmem:[%s529 + $0x48] sm:$0xf]
      %v1444 = vld [vmem:[%s529 + $0x4c] sm:$0xf]
      %v1445 = vld [vmem:[%s529 + $0x50] sm:$0xf]
      %v1446 = vld [vmem:[%s529 + $0x54] sm:$0xf]
      %v1447 = vld [vmem:[%s529 + $0x58] sm:$0xf]
      %v1448 = vld [vmem:[%s529 + $0x5c] sm:$0xf]
      %v1449 = vld [vmem:[%s529 + $0x60] sm:$0xf]
      %v1450 = vld [vmem:[%s529 + $0x64] sm:$0xf]
      %v1451 = vld [vmem:[%s529 + $0x68] sm:$0xf]
      %v1452 = vld [vmem:[%s529 + $0x6c] sm:$0xf]
      %v1453 = vld [vmem:[%s529 + $0x70] sm:$0xf]
      %v1454 = vld [vmem:[%s529 + $0x74] sm:$0xf]
      %v1455 = vld [vmem:[%s529 + $0x78] sm:$0xf]
      %v1456 = vld [vmem:[%s529 + $0x7c] sm:$0xf]
      %v1457 = vld [vmem:[%s4] sm:$0xf]
      %v1458 = vld [vmem:[%s4 + $0x4] sm:$0xf]
      %v1459 = vld [vmem:[%s4 + $0x8] sm:$0xf]
      %v1460 = vld [vmem:[%s4 + $0xc] sm:$0xf]
      %v1461 = vld [vmem:[%s4 + $0x10] sm:$0xf]
      %v1462 = vld [vmem:[%s4 + $0x14] sm:$0xf]
      %v1463 = vld [vmem:[%s4 + $0x18] sm:$0xf]
      %v1464 = vld [vmem:[%s4 + $0x1c] sm:$0xf]
      %v1465 = vld [vmem:[%s4 + $0x20] sm:$0xf]
      %v1466 = vld [vmem:[%s4 + $0x24] sm:$0xf]
      %v1467 = vld [vmem:[%s4 + $0x28] sm:$0xf]
      %v1468 = vld [vmem:[%s4 + $0x2c] sm:$0xf]
      %v1469 = vld [vmem:[%s4 + $0x30] sm:$0xf]
      %v1470 = vld [vmem:[%s4 + $0x34] sm:$0xf]
      %v1471 = vld [vmem:[%s4 + $0x38] sm:$0xf]
      %v1472 = vld [vmem:[%s4 + $0x3c] sm:$0xf]
      %v1473 = vld [vmem:[%s5] sm:$0xf]
      %v1474 = vld [vmem:[%s5 + $0x4] sm:$0xf]
      %v1475 = vld [vmem:[%s5 + $0x8] sm:$0xf]
      %v1476 = vld [vmem:[%s5 + $0xc] sm:$0xf]
      %v1477 = vld [vmem:[%s5 + $0x10] sm:$0xf]
      %v1478 = vld [vmem:[%s5 + $0x14] sm:$0xf]
      %v1479 = vld [vmem:[%s5 + $0x18] sm:$0xf]
      %v1480 = vld [vmem:[%s5 + $0x1c] sm:$0xf]
      %v1481 = vld [vmem:[%s5 + $0x20] sm:$0xf]
      %v1482 = vld [vmem:[%s5 + $0x24] sm:$0xf]
      %v1483 = vld [vmem:[%s5 + $0x28] sm:$0xf]
      %v1484 = vld [vmem:[%s5 + $0x2c] sm:$0xf]
      %v1485 = vld [vmem:[%s5 + $0x30] sm:$0xf]
      %v1486 = vld [vmem:[%s5 + $0x34] sm:$0xf]
      %v1487 = vld [vmem:[%s5 + $0x38] sm:$0xf]
      %v1488 = vld [vmem:[%s5 + $0x3c] sm:$0xf]
      %v1505 = vunpack.c.l.b16 %v1473
      %v1506 = vunpack.c.l.b16 %v1474
      %v1507 = vunpack.c.l.b16 %v1475
      %v1508 = vunpack.c.l.b16 %v1476
      %v1509 = vunpack.c.l.b16 %v1477
      %v1510 = vunpack.c.l.b16 %v1478
      %v1511 = vunpack.c.l.b16 %v1479
      %v1512 = vunpack.c.l.b16 %v1480
      %v1513 = vunpack.c.l.b16 %v1481
      %v1514 = vunpack.c.l.b16 %v1482
      %v1515 = vunpack.c.l.b16 %v1483
      %v1516 = vunpack.c.l.b16 %v1484
      %v1517 = vunpack.c.l.b16 %v1485
      %v1518 = vunpack.c.l.b16 %v1486
      %v1519 = vunpack.c.l.b16 %v1487
      %v1520 = vunpack.c.l.b16 %v1488
      %v1521 = vpack.c.b16 %v1506, %v1505
      %v1522 = vpack.c.b16 %v1508, %v1507
      %v1523 = vpack.c.b16 %v1510, %v1509
      %v1524 = vpack.c.b16 %v1512, %v1511
      %v1525 = vpack.c.b16 %v1514, %v1513
      %v1526 = vpack.c.b16 %v1516, %v1515
      %v1527 = vpack.c.b16 %v1518, %v1517
      %v1528 = vpack.c.b16 %v1520, %v1519
      %1537 = vmatprep.subr.bf16.mxu0 0
      %1538 = vmatpush1.bf16.msra.mxu0 %v1528
      %1539 = vmatprep.subr.bf16.mxu0 0
      %1540 = vmatpush1.bf16.msra.mxu0 %v1527
      %1541 = vmatprep.subr.bf16.mxu0 0
      %1542 = vmatpush1.bf16.msra.mxu0 %v1526
      %1543 = vmatprep.subr.bf16.mxu0 0
      %1544 = vmatpush1.bf16.msra.mxu0 %v1525
      %1545 = vmatprep.subr.bf16.mxu0 0
      %1546 = vmatpush1.bf16.msra.mxu0 %v1524
      %1547 = vmatprep.subr.bf16.mxu0 0
      %1548 = vmatpush1.bf16.msra.mxu0 %v1523
      %1549 = vmatprep.subr.bf16.mxu0 0
      %1550 = vmatpush1.bf16.msra.mxu0 %v1522
      %1551 = vmatprep.subr.bf16.mxu0 0
      %1552 = vmatpush1.bf16.msra.mxu0 %v1521
      %1553 = vmatprep.subr.bf16.mxu0 0
      %1554 = vmatpush2.bf16.msra.mxu0 0
      %1555 = vmatprep.subr.bf16.mxu0 0
      %1556 = vmatpush2.bf16.msra.mxu0 0
      %1557 = vmatprep.subr.bf16.mxu0 0
      %1558 = vmatpush2.bf16.msra.mxu0 0
      %1559 = vmatprep.subr.bf16.mxu0 0
      %1560 = vmatpush2.bf16.msra.mxu0 0
      %1561 = vmatprep.subr.bf16.mxu0 0
      %1562 = vmatpush2.bf16.msra.mxu0 0
      %1563 = vmatprep.subr.bf16.mxu0 0
      %1564 = vmatpush2.bf16.msra.mxu0 0
      %1565 = vmatprep.subr.bf16.mxu0 0
      %1566 = vmatpush2.bf16.msra.mxu0 0
      %1567 = vmatprep.subr.bf16.mxu0 0
      %1568 = vmatpush2.bf16.msra.mxu0 0
      %1569 = vmatprep.mubr.bf16.mxu0 0
      %1570 = vmatmul.mubr.bf16.gmra.mxu0 %v1393
      %v1571 = vpop.f32.mrf.mxu0
      %v1572 = vadd.f32 0.0, %v1571
      %v1573 = vpop.f32.mrf.mxu0
      %v1574 = vpop.f32.mrf.mxu0
      %v1575 = vadd.f32 0.0, %v1574
      %v1576 = vpop.f32.mrf.mxu0
      %1577 = vmatprep.mubr.bf16.mxu0 0
      %1578 = vmatmul.mubr.bf16.gmra.mxu0 %v1394
      %v1579 = vpop.f32.mrf.mxu0
      %v1580 = vadd.f32 0.0, %v1579
      %v1581 = vpop.f32.mrf.mxu0
      %v1582 = vpop.f32.mrf.mxu0
      %v1583 = vadd.f32 0.0, %v1582
      %v1584 = vpop.f32.mrf.mxu0
      %1585 = vmatprep.mubr.bf16.mxu0 0
      %1586 = vmatmul.mubr.bf16.gmra.mxu0 %v1395
      %v1587 = vpop.f32.mrf.mxu0
      %v1588 = vadd.f32 0.0, %v1587
      %v1589 = vpop.f32.mrf.mxu0
      %v1590 = vpop.f32.mrf.mxu0
      %v1591 = vadd.f32 0.0, %v1590
      %v1592 = vpop.f32.mrf.mxu0
      %1593 = vmatprep.mubr.bf16.mxu0 0
      %1594 = vmatmul.mubr.bf16.gmra.mxu0 %v1396
      %v1595 = vpop.f32.mrf.mxu0
      %v1596 = vadd.f32 0.0, %v1595
      %v1597 = vpop.f32.mrf.mxu0
      %v1598 = vpop.f32.mrf.mxu0
      %v1599 = vadd.f32 0.0, %v1598
      %v1600 = vpop.f32.mrf.mxu0
      %1601 = vmatprep.mubr.bf16.mxu0 0
      %1602 = vmatmul.mubr.bf16.gmra.mxu0 %v1397
      %v1603 = vpop.f32.mrf.mxu0
      %v1604 = vadd.f32 0.0, %v1603
      %v1605 = vpop.f32.mrf.mxu0
      %v1606 = vpop.f32.mrf.mxu0
      %v1607 = vadd.f32 0.0, %v1606
      %v1608 = vpop.f32.mrf.mxu0
      %1609 = vmatprep.mubr.bf16.mxu0 0
      %1610 = vmatmul.mubr.bf16.gmra.mxu0 %v1398
      %v1611 = vpop.f32.mrf.mxu0
      %v1612 = vadd.f32 0.0, %v1611
      %v1613 = vpop.f32.mrf.mxu0
      %v1614 = vpop.f32.mrf.mxu0
      %v1615 = vadd.f32 0.0, %v1614
      %v1616 = vpop.f32.mrf.mxu0
      %1617 = vmatprep.mubr.bf16.mxu0 0
      %1618 = vmatmul.mubr.bf16.gmra.mxu0 %v1399
      %v1619 = vpop.f32.mrf.mxu0
      %v1620 = vadd.f32 0.0, %v1619
      %v1621 = vpop.f32.mrf.mxu0
      %v1622 = vpop.f32.mrf.mxu0
      %v1623 = vadd.f32 0.0, %v1622
      %v1624 = vpop.f32.mrf.mxu0
      %1625 = vmatprep.mubr.bf16.mxu0 0
      %1626 = vmatmul.mubr.bf16.gmra.mxu0 %v1400
      %v1627 = vpop.f32.mrf.mxu0
      %v1628 = vadd.f32 0.0, %v1627
      %v1629 = vpop.f32.mrf.mxu0
      %v1630 = vpop.f32.mrf.mxu0
      %v1631 = vadd.f32 0.0, %v1630
      %v1632 = vpop.f32.mrf.mxu0
      %1633 = vmatprep.mubr.bf16.mxu0 0
      %1634 = vmatmul.mubr.bf16.gmra.mxu0 %v1401
      %v1635 = vpop.f32.mrf.mxu0
      %v1636 = vadd.f32 0.0, %v1635
      %v1637 = vpop.f32.mrf.mxu0
      %v1638 = vpop.f32.mrf.mxu0
      %v1639 = vadd.f32 0.0, %v1638
      %v1640 = vpop.f32.mrf.mxu0
      %1641 = vmatprep.mubr.bf16.mxu0 0
      %1642 = vmatmul.mubr.bf16.gmra.mxu0 %v1402
      %v1643 = vpop.f32.mrf.mxu0
      %v1644 = vadd.f32 0.0, %v1643
      %v1645 = vpop.f32.mrf.mxu0
      %v1646 = vpop.f32.mrf.mxu0
      %v1647 = vadd.f32 0.0, %v1646
      %v1648 = vpop.f32.mrf.mxu0
      %1649 = vmatprep.mubr.bf16.mxu0 0
      %1650 = vmatmul.mubr.bf16.gmra.mxu0 %v1403
      %v1651 = vpop.f32.mrf.mxu0
      %v1652 = vadd.f32 0.0, %v1651
      %v1653 = vpop.f32.mrf.mxu0
      %v1654 = vpop.f32.mrf.mxu0
      %v1655 = vadd.f32 0.0, %v1654
      %v1656 = vpop.f32.mrf.mxu0
      %1657 = vmatprep.mubr.bf16.mxu0 0
      %1658 = vmatmul.mubr.bf16.gmra.mxu0 %v1404
      %v1659 = vpop.f32.mrf.mxu0
      %v1660 = vadd.f32 0.0, %v1659
      %v1661 = vpop.f32.mrf.mxu0
      %v1662 = vpop.f32.mrf.mxu0
      %v1663 = vadd.f32 0.0, %v1662
      %v1664 = vpop.f32.mrf.mxu0
      %1665 = vmatprep.mubr.bf16.mxu0 0
      %1666 = vmatmul.mubr.bf16.gmra.mxu0 %v1405
      %v1667 = vpop.f32.mrf.mxu0
      %v1668 = vadd.f32 0.0, %v1667
      %v1669 = vpop.f32.mrf.mxu0
      %v1670 = vpop.f32.mrf.mxu0
      %v1671 = vadd.f32 0.0, %v1670
      %v1672 = vpop.f32.mrf.mxu0
      %1673 = vmatprep.mubr.bf16.mxu0 0
      %1674 = vmatmul.mubr.bf16.gmra.mxu0 %v1406
      %v1675 = vpop.f32.mrf.mxu0
      %v1676 = vadd.f32 0.0, %v1675
      %v1677 = vpop.f32.mrf.mxu0
      %v1678 = vpop.f32.mrf.mxu0
      %v1679 = vadd.f32 0.0, %v1678
      %v1680 = vpop.f32.mrf.mxu0
      %1681 = vmatprep.mubr.bf16.mxu0 0
      %1682 = vmatmul.mubr.bf16.gmra.mxu0 %v1407
      %v1683 = vpop.f32.mrf.mxu0
      %v1684 = vadd.f32 0.0, %v1683
      %v1685 = vpop.f32.mrf.mxu0
      %v1686 = vpop.f32.mrf.mxu0
      %v1687 = vadd.f32 0.0, %v1686
      %v1688 = vpop.f32.mrf.mxu0
      %1689 = vmatprep.mubr.bf16.mxu0 0
      %1690 = vmatmul.mubr.bf16.gmra.mxu0 %v1408
      %v1691 = vpop.f32.mrf.mxu0
      %v1692 = vadd.f32 0.0, %v1691
      %v1693 = vpop.f32.mrf.mxu0
      %v1694 = vpop.f32.mrf.mxu0
      %v1695 = vadd.f32 0.0, %v1694
      %v1696 = vpop.f32.mrf.mxu0
      %1697 = vdwg.mxu0
      %v1730 = vunpack.c.l.b16 %v1425
      %v1731 = vunpack.c.l.b16 %v1426
      %v1732 = vunpack.c.l.b16 %v1427
      %v1733 = vunpack.c.l.b16 %v1428
      %v1734 = vunpack.c.l.b16 %v1429
      %v1735 = vunpack.c.l.b16 %v1430
      %v1736 = vunpack.c.l.b16 %v1431
      %v1737 = vunpack.c.l.b16 %v1432
      %v1738 = vunpack.c.l.b16 %v1433
      %v1739 = vunpack.c.l.b16 %v1434
      %v1740 = vunpack.c.l.b16 %v1435
      %v1741 = vunpack.c.l.b16 %v1436
      %v1742 = vunpack.c.l.b16 %v1437
      %v1743 = vunpack.c.l.b16 %v1438
      %v1744 = vunpack.c.l.b16 %v1439
      %v1745 = vunpack.c.l.b16 %v1440
      %v1746 = vunpack.c.l.b16 %v1441
      %v1747 = vunpack.c.l.b16 %v1442
      %v1748 = vunpack.c.l.b16 %v1443
      %v1749 = vunpack.c.l.b16 %v1444
      %v1750 = vunpack.c.l.b16 %v1445
      %v1751 = vunpack.c.l.b16 %v1446
      %v1752 = vunpack.c.l.b16 %v1447
      %v1753 = vunpack.c.l.b16 %v1448
      %v1754 = vunpack.c.l.b16 %v1449
      %v1755 = vunpack.c.l.b16 %v1450
      %v1756 = vunpack.c.l.b16 %v1451
      %v1757 = vunpack.c.l.b16 %v1452
      %v1758 = vunpack.c.l.b16 %v1453
      %v1759 = vunpack.c.l.b16 %v1454
      %v1760 = vunpack.c.l.b16 %v1455
      %v1761 = vunpack.c.l.b16 %v1456
      %v1762 = vpack.c.b16 %v1731, %v1730
      %v1763 = vpack.c.b16 %v1733, %v1732
      %v1764 = vpack.c.b16 %v1735, %v1734
      %v1765 = vpack.c.b16 %v1737, %v1736
      %v1766 = vpack.c.b16 %v1739, %v1738
      %v1767 = vpack.c.b16 %v1741, %v1740
      %v1768 = vpack.c.b16 %v1743, %v1742
      %v1769 = vpack.c.b16 %v1745, %v1744
      %v1770 = vpack.c.b16 %v1747, %v1746
      %v1771 = vpack.c.b16 %v1749, %v1748
      %v1772 = vpack.c.b16 %v1751, %v1750
      %v1773 = vpack.c.b16 %v1753, %v1752
      %v1774 = vpack.c.b16 %v1755, %v1754
      %v1775 = vpack.c.b16 %v1757, %v1756
      %v1776 = vpack.c.b16 %v1759, %v1758
      %v1777 = vpack.c.b16 %v1761, %v1760
      %v1810 = vunpack.c.l.b16 %v1457
      %v1811 = vunpack.c.l.b16 %v1458
      %v1812 = vunpack.c.l.b16 %v1459
      %v1813 = vunpack.c.l.b16 %v1460
      %v1814 = vunpack.c.l.b16 %v1461
      %v1815 = vunpack.c.l.b16 %v1462
      %v1816 = vunpack.c.l.b16 %v1463
      %v1817 = vunpack.c.l.b16 %v1464
      %v1818 = vunpack.c.l.b16 %v1465
      %v1819 = vunpack.c.l.b16 %v1466
      %v1820 = vunpack.c.l.b16 %v1467
      %v1821 = vunpack.c.l.b16 %v1468
      %v1822 = vunpack.c.l.b16 %v1469
      %v1823 = vunpack.c.l.b16 %v1470
      %v1824 = vunpack.c.l.b16 %v1471
      %v1825 = vunpack.c.l.b16 %v1472
      %v1826 = vpack.c.b16 %v1811, %v1810
      %v1827 = vpack.c.b16 %v1813, %v1812
      %v1828 = vpack.c.b16 %v1815, %v1814
      %v1829 = vpack.c.b16 %v1817, %v1816
      %v1830 = vpack.c.b16 %v1819, %v1818
      %v1831 = vpack.c.b16 %v1821, %v1820
      %v1832 = vpack.c.b16 %v1823, %v1822
      %v1833 = vpack.c.b16 %v1825, %v1824
      %1842 = vmatprep.subr.bf16.mxu0 0
      %1843 = vmatpush1.bf16.msra.mxu0 %v1833
      %1844 = vmatprep.subr.bf16.mxu0 0
      %1845 = vmatpush1.bf16.msra.mxu0 %v1832
      %1846 = vmatprep.subr.bf16.mxu0 0
      %1847 = vmatpush1.bf16.msra.mxu0 %v1831
      %1848 = vmatprep.subr.bf16.mxu0 0
      %1849 = vmatpush1.bf16.msra.mxu0 %v1830
      %1850 = vmatprep.subr.bf16.mxu0 0
      %1851 = vmatpush1.bf16.msra.mxu0 %v1829
      %1852 = vmatprep.subr.bf16.mxu0 0
      %1853 = vmatpush1.bf16.msra.mxu0 %v1828
      %1854 = vmatprep.subr.bf16.mxu0 0
      %1855 = vmatpush1.bf16.msra.mxu0 %v1827
      %1856 = vmatprep.subr.bf16.mxu0 0
      %1857 = vmatpush1.bf16.msra.mxu0 %v1826
      %1858 = vmatprep.subr.bf16.mxu0 0
      %1859 = vmatpush2.bf16.msra.mxu0 0
      %1860 = vmatprep.subr.bf16.mxu0 0
      %1861 = vmatpush2.bf16.msra.mxu0 0
      %1862 = vmatprep.subr.bf16.mxu0 0
      %1863 = vmatpush2.bf16.msra.mxu0 0
      %1864 = vmatprep.subr.bf16.mxu0 0
      %1865 = vmatpush2.bf16.msra.mxu0 0
      %1866 = vmatprep.subr.bf16.mxu0 0
      %1867 = vmatpush2.bf16.msra.mxu0 0
      %1868 = vmatprep.subr.bf16.mxu0 0
      %1869 = vmatpush2.bf16.msra.mxu0 0
      %1870 = vmatprep.subr.bf16.mxu0 0
      %1871 = vmatpush2.bf16.msra.mxu0 0
      %1872 = vmatprep.subr.bf16.mxu0 0
      %1873 = vmatpush2.bf16.msra.mxu0 0
      %1874 = vmatprep.mubr.bf16.mxu0 0
      %1875 = vmatmul.mubr.bf16.gmra.mxu0 %v1762
      %v1876 = vpop.f32.mrf.mxu0
      %v1877 = vadd.f32 %v1572, %v1876
      %v1878 = vpop.f32.mrf.mxu0
      %v1879 = vpop.f32.mrf.mxu0
      %v1880 = vadd.f32 %v1575, %v1879
      %v1881 = vpop.f32.mrf.mxu0
      %1882 = vmatprep.mubr.bf16.mxu0 0
      %1883 = vmatmul.mubr.bf16.gmra.mxu0 %v1763
      %v1884 = vpop.f32.mrf.mxu0
      %v1885 = vadd.f32 %v1580, %v1884
      %v1886 = vpop.f32.mrf.mxu0
      %v1887 = vpop.f32.mrf.mxu0
      %v1888 = vadd.f32 %v1583, %v1887
      %v1889 = vpop.f32.mrf.mxu0
      %1890 = vmatprep.mubr.bf16.mxu0 0
      %1891 = vmatmul.mubr.bf16.gmra.mxu0 %v1764
      %v1892 = vpop.f32.mrf.mxu0
      %v1893 = vadd.f32 %v1588, %v1892
      %v1894 = vpop.f32.mrf.mxu0
      %v1895 = vpop.f32.mrf.mxu0
      %v1896 = vadd.f32 %v1591, %v1895
      %v1897 = vpop.f32.mrf.mxu0
      %1898 = vmatprep.mubr.bf16.mxu0 0
      %1899 = vmatmul.mubr.bf16.gmra.mxu0 %v1765
      %v1900 = vpop.f32.mrf.mxu0
      %v1901 = vadd.f32 %v1596, %v1900
      %v1902 = vpop.f32.mrf.mxu0
      %v1903 = vpop.f32.mrf.mxu0
      %v1904 = vadd.f32 %v1599, %v1903
      %v1905 = vpop.f32.mrf.mxu0
      %1906 = vmatprep.mubr.bf16.mxu0 0
      %1907 = vmatmul.mubr.bf16.gmra.mxu0 %v1766
      %v1908 = vpop.f32.mrf.mxu0
      %v1909 = vadd.f32 %v1604, %v1908
      %v1910 = vpop.f32.mrf.mxu0
      %v1911 = vpop.f32.mrf.mxu0
      %v1912 = vadd.f32 %v1607, %v1911
      %v1913 = vpop.f32.mrf.mxu0
      %1914 = vmatprep.mubr.bf16.mxu0 0
      %1915 = vmatmul.mubr.bf16.gmra.mxu0 %v1767
      %v1916 = vpop.f32.mrf.mxu0
      %v1917 = vadd.f32 %v1612, %v1916
      %v1918 = vpop.f32.mrf.mxu0
      %v1919 = vpop.f32.mrf.mxu0
      %v1920 = vadd.f32 %v1615, %v1919
      %v1921 = vpop.f32.mrf.mxu0
      %1922 = vmatprep.mubr.bf16.mxu0 0
      %1923 = vmatmul.mubr.bf16.gmra.mxu0 %v1768
      %v1924 = vpop.f32.mrf.mxu0
      %v1925 = vadd.f32 %v1620, %v1924
      %v1926 = vpop.f32.mrf.mxu0
      %v1927 = vpop.f32.mrf.mxu0
      %v1928 = vadd.f32 %v1623, %v1927
      %v1929 = vpop.f32.mrf.mxu0
      %1930 = vmatprep.mubr.bf16.mxu0 0
      %1931 = vmatmul.mubr.bf16.gmra.mxu0 %v1769
      %v1932 = vpop.f32.mrf.mxu0
      %v1933 = vadd.f32 %v1628, %v1932
      %v1934 = vpop.f32.mrf.mxu0
      %v1935 = vpop.f32.mrf.mxu0
      %v1936 = vadd.f32 %v1631, %v1935
      %v1937 = vpop.f32.mrf.mxu0
      %1938 = vmatprep.mubr.bf16.mxu0 0
      %1939 = vmatmul.mubr.bf16.gmra.mxu0 %v1770
      %v1940 = vpop.f32.mrf.mxu0
      %v1941 = vadd.f32 %v1636, %v1940
      %v1942 = vpop.f32.mrf.mxu0
      %v1943 = vpop.f32.mrf.mxu0
      %v1944 = vadd.f32 %v1639, %v1943
      %v1945 = vpop.f32.mrf.mxu0
      %1946 = vmatprep.mubr.bf16.mxu0 0
      %1947 = vmatmul.mubr.bf16.gmra.mxu0 %v1771
      %v1948 = vpop.f32.mrf.mxu0
      %v1949 = vadd.f32 %v1644, %v1948
      %v1950 = vpop.f32.mrf.mxu0
      %v1951 = vpop.f32.mrf.mxu0
      %v1952 = vadd.f32 %v1647, %v1951
      %v1953 = vpop.f32.mrf.mxu0
      %1954 = vmatprep.mubr.bf16.mxu0 0
      %1955 = vmatmul.mubr.bf16.gmra.mxu0 %v1772
      %v1956 = vpop.f32.mrf.mxu0
      %v1957 = vadd.f32 %v1652, %v1956
      %v1958 = vpop.f32.mrf.mxu0
      %v1959 = vpop.f32.mrf.mxu0
      %v1960 = vadd.f32 %v1655, %v1959
      %v1961 = vpop.f32.mrf.mxu0
      %1962 = vmatprep.mubr.bf16.mxu0 0
      %1963 = vmatmul.mubr.bf16.gmra.mxu0 %v1773
      %v1964 = vpop.f32.mrf.mxu0
      %v1965 = vadd.f32 %v1660, %v1964
      %v1966 = vpop.f32.mrf.mxu0
      %v1967 = vpop.f32.mrf.mxu0
      %v1968 = vadd.f32 %v1663, %v1967
      %v1969 = vpop.f32.mrf.mxu0
      %1970 = vmatprep.mubr.bf16.mxu0 0
      %1971 = vmatmul.mubr.bf16.gmra.mxu0 %v1774
      %v1972 = vpop.f32.mrf.mxu0
      %v1973 = vadd.f32 %v1668, %v1972
      %v1974 = vpop.f32.mrf.mxu0
      %v1975 = vpop.f32.mrf.mxu0
      %v1976 = vadd.f32 %v1671, %v1975
      %v1977 = vpop.f32.mrf.mxu0
      %1978 = vmatprep.mubr.bf16.mxu0 0
      %1979 = vmatmul.mubr.bf16.gmra.mxu0 %v1775
      %v1980 = vpop.f32.mrf.mxu0
      %v1981 = vadd.f32 %v1676, %v1980
      %v1982 = vpop.f32.mrf.mxu0
      %v1983 = vpop.f32.mrf.mxu0
      %v1984 = vadd.f32 %v1679, %v1983
      %v1985 = vpop.f32.mrf.mxu0
      %1986 = vmatprep.mubr.bf16.mxu0 0
      %1987 = vmatmul.mubr.bf16.gmra.mxu0 %v1776
      %v1988 = vpop.f32.mrf.mxu0
      %v1989 = vadd.f32 %v1684, %v1988
      %v1990 = vpop.f32.mrf.mxu0
      %v1991 = vpop.f32.mrf.mxu0
      %v1992 = vadd.f32 %v1687, %v1991
      %v1993 = vpop.f32.mrf.mxu0
      %1994 = vmatprep.mubr.bf16.mxu0 0
      %1995 = vmatmul.mubr.bf16.gmra.mxu0 %v1777
      %v1996 = vpop.f32.mrf.mxu0
      %v1997 = vadd.f32 %v1692, %v1996
      %v1998 = vpop.f32.mrf.mxu0
      %v1999 = vpop.f32.mrf.mxu0
      %v2000 = vadd.f32 %v1695, %v1999
      %v2001 = vpop.f32.mrf.mxu0
      %2002 = vdwg.mxu0
      %v2003 = vld [vmem:[%s6] sm:$0xf]
      %v2004 = vld [vmem:[%s6 + $0x4] sm:$0xf]
      %v2005 = vld [vmem:[%s6 + $0x8] sm:$0xf]
      %v2006 = vld [vmem:[%s6 + $0xc] sm:$0xf]
      %v2007 = vld [vmem:[%s6 + $0x10] sm:$0xf]
      %v2008 = vld [vmem:[%s6 + $0x14] sm:$0xf]
      %v2009 = vld [vmem:[%s6 + $0x18] sm:$0xf]
      %v2010 = vld [vmem:[%s6 + $0x1c] sm:$0xf]
      %v2011 = vld [vmem:[%s6 + $0x20] sm:$0xf]
      %v2012 = vld [vmem:[%s6 + $0x24] sm:$0xf]
      %v2013 = vld [vmem:[%s6 + $0x28] sm:$0xf]
      %v2014 = vld [vmem:[%s6 + $0x2c] sm:$0xf]
      %v2015 = vld [vmem:[%s6 + $0x30] sm:$0xf]
      %v2016 = vld [vmem:[%s6 + $0x34] sm:$0xf]
      %v2017 = vld [vmem:[%s6 + $0x38] sm:$0xf]
      %v2018 = vld [vmem:[%s6 + $0x3c] sm:$0xf]
      %v2035 = vunpack.c.l.b16 %v2003
      %v2036 = vunpack.c.l.b16 %v2004
      %v2037 = vunpack.c.l.b16 %v2005
      %v2038 = vunpack.c.l.b16 %v2006
      %v2039 = vunpack.c.l.b16 %v2007
      %v2040 = vunpack.c.l.b16 %v2008
      %v2041 = vunpack.c.l.b16 %v2009
      %v2042 = vunpack.c.l.b16 %v2010
      %v2043 = vunpack.c.l.b16 %v2011
      %v2044 = vunpack.c.l.b16 %v2012
      %v2045 = vunpack.c.l.b16 %v2013
      %v2046 = vunpack.c.l.b16 %v2014
      %v2047 = vunpack.c.l.b16 %v2015
      %v2048 = vunpack.c.l.b16 %v2016
      %v2049 = vunpack.c.l.b16 %v2017
      %v2050 = vunpack.c.l.b16 %v2018
      %v2051 = vpack.c.b16 %v2036, %v2035
      %v2052 = vpack.c.b16 %v2038, %v2037
      %v2053 = vpack.c.b16 %v2040, %v2039
      %v2054 = vpack.c.b16 %v2042, %v2041
      %v2055 = vpack.c.b16 %v2044, %v2043
      %v2056 = vpack.c.b16 %v2046, %v2045
      %v2057 = vpack.c.b16 %v2048, %v2047
      %v2058 = vpack.c.b16 %v2050, %v2049
      %2067 = vmatprep.subr.bf16.mxu0 0
      %2068 = vmatpush1.bf16.msra.mxu0 %v2058
      %2069 = vmatprep.subr.bf16.mxu0 0
      %2070 = vmatpush1.bf16.msra.mxu0 %v2057
      %2071 = vmatprep.subr.bf16.mxu0 0
      %2072 = vmatpush1.bf16.msra.mxu0 %v2056
      %2073 = vmatprep.subr.bf16.mxu0 0
      %2074 = vmatpush1.bf16.msra.mxu0 %v2055
      %2075 = vmatprep.subr.bf16.mxu0 0
      %2076 = vmatpush1.bf16.msra.mxu0 %v2054
      %2077 = vmatprep.subr.bf16.mxu0 0
      %2078 = vmatpush1.bf16.msra.mxu0 %v2053
      %2079 = vmatprep.subr.bf16.mxu0 0
      %2080 = vmatpush1.bf16.msra.mxu0 %v2052
      %2081 = vmatprep.subr.bf16.mxu0 0
      %2082 = vmatpush1.bf16.msra.mxu0 %v2051
      %2083 = vmatprep.subr.bf16.mxu0 0
      %2084 = vmatpush2.bf16.msra.mxu0 0
      %2085 = vmatprep.subr.bf16.mxu0 0
      %2086 = vmatpush2.bf16.msra.mxu0 0
      %2087 = vmatprep.subr.bf16.mxu0 0
      %2088 = vmatpush2.bf16.msra.mxu0 0
      %2089 = vmatprep.subr.bf16.mxu0 0
      %2090 = vmatpush2.bf16.msra.mxu0 0
      %2091 = vmatprep.subr.bf16.mxu0 0
      %2092 = vmatpush2.bf16.msra.mxu0 0
      %2093 = vmatprep.subr.bf16.mxu0 0
      %2094 = vmatpush2.bf16.msra.mxu0 0
      %2095 = vmatprep.subr.bf16.mxu0 0
      %2096 = vmatpush2.bf16.msra.mxu0 0
      %2097 = vmatprep.subr.bf16.mxu0 0
      %2098 = vmatpush2.bf16.msra.mxu0 0
      %2099 = vmatprep.mubr.bf16.mxu0 0
      %2100 = vmatmul.mubr.bf16.gmra.mxu0 %v1409
      %v2101 = vpop.f32.mrf.mxu0
      %v2102 = vadd.f32 0.0, %v2101
      %v2103 = vpop.f32.mrf.mxu0
      %v2104 = vpop.f32.mrf.mxu0
      %v2105 = vadd.f32 0.0, %v2104
      %v2106 = vpop.f32.mrf.mxu0
      %2107 = vmatprep.mubr.bf16.mxu0 0
      %2108 = vmatmul.mubr.bf16.gmra.mxu0 %v1410
      %v2109 = vpop.f32.mrf.mxu0
      %v2110 = vadd.f32 0.0, %v2109
      %v2111 = vpop.f32.mrf.mxu0
      %v2112 = vpop.f32.mrf.mxu0
      %v2113 = vadd.f32 0.0, %v2112
      %v2114 = vpop.f32.mrf.mxu0
      %2115 = vmatprep.mubr.bf16.mxu0 0
      %2116 = vmatmul.mubr.bf16.gmra.mxu0 %v1411
      %v2117 = vpop.f32.mrf.mxu0
      %v2118 = vadd.f32 0.0, %v2117
      %v2119 = vpop.f32.mrf.mxu0
      %v2120 = vpop.f32.mrf.mxu0
      %v2121 = vadd.f32 0.0, %v2120
      %v2122 = vpop.f32.mrf.mxu0
      %2123 = vmatprep.mubr.bf16.mxu0 0
      %2124 = vmatmul.mubr.bf16.gmra.mxu0 %v1412
      %v2125 = vpop.f32.mrf.mxu0
      %v2126 = vadd.f32 0.0, %v2125
      %v2127 = vpop.f32.mrf.mxu0
      %v2128 = vpop.f32.mrf.mxu0
      %v2129 = vadd.f32 0.0, %v2128
      %v2130 = vpop.f32.mrf.mxu0
      %2131 = vmatprep.mubr.bf16.mxu0 0
      %2132 = vmatmul.mubr.bf16.gmra.mxu0 %v1413
      %v2133 = vpop.f32.mrf.mxu0
      %v2134 = vadd.f32 0.0, %v2133
      %v2135 = vpop.f32.mrf.mxu0
      %v2136 = vpop.f32.mrf.mxu0
      %v2137 = vadd.f32 0.0, %v2136
      %v2138 = vpop.f32.mrf.mxu0
      %2139 = vmatprep.mubr.bf16.mxu0 0
      %2140 = vmatmul.mubr.bf16.gmra.mxu0 %v1414
      %v2141 = vpop.f32.mrf.mxu0
      %v2142 = vadd.f32 0.0, %v2141
      %v2143 = vpop.f32.mrf.mxu0
      %v2144 = vpop.f32.mrf.mxu0
      %v2145 = vadd.f32 0.0, %v2144
      %v2146 = vpop.f32.mrf.mxu0
      %2147 = vmatprep.mubr.bf16.mxu0 0
      %2148 = vmatmul.mubr.bf16.gmra.mxu0 %v1415
      %v2149 = vpop.f32.mrf.mxu0
      %v2150 = vadd.f32 0.0, %v2149
      %v2151 = vpop.f32.mrf.mxu0
      %v2152 = vpop.f32.mrf.mxu0
      %v2153 = vadd.f32 0.0, %v2152
      %v2154 = vpop.f32.mrf.mxu0
      %2155 = vmatprep.mubr.bf16.mxu0 0
      %2156 = vmatmul.mubr.bf16.gmra.mxu0 %v1416
      %v2157 = vpop.f32.mrf.mxu0
      %v2158 = vadd.f32 0.0, %v2157
      %v2159 = vpop.f32.mrf.mxu0
      %v2160 = vpop.f32.mrf.mxu0
      %v2161 = vadd.f32 0.0, %v2160
      %v2162 = vpop.f32.mrf.mxu0
      %2163 = vmatprep.mubr.bf16.mxu0 0
      %2164 = vmatmul.mubr.bf16.gmra.mxu0 %v1417
      %v2165 = vpop.f32.mrf.mxu0
      %v2166 = vadd.f32 0.0, %v2165
      %v2167 = vpop.f32.mrf.mxu0
      %v2168 = vpop.f32.mrf.mxu0
      %v2169 = vadd.f32 0.0, %v2168
      %v2170 = vpop.f32.mrf.mxu0
      %2171 = vmatprep.mubr.bf16.mxu0 0
      %2172 = vmatmul.mubr.bf16.gmra.mxu0 %v1418
      %v2173 = vpop.f32.mrf.mxu0
      %v2174 = vadd.f32 0.0, %v2173
      %v2175 = vpop.f32.mrf.mxu0
      %v2176 = vpop.f32.mrf.mxu0
      %v2177 = vadd.f32 0.0, %v2176
      %v2178 = vpop.f32.mrf.mxu0
      %2179 = vmatprep.mubr.bf16.mxu0 0
      %2180 = vmatmul.mubr.bf16.gmra.mxu0 %v1419
      %v2181 = vpop.f32.mrf.mxu0
      %v2182 = vadd.f32 0.0, %v2181
      %v2183 = vpop.f32.mrf.mxu0
      %v2184 = vpop.f32.mrf.mxu0
      %v2185 = vadd.f32 0.0, %v2184
      %v2186 = vpop.f32.mrf.mxu0
      %2187 = vmatprep.mubr.bf16.mxu0 0
      %2188 = vmatmul.mubr.bf16.gmra.mxu0 %v1420
      %v2189 = vpop.f32.mrf.mxu0
      %v2190 = vadd.f32 0.0, %v2189
      %v2191 = vpop.f32.mrf.mxu0
      %v2192 = vpop.f32.mrf.mxu0
      %v2193 = vadd.f32 0.0, %v2192
      %v2194 = vpop.f32.mrf.mxu0
      %2195 = vmatprep.mubr.bf16.mxu0 0
      %2196 = vmatmul.mubr.bf16.gmra.mxu0 %v1421
      %v2197 = vpop.f32.mrf.mxu0
      %v2198 = vadd.f32 0.0, %v2197
      %v2199 = vpop.f32.mrf.mxu0
      %v2200 = vpop.f32.mrf.mxu0
      %v2201 = vadd.f32 0.0, %v2200
      %v2202 = vpop.f32.mrf.mxu0
      %2203 = vmatprep.mubr.bf16.mxu0 0
      %2204 = vmatmul.mubr.bf16.gmra.mxu0 %v1422
      %v2205 = vpop.f32.mrf.mxu0
      %v2206 = vadd.f32 0.0, %v2205
      %v2207 = vpop.f32.mrf.mxu0
      %v2208 = vpop.f32.mrf.mxu0
      %v2209 = vadd.f32 0.0, %v2208
      %v2210 = vpop.f32.mrf.mxu0
      %2211 = vmatprep.mubr.bf16.mxu0 0
      %2212 = vmatmul.mubr.bf16.gmra.mxu0 %v1423
      %v2213 = vpop.f32.mrf.mxu0
      %v2214 = vadd.f32 0.0, %v2213
      %v2215 = vpop.f32.mrf.mxu0
      %v2216 = vpop.f32.mrf.mxu0
      %v2217 = vadd.f32 0.0, %v2216
      %v2218 = vpop.f32.mrf.mxu0
      %2219 = vmatprep.mubr.bf16.mxu0 0
      %2220 = vmatmul.mubr.bf16.gmra.mxu0 %v1424
      %v2221 = vpop.f32.mrf.mxu0
      %v2222 = vadd.f32 0.0, %v2221
      %v2223 = vpop.f32.mrf.mxu0
      %v2224 = vpop.f32.mrf.mxu0
      %v2225 = vadd.f32 0.0, %v2224
      %v2226 = vpop.f32.mrf.mxu0
      %2227 = vdwg.mxu0
      %v2228 = vadd.f32 %v1877, %v2102
      %v2229 = vadd.f32 %v1880, %v2105
      %v2230 = vadd.f32 %v1885, %v2110
      %v2231 = vadd.f32 %v1888, %v2113
      %v2232 = vadd.f32 %v1893, %v2118
      %v2233 = vadd.f32 %v1896, %v2121
      %v2234 = vadd.f32 %v1901, %v2126
      %v2235 = vadd.f32 %v1904, %v2129
      %v2236 = vadd.f32 %v1909, %v2134
      %v2237 = vadd.f32 %v1912, %v2137
      %v2238 = vadd.f32 %v1917, %v2142
      %v2239 = vadd.f32 %v1920, %v2145
      %v2240 = vadd.f32 %v1925, %v2150
      %v2241 = vadd.f32 %v1928, %v2153
      %v2242 = vadd.f32 %v1933, %v2158
      %v2243 = vadd.f32 %v1936, %v2161
      %v2244 = vadd.f32 %v1941, %v2166
      %v2245 = vadd.f32 %v1944, %v2169
      %v2246 = vadd.f32 %v1949, %v2174
      %v2247 = vadd.f32 %v1952, %v2177
      %v2248 = vadd.f32 %v1957, %v2182
      %v2249 = vadd.f32 %v1960, %v2185
      %v2250 = vadd.f32 %v1965, %v2190
      %v2251 = vadd.f32 %v1968, %v2193
      %v2252 = vadd.f32 %v1973, %v2198
      %v2253 = vadd.f32 %v1976, %v2201
      %v2254 = vadd.f32 %v1981, %v2206
      %v2255 = vadd.f32 %v1984, %v2209
      %v2256 = vadd.f32 %v1989, %v2214
      %v2257 = vadd.f32 %v1992, %v2217
      %v2258 = vadd.f32 %v1997, %v2222
      %v2259 = vadd.f32 %v2000, %v2225
      %v2260 = vld [vmem:[%s7] sm:$0x1]
      %v2262 = vlaneseq
      %v2263 = vshrl.u32 %v2262, 7
      %v2264 = vsub.s32 0, %v2263
      %v2265 = vrot.slane %v2260, %v2264
      %v2267 = vadd.f32 %v2228, %v2265
      %v2268 = vadd.f32 %v2229, %v2265
      %v2269 = vadd.f32 %v2230, %v2265
      %v2270 = vadd.f32 %v2231, %v2265
      %v2271 = vadd.f32 %v2232, %v2265
      %v2272 = vadd.f32 %v2233, %v2265
      %v2273 = vadd.f32 %v2234, %v2265
      %v2274 = vadd.f32 %v2235, %v2265
      %v2275 = vadd.f32 %v2236, %v2265
      %v2276 = vadd.f32 %v2237, %v2265
      %v2277 = vadd.f32 %v2238, %v2265
      %v2278 = vadd.f32 %v2239, %v2265
      %v2279 = vadd.f32 %v2240, %v2265
      %v2280 = vadd.f32 %v2241, %v2265
      %v2281 = vadd.f32 %v2242, %v2265
      %v2282 = vadd.f32 %v2243, %v2265
      %v2283 = vadd.f32 %v2244, %v2265
      %v2284 = vadd.f32 %v2245, %v2265
      %v2285 = vadd.f32 %v2246, %v2265
      %v2286 = vadd.f32 %v2247, %v2265
      %v2287 = vadd.f32 %v2248, %v2265
      %v2288 = vadd.f32 %v2249, %v2265
      %v2289 = vadd.f32 %v2250, %v2265
      %v2290 = vadd.f32 %v2251, %v2265
      %v2291 = vadd.f32 %v2252, %v2265
      %v2292 = vadd.f32 %v2253, %v2265
      %v2293 = vadd.f32 %v2254, %v2265
      %v2294 = vadd.f32 %v2255, %v2265
      %v2295 = vadd.f32 %v2256, %v2265
      %v2296 = vadd.f32 %v2257, %v2265
      %v2297 = vadd.f32 %v2258, %v2265
      %v2298 = vadd.f32 %v2259, %v2265
      %v2299 = vxor.u32 %v2267, 2147483648
      %v2300 = vxor.u32 %v2268, 2147483648
      %v2301 = vxor.u32 %v2269, 2147483648
      %v2302 = vxor.u32 %v2270, 2147483648
      %v2303 = vxor.u32 %v2271, 2147483648
      %v2304 = vxor.u32 %v2272, 2147483648
      %v2305 = vxor.u32 %v2273, 2147483648
      %v2306 = vxor.u32 %v2274, 2147483648
      %v2307 = vxor.u32 %v2275, 2147483648
      %v2308 = vxor.u32 %v2276, 2147483648
      %v2309 = vxor.u32 %v2277, 2147483648
      %v2310 = vxor.u32 %v2278, 2147483648
      %v2311 = vxor.u32 %v2279, 2147483648
      %v2312 = vxor.u32 %v2280, 2147483648
      %v2313 = vxor.u32 %v2281, 2147483648
      %v2314 = vxor.u32 %v2282, 2147483648
      %v2315 = vxor.u32 %v2283, 2147483648
      %v2316 = vxor.u32 %v2284, 2147483648
      %v2317 = vxor.u32 %v2285, 2147483648
      %v2318 = vxor.u32 %v2286, 2147483648
      %v2319 = vxor.u32 %v2287, 2147483648
      %v2320 = vxor.u32 %v2288, 2147483648
      %v2321 = vxor.u32 %v2289, 2147483648
      %v2322 = vxor.u32 %v2290, 2147483648
      %v2323 = vxor.u32 %v2291, 2147483648
      %v2324 = vxor.u32 %v2292, 2147483648
      %v2325 = vxor.u32 %v2293, 2147483648
      %v2326 = vxor.u32 %v2294, 2147483648
      %v2327 = vxor.u32 %v2295, 2147483648
      %v2328 = vxor.u32 %v2296, 2147483648
      %v2329 = vxor.u32 %v2297, 2147483648
      %v2330 = vxor.u32 %v2298, 2147483648
      %v2331 = vmul.f32 %v2299, 1.442695
      %v2332 = vpow.pop %v2331
      %v2333 = vmul.f32 %v2300, 1.442695
      %v2334 = vpow.pop %v2333
      %v2335 = vmul.f32 %v2301, 1.442695
      %v2336 = vpow.pop %v2335
      %v2337 = vmul.f32 %v2302, 1.442695
      %v2338 = vpow.pop %v2337
      %v2339 = vmul.f32 %v2303, 1.442695
      %v2340 = vpow.pop %v2339
      %v2341 = vmul.f32 %v2304, 1.442695
      %v2342 = vpow.pop %v2341
      %v2343 = vmul.f32 %v2305, 1.442695
      %v2344 = vpow.pop %v2343
      %v2345 = vmul.f32 %v2306, 1.442695
      %v2346 = vpow.pop %v2345
      %v2347 = vmul.f32 %v2307, 1.442695
      %v2348 = vpow.pop %v2347
      %v2349 = vmul.f32 %v2308, 1.442695
      %v2350 = vpow.pop %v2349
      %v2351 = vmul.f32 %v2309, 1.442695
      %v2352 = vpow.pop %v2351
      %v2353 = vmul.f32 %v2310, 1.442695
      %v2354 = vpow.pop %v2353
      %v2355 = vmul.f32 %v2311, 1.442695
      %v2356 = vpow.pop %v2355
      %v2357 = vmul.f32 %v2312, 1.442695
      %v2358 = vpow.pop %v2357
      %v2359 = vmul.f32 %v2313, 1.442695
      %v2360 = vpow.pop %v2359
      %v2361 = vmul.f32 %v2314, 1.442695
      %v2362 = vpow.pop %v2361
      %v2363 = vmul.f32 %v2315, 1.442695
      %v2364 = vpow.pop %v2363
      %v2365 = vmul.f32 %v2316, 1.442695
      %v2366 = vpow.pop %v2365
      %v2367 = vmul.f32 %v2317, 1.442695
      %v2368 = vpow.pop %v2367
      %v2369 = vmul.f32 %v2318, 1.442695
      %v2370 = vpow.pop %v2369
      %v2371 = vmul.f32 %v2319, 1.442695
      %v2372 = vpow.pop %v2371
      %v2373 = vmul.f32 %v2320, 1.442695
      %v2374 = vpow.pop %v2373
      %v2375 = vmul.f32 %v2321, 1.442695
      %v2376 = vpow.pop %v2375
      %v2377 = vmul.f32 %v2322, 1.442695
      %v2378 = vpow.pop %v2377
      %v2379 = vmul.f32 %v2323, 1.442695
      %v2380 = vpow.pop %v2379
      %v2381 = vmul.f32 %v2324, 1.442695
      %v2382 = vpow.pop %v2381
      %v2383 = vmul.f32 %v2325, 1.442695
      %v2384 = vpow.pop %v2383
      %v2385 = vmul.f32 %v2326, 1.442695
      %v2386 = vpow.pop %v2385
      %v2387 = vmul.f32 %v2327, 1.442695
      %v2388 = vpow.pop %v2387
      %v2389 = vmul.f32 %v2328, 1.442695
      %v2390 = vpow.pop %v2389
      %v2391 = vmul.f32 %v2329, 1.442695
      %v2392 = vpow.pop %v2391
      %v2393 = vmul.f32 %v2330, 1.442695
      %v2394 = vpow.pop %v2393
      %v2395 = vadd.f32 %v2332, 1.0
      %v2396 = vadd.f32 %v2334, 1.0
      %v2397 = vadd.f32 %v2336, 1.0
      %v2398 = vadd.f32 %v2338, 1.0
      %v2399 = vadd.f32 %v2340, 1.0
      %v2400 = vadd.f32 %v2342, 1.0
      %v2401 = vadd.f32 %v2344, 1.0
      %v2402 = vadd.f32 %v2346, 1.0
      %v2403 = vadd.f32 %v2348, 1.0
      %v2404 = vadd.f32 %v2350, 1.0
      %v2405 = vadd.f32 %v2352, 1.0
      %v2406 = vadd.f32 %v2354, 1.0
      %v2407 = vadd.f32 %v2356, 1.0
      %v2408 = vadd.f32 %v2358, 1.0
      %v2409 = vadd.f32 %v2360, 1.0
      %v2410 = vadd.f32 %v2362, 1.0
      %v2411 = vadd.f32 %v2364, 1.0
      %v2412 = vadd.f32 %v2366, 1.0
      %v2413 = vadd.f32 %v2368, 1.0
      %v2414 = vadd.f32 %v2370, 1.0
      %v2415 = vadd.f32 %v2372, 1.0
      %v2416 = vadd.f32 %v2374, 1.0
      %v2417 = vadd.f32 %v2376, 1.0
      %v2418 = vadd.f32 %v2378, 1.0
      %v2419 = vadd.f32 %v2380, 1.0
      %v2420 = vadd.f32 %v2382, 1.0
      %v2421 = vadd.f32 %v2384, 1.0
      %v2422 = vadd.f32 %v2386, 1.0
      %v2423 = vadd.f32 %v2388, 1.0
      %v2424 = vadd.f32 %v2390, 1.0
      %v2425 = vadd.f32 %v2392, 1.0
      %v2426 = vadd.f32 %v2394, 1.0
      %v2427 = vrcp.pop %v2395
      %v2428 = vmul.f32 1.0, %v2427
      %v2429 = vrcp.pop %v2396
      %v2430 = vmul.f32 1.0, %v2429
      %v2431 = vrcp.pop %v2397
      %v2432 = vmul.f32 1.0, %v2431
      %v2433 = vrcp.pop %v2398
      %v2434 = vmul.f32 1.0, %v2433
      %v2435 = vrcp.pop %v2399
      %v2436 = vmul.f32 1.0, %v2435
      %v2437 = vrcp.pop %v2400
      %v2438 = vmul.f32 1.0, %v2437
      %v2439 = vrcp.pop %v2401
      %v2440 = vmul.f32 1.0, %v2439
      %v2441 = vrcp.pop %v2402
      %v2442 = vmul.f32 1.0, %v2441
      %v2443 = vrcp.pop %v2403
      %v2444 = vmul.f32 1.0, %v2443
      %v2445 = vrcp.pop %v2404
      %v2446 = vmul.f32 1.0, %v2445
      %v2447 = vrcp.pop %v2405
      %v2448 = vmul.f32 1.0, %v2447
      %v2449 = vrcp.pop %v2406
      %v2450 = vmul.f32 1.0, %v2449
      %v2451 = vrcp.pop %v2407
      %v2452 = vmul.f32 1.0, %v2451
      %v2453 = vrcp.pop %v2408
      %v2454 = vmul.f32 1.0, %v2453
      %v2455 = vrcp.pop %v2409
      %v2456 = vmul.f32 1.0, %v2455
      %v2457 = vrcp.pop %v2410
      %v2458 = vmul.f32 1.0, %v2457
      %v2459 = vrcp.pop %v2411
      %v2460 = vmul.f32 1.0, %v2459
      %v2461 = vrcp.pop %v2412
      %v2462 = vmul.f32 1.0, %v2461
      %v2463 = vrcp.pop %v2413
      %v2464 = vmul.f32 1.0, %v2463
      %v2465 = vrcp.pop %v2414
      %v2466 = vmul.f32 1.0, %v2465
      %v2467 = vrcp.pop %v2415
      %v2468 = vmul.f32 1.0, %v2467
      %v2469 = vrcp.pop %v2416
      %v2470 = vmul.f32 1.0, %v2469
      %v2471 = vrcp.pop %v2417
      %v2472 = vmul.f32 1.0, %v2471
      %v2473 = vrcp.pop %v2418
      %v2474 = vmul.f32 1.0, %v2473
      %v2475 = vrcp.pop %v2419
      %v2476 = vmul.f32 1.0, %v2475
      %v2477 = vrcp.pop %v2420
      %v2478 = vmul.f32 1.0, %v2477
      %v2479 = vrcp.pop %v2421
      %v2480 = vmul.f32 1.0, %v2479
      %v2481 = vrcp.pop %v2422
      %v2482 = vmul.f32 1.0, %v2481
      %v2483 = vrcp.pop %v2423
      %v2484 = vmul.f32 1.0, %v2483
      %v2485 = vrcp.pop %v2424
      %v2486 = vmul.f32 1.0, %v2485
      %v2487 = vrcp.pop %v2425
      %v2488 = vmul.f32 1.0, %v2487
      %v2489 = vrcp.pop %v2426
      %v2490 = vmul.f32 1.0, %v2489
      %v2491 = vmul.f32 %v2267, %v2428
      %v2492 = vmul.f32 %v2268, %v2430
      %v2493 = vmul.f32 %v2269, %v2432
      %v2494 = vmul.f32 %v2270, %v2434
      %v2495 = vmul.f32 %v2271, %v2436
      %v2496 = vmul.f32 %v2272, %v2438
      %v2497 = vmul.f32 %v2273, %v2440
      %v2498 = vmul.f32 %v2274, %v2442
      %v2499 = vmul.f32 %v2275, %v2444
      %v2500 = vmul.f32 %v2276, %v2446
      %v2501 = vmul.f32 %v2277, %v2448
      %v2502 = vmul.f32 %v2278, %v2450
      %v2503 = vmul.f32 %v2279, %v2452
      %v2504 = vmul.f32 %v2280, %v2454
      %v2505 = vmul.f32 %v2281, %v2456
      %v2506 = vmul.f32 %v2282, %v2458
      %v2507 = vmul.f32 %v2283, %v2460
      %v2508 = vmul.f32 %v2284, %v2462
      %v2509 = vmul.f32 %v2285, %v2464
      %v2510 = vmul.f32 %v2286, %v2466
      %v2511 = vmul.f32 %v2287, %v2468
      %v2512 = vmul.f32 %v2288, %v2470
      %v2513 = vmul.f32 %v2289, %v2472
      %v2514 = vmul.f32 %v2290, %v2474
      %v2515 = vmul.f32 %v2291, %v2476
      %v2516 = vmul.f32 %v2292, %v2478
      %v2517 = vmul.f32 %v2293, %v2480
      %v2518 = vmul.f32 %v2294, %v2482
      %v2519 = vmul.f32 %v2295, %v2484
      %v2520 = vmul.f32 %v2296, %v2486
      %v2521 = vmul.f32 %v2297, %v2488
      %v2522 = vmul.f32 %v2298, %v2490
      %v2523 = vpack.c.bf16 %v2492, %v2491
      %v2524 = vpack.c.bf16 %v2494, %v2493
      %v2525 = vpack.c.bf16 %v2496, %v2495
      %v2526 = vpack.c.bf16 %v2498, %v2497
      %v2527 = vpack.c.bf16 %v2500, %v2499
      %v2528 = vpack.c.bf16 %v2502, %v2501
      %v2529 = vpack.c.bf16 %v2504, %v2503
      %v2530 = vpack.c.bf16 %v2506, %v2505
      %v2531 = vpack.c.bf16 %v2508, %v2507
      %v2532 = vpack.c.bf16 %v2510, %v2509
      %v2533 = vpack.c.bf16 %v2512, %v2511
      %v2534 = vpack.c.bf16 %v2514, %v2513
      %v2535 = vpack.c.bf16 %v2516, %v2515
      %v2536 = vpack.c.bf16 %v2518, %v2517
      %v2537 = vpack.c.bf16 %v2520, %v2519
      %v2538 = vpack.c.bf16 %v2522, %v2521
      %v2539 = vld [vmem:[%s8] sm:$0xf]
      %v2540 = vld [vmem:[%s8 + $0x4] sm:$0xf]
      %v2541 = vld [vmem:[%s8 + $0x8] sm:$0xf]
      %v2542 = vld [vmem:[%s8 + $0xc] sm:$0xf]
      %v2543 = vld [vmem:[%s8 + $0x10] sm:$0xf]
      %v2544 = vld [vmem:[%s8 + $0x14] sm:$0xf]
      %v2545 = vld [vmem:[%s8 + $0x18] sm:$0xf]
      %v2546 = vld [vmem:[%s8 + $0x1c] sm:$0xf]
      %v2547 = vld [vmem:[%s8 + $0x20] sm:$0xf]
      %v2548 = vld [vmem:[%s8 + $0x24] sm:$0xf]
      %v2549 = vld [vmem:[%s8 + $0x28] sm:$0xf]
      %v2550 = vld [vmem:[%s8 + $0x2c] sm:$0xf]
      %v2551 = vld [vmem:[%s8 + $0x30] sm:$0xf]
      %v2552 = vld [vmem:[%s8 + $0x34] sm:$0xf]
      %v2553 = vld [vmem:[%s8 + $0x38] sm:$0xf]
      %v2554 = vld [vmem:[%s8 + $0x3c] sm:$0xf]
      %v2555 = vld [vmem:[%s9] sm:$0x1]
      %v2557 = vlaneseq
      %v2558 = vshrl.u32 %v2557, 7
      %v2559 = vsub.s32 0, %v2558
      %v2560 = vrot.slane %v2555, %v2559
      %v2578 = vunpack.c.l.b16 %v2539
      %v2579 = vunpack.c.l.b16 %v2540
      %v2580 = vunpack.c.l.b16 %v2541
      %v2581 = vunpack.c.l.b16 %v2542
      %v2582 = vunpack.c.l.b16 %v2543
      %v2583 = vunpack.c.l.b16 %v2544
      %v2584 = vunpack.c.l.b16 %v2545
      %v2585 = vunpack.c.l.b16 %v2546
      %v2586 = vunpack.c.l.b16 %v2547
      %v2587 = vunpack.c.l.b16 %v2548
      %v2588 = vunpack.c.l.b16 %v2549
      %v2589 = vunpack.c.l.b16 %v2550
      %v2590 = vunpack.c.l.b16 %v2551
      %v2591 = vunpack.c.l.b16 %v2552
      %v2592 = vunpack.c.l.b16 %v2553
      %v2593 = vunpack.c.l.b16 %v2554
      %v2594 = vpack.c.b16 %v2579, %v2578
      %v2595 = vpack.c.b16 %v2581, %v2580
      %v2596 = vpack.c.b16 %v2583, %v2582
      %v2597 = vpack.c.b16 %v2585, %v2584
      %v2598 = vpack.c.b16 %v2587, %v2586
      %v2599 = vpack.c.b16 %v2589, %v2588
      %v2600 = vpack.c.b16 %v2591, %v2590
      %v2601 = vpack.c.b16 %v2593, %v2592
      %2610 = vmatprep.subr.bf16.mxu0 0
      %2611 = vmatpush1.bf16.msra.mxu0 %v2601
      %2612 = vmatprep.subr.bf16.mxu0 0
      %2613 = vmatpush1.bf16.msra.mxu0 %v2600
      %2614 = vmatprep.subr.bf16.mxu0 0
      %2615 = vmatpush1.bf16.msra.mxu0 %v2599
      %2616 = vmatprep.subr.bf16.mxu0 0
      %2617 = vmatpush1.bf16.msra.mxu0 %v2598
      %2618 = vmatprep.subr.bf16.mxu0 0
      %2619 = vmatpush1.bf16.msra.mxu0 %v2597
      %2620 = vmatprep.subr.bf16.mxu0 0
      %2621 = vmatpush1.bf16.msra.mxu0 %v2596
      %2622 = vmatprep.subr.bf16.mxu0 0
      %2623 = vmatpush1.bf16.msra.mxu0 %v2595
      %2624 = vmatprep.subr.bf16.mxu0 0
      %2625 = vmatpush1.bf16.msra.mxu0 %v2594
      %2626 = vmatprep.subr.bf16.mxu0 0
      %2627 = vmatpush2.bf16.msra.mxu0 0
      %2628 = vmatprep.subr.bf16.mxu0 0
      %2629 = vmatpush2.bf16.msra.mxu0 0
      %2630 = vmatprep.subr.bf16.mxu0 0
      %2631 = vmatpush2.bf16.msra.mxu0 0
      %2632 = vmatprep.subr.bf16.mxu0 0
      %2633 = vmatpush2.bf16.msra.mxu0 0
      %2634 = vmatprep.subr.bf16.mxu0 0
      %2635 = vmatpush2.bf16.msra.mxu0 0
      %2636 = vmatprep.subr.bf16.mxu0 0
      %2637 = vmatpush2.bf16.msra.mxu0 0
      %2638 = vmatprep.subr.bf16.mxu0 0
      %2639 = vmatpush2.bf16.msra.mxu0 0
      %2640 = vmatprep.subr.bf16.mxu0 0
      %2641 = vmatpush2.bf16.msra.mxu0 0
      %2642 = vmatprep.mubr.bf16.mxu0 0
      %2643 = vmatmul.mubr.bf16.gmra.mxu0 %v2523
      %v2644 = vpop.f32.mrf.mxu0
      %v2645 = vadd.f32 %v2560, %v2644
      %v2646 = vpop.f32.mrf.mxu0
      %v2647 = vpop.f32.mrf.mxu0
      %v2648 = vadd.f32 %v2560, %v2647
      %v2649 = vpop.f32.mrf.mxu0
      %2650 = vmatprep.mubr.bf16.mxu0 0
      %2651 = vmatmul.mubr.bf16.gmra.mxu0 %v2524
      %v2652 = vpop.f32.mrf.mxu0
      %v2653 = vadd.f32 %v2560, %v2652
      %v2654 = vpop.f32.mrf.mxu0
      %v2655 = vpop.f32.mrf.mxu0
      %v2656 = vadd.f32 %v2560, %v2655
      %v2657 = vpop.f32.mrf.mxu0
      %2658 = vmatprep.mubr.bf16.mxu0 0
      %2659 = vmatmul.mubr.bf16.gmra.mxu0 %v2525
      %v2660 = vpop.f32.mrf.mxu0
      %v2661 = vadd.f32 %v2560, %v2660
      %v2662 = vpop.f32.mrf.mxu0
      %v2663 = vpop.f32.mrf.mxu0
      %v2664 = vadd.f32 %v2560, %v2663
      %v2665 = vpop.f32.mrf.mxu0
      %2666 = vmatprep.mubr.bf16.mxu0 0
      %2667 = vmatmul.mubr.bf16.gmra.mxu0 %v2526
      %v2668 = vpop.f32.mrf.mxu0
      %v2669 = vadd.f32 %v2560, %v2668
      %v2670 = vpop.f32.mrf.mxu0
      %v2671 = vpop.f32.mrf.mxu0
      %v2672 = vadd.f32 %v2560, %v2671
      %v2673 = vpop.f32.mrf.mxu0
      %2674 = vmatprep.mubr.bf16.mxu0 0
      %2675 = vmatmul.mubr.bf16.gmra.mxu0 %v2527
      %v2676 = vpop.f32.mrf.mxu0
      %v2677 = vadd.f32 %v2560, %v2676
      %v2678 = vpop.f32.mrf.mxu0
      %v2679 = vpop.f32.mrf.mxu0
      %v2680 = vadd.f32 %v2560, %v2679
      %v2681 = vpop.f32.mrf.mxu0
      %2682 = vmatprep.mubr.bf16.mxu0 0
      %2683 = vmatmul.mubr.bf16.gmra.mxu0 %v2528
      %v2684 = vpop.f32.mrf.mxu0
      %v2685 = vadd.f32 %v2560, %v2684
      %v2686 = vpop.f32.mrf.mxu0
      %v2687 = vpop.f32.mrf.mxu0
      %v2688 = vadd.f32 %v2560, %v2687
      %v2689 = vpop.f32.mrf.mxu0
      %2690 = vmatprep.mubr.bf16.mxu0 0
      %2691 = vmatmul.mubr.bf16.gmra.mxu0 %v2529
      %v2692 = vpop.f32.mrf.mxu0
      %v2693 = vadd.f32 %v2560, %v2692
      %v2694 = vpop.f32.mrf.mxu0
      %v2695 = vpop.f32.mrf.mxu0
      %v2696 = vadd.f32 %v2560, %v2695
      %v2697 = vpop.f32.mrf.mxu0
      %2698 = vmatprep.mubr.bf16.mxu0 0
      %2699 = vmatmul.mubr.bf16.gmra.mxu0 %v2530
      %v2700 = vpop.f32.mrf.mxu0
      %v2701 = vadd.f32 %v2560, %v2700
      %v2702 = vpop.f32.mrf.mxu0
      %v2703 = vpop.f32.mrf.mxu0
      %v2704 = vadd.f32 %v2560, %v2703
      %v2705 = vpop.f32.mrf.mxu0
      %2706 = vmatprep.mubr.bf16.mxu0 0
      %2707 = vmatmul.mubr.bf16.gmra.mxu0 %v2531
      %v2708 = vpop.f32.mrf.mxu0
      %v2709 = vadd.f32 %v2560, %v2708
      %v2710 = vpop.f32.mrf.mxu0
      %v2711 = vpop.f32.mrf.mxu0
      %v2712 = vadd.f32 %v2560, %v2711
      %v2713 = vpop.f32.mrf.mxu0
      %2714 = vmatprep.mubr.bf16.mxu0 0
      %2715 = vmatmul.mubr.bf16.gmra.mxu0 %v2532
      %v2716 = vpop.f32.mrf.mxu0
      %v2717 = vadd.f32 %v2560, %v2716
      %v2718 = vpop.f32.mrf.mxu0
      %v2719 = vpop.f32.mrf.mxu0
      %v2720 = vadd.f32 %v2560, %v2719
      %v2721 = vpop.f32.mrf.mxu0
      %2722 = vmatprep.mubr.bf16.mxu0 0
      %2723 = vmatmul.mubr.bf16.gmra.mxu0 %v2533
      %v2724 = vpop.f32.mrf.mxu0
      %v2725 = vadd.f32 %v2560, %v2724
      %v2726 = vpop.f32.mrf.mxu0
      %v2727 = vpop.f32.mrf.mxu0
      %v2728 = vadd.f32 %v2560, %v2727
      %v2729 = vpop.f32.mrf.mxu0
      %2730 = vmatprep.mubr.bf16.mxu0 0
      %2731 = vmatmul.mubr.bf16.gmra.mxu0 %v2534
      %v2732 = vpop.f32.mrf.mxu0
      %v2733 = vadd.f32 %v2560, %v2732
      %v2734 = vpop.f32.mrf.mxu0
      %v2735 = vpop.f32.mrf.mxu0
      %v2736 = vadd.f32 %v2560, %v2735
      %v2737 = vpop.f32.mrf.mxu0
      %2738 = vmatprep.mubr.bf16.mxu0 0
      %2739 = vmatmul.mubr.bf16.gmra.mxu0 %v2535
      %v2740 = vpop.f32.mrf.mxu0
      %v2741 = vadd.f32 %v2560, %v2740
      %v2742 = vpop.f32.mrf.mxu0
      %v2743 = vpop.f32.mrf.mxu0
      %v2744 = vadd.f32 %v2560, %v2743
      %v2745 = vpop.f32.mrf.mxu0
      %2746 = vmatprep.mubr.bf16.mxu0 0
      %2747 = vmatmul.mubr.bf16.gmra.mxu0 %v2536
      %v2748 = vpop.f32.mrf.mxu0
      %v2749 = vadd.f32 %v2560, %v2748
      %v2750 = vpop.f32.mrf.mxu0
      %v2751 = vpop.f32.mrf.mxu0
      %v2752 = vadd.f32 %v2560, %v2751
      %v2753 = vpop.f32.mrf.mxu0
      %2754 = vmatprep.mubr.bf16.mxu0 0
      %2755 = vmatmul.mubr.bf16.gmra.mxu0 %v2537
      %v2756 = vpop.f32.mrf.mxu0
      %v2757 = vadd.f32 %v2560, %v2756
      %v2758 = vpop.f32.mrf.mxu0
      %v2759 = vpop.f32.mrf.mxu0
      %v2760 = vadd.f32 %v2560, %v2759
      %v2761 = vpop.f32.mrf.mxu0
      %2762 = vmatprep.mubr.bf16.mxu0 0
      %2763 = vmatmul.mubr.bf16.gmra.mxu0 %v2538
      %v2764 = vpop.f32.mrf.mxu0
      %v2765 = vadd.f32 %v2560, %v2764
      %v2766 = vpop.f32.mrf.mxu0
      %v2767 = vpop.f32.mrf.mxu0
      %v2768 = vadd.f32 %v2560, %v2767
      %v2769 = vpop.f32.mrf.mxu0
      %2770 = vdwg.mxu0
      %v2771 = vxor.u32 %v2645, 2147483648
      %v2772 = vxor.u32 %v2648, 2147483648
      %v2773 = vxor.u32 %v2653, 2147483648
      %v2774 = vxor.u32 %v2656, 2147483648
      %v2775 = vxor.u32 %v2661, 2147483648
      %v2776 = vxor.u32 %v2664, 2147483648
      %v2777 = vxor.u32 %v2669, 2147483648
      %v2778 = vxor.u32 %v2672, 2147483648
      %v2779 = vxor.u32 %v2677, 2147483648
      %v2780 = vxor.u32 %v2680, 2147483648
      %v2781 = vxor.u32 %v2685, 2147483648
      %v2782 = vxor.u32 %v2688, 2147483648
      %v2783 = vxor.u32 %v2693, 2147483648
      %v2784 = vxor.u32 %v2696, 2147483648
      %v2785 = vxor.u32 %v2701, 2147483648
      %v2786 = vxor.u32 %v2704, 2147483648
      %v2787 = vxor.u32 %v2709, 2147483648
      %v2788 = vxor.u32 %v2712, 2147483648
      %v2789 = vxor.u32 %v2717, 2147483648
      %v2790 = vxor.u32 %v2720, 2147483648
      %v2791 = vxor.u32 %v2725, 2147483648
      %v2792 = vxor.u32 %v2728, 2147483648
      %v2793 = vxor.u32 %v2733, 2147483648
      %v2794 = vxor.u32 %v2736, 2147483648
      %v2795 = vxor.u32 %v2741, 2147483648
      %v2796 = vxor.u32 %v2744, 2147483648
      %v2797 = vxor.u32 %v2749, 2147483648
      %v2798 = vxor.u32 %v2752, 2147483648
      %v2799 = vxor.u32 %v2757, 2147483648
      %v2800 = vxor.u32 %v2760, 2147483648
      %v2801 = vxor.u32 %v2765, 2147483648
      %v2802 = vxor.u32 %v2768, 2147483648
      %v2803 = vmul.f32 %v2771, 1.442695
      %v2804 = vpow.pop %v2803
      %v2805 = vmul.f32 %v2772, 1.442695
      %v2806 = vpow.pop %v2805
      %v2807 = vmul.f32 %v2773, 1.442695
      %v2808 = vpow.pop %v2807
      %v2809 = vmul.f32 %v2774, 1.442695
      %v2810 = vpow.pop %v2809
      %v2811 = vmul.f32 %v2775, 1.442695
      %v2812 = vpow.pop %v2811
      %v2813 = vmul.f32 %v2776, 1.442695
      %v2814 = vpow.pop %v2813
      %v2815 = vmul.f32 %v2777, 1.442695
      %v2816 = vpow.pop %v2815
      %v2817 = vmul.f32 %v2778, 1.442695
      %v2818 = vpow.pop %v2817
      %v2819 = vmul.f32 %v2779, 1.442695
      %v2820 = vpow.pop %v2819
      %v2821 = vmul.f32 %v2780, 1.442695
      %v2822 = vpow.pop %v2821
      %v2823 = vmul.f32 %v2781, 1.442695
      %v2824 = vpow.pop %v2823
      %v2825 = vmul.f32 %v2782, 1.442695
      %v2826 = vpow.pop %v2825
      %v2827 = vmul.f32 %v2783, 1.442695
      %v2828 = vpow.pop %v2827
      %v2829 = vmul.f32 %v2784, 1.442695
      %v2830 = vpow.pop %v2829
      %v2831 = vmul.f32 %v2785, 1.442695
      %v2832 = vpow.pop %v2831
      %v2833 = vmul.f32 %v2786, 1.442695
      %v2834 = vpow.pop %v2833
      %v2835 = vmul.f32 %v2787, 1.442695
      %v2836 = vpow.pop %v2835
      %v2837 = vmul.f32 %v2788, 1.442695
      %v2838 = vpow.pop %v2837
      %v2839 = vmul.f32 %v2789, 1.442695
      %v2840 = vpow.pop %v2839
      %v2841 = vmul.f32 %v2790, 1.442695
      %v2842 = vpow.pop %v2841
      %v2843 = vmul.f32 %v2791, 1.442695
      %v2844 = vpow.pop %v2843
      %v2845 = vmul.f32 %v2792, 1.442695
      %v2846 = vpow.pop %v2845
      %v2847 = vmul.f32 %v2793, 1.442695
      %v2848 = vpow.pop %v2847
      %v2849 = vmul.f32 %v2794, 1.442695
      %v2850 = vpow.pop %v2849
      %v2851 = vmul.f32 %v2795, 1.442695
      %v2852 = vpow.pop %v2851
      %v2853 = vmul.f32 %v2796, 1.442695
      %v2854 = vpow.pop %v2853
      %v2855 = vmul.f32 %v2797, 1.442695
      %v2856 = vpow.pop %v2855
      %v2857 = vmul.f32 %v2798, 1.442695
      %v2858 = vpow.pop %v2857
      %v2859 = vmul.f32 %v2799, 1.442695
      %v2860 = vpow.pop %v2859
      %v2861 = vmul.f32 %v2800, 1.442695
      %v2862 = vpow.pop %v2861
      %v2863 = vmul.f32 %v2801, 1.442695
      %v2864 = vpow.pop %v2863
      %v2865 = vmul.f32 %v2802, 1.442695
      %v2866 = vpow.pop %v2865
      %v2867 = vadd.f32 %v2804, 1.0
      %v2868 = vadd.f32 %v2806, 1.0
      %v2869 = vadd.f32 %v2808, 1.0
      %v2870 = vadd.f32 %v2810, 1.0
      %v2871 = vadd.f32 %v2812, 1.0
      %v2872 = vadd.f32 %v2814, 1.0
      %v2873 = vadd.f32 %v2816, 1.0
      %v2874 = vadd.f32 %v2818, 1.0
      %v2875 = vadd.f32 %v2820, 1.0
      %v2876 = vadd.f32 %v2822, 1.0
      %v2877 = vadd.f32 %v2824, 1.0
      %v2878 = vadd.f32 %v2826, 1.0
      %v2879 = vadd.f32 %v2828, 1.0
      %v2880 = vadd.f32 %v2830, 1.0
      %v2881 = vadd.f32 %v2832, 1.0
      %v2882 = vadd.f32 %v2834, 1.0
      %v2883 = vadd.f32 %v2836, 1.0
      %v2884 = vadd.f32 %v2838, 1.0
      %v2885 = vadd.f32 %v2840, 1.0
      %v2886 = vadd.f32 %v2842, 1.0
      %v2887 = vadd.f32 %v2844, 1.0
      %v2888 = vadd.f32 %v2846, 1.0
      %v2889 = vadd.f32 %v2848, 1.0
      %v2890 = vadd.f32 %v2850, 1.0
      %v2891 = vadd.f32 %v2852, 1.0
      %v2892 = vadd.f32 %v2854, 1.0
      %v2893 = vadd.f32 %v2856, 1.0
      %v2894 = vadd.f32 %v2858, 1.0
      %v2895 = vadd.f32 %v2860, 1.0
      %v2896 = vadd.f32 %v2862, 1.0
      %v2897 = vadd.f32 %v2864, 1.0
      %v2898 = vadd.f32 %v2866, 1.0
      %v2899 = vrcp.pop %v2867
      %v2900 = vmul.f32 1.0, %v2899
      %v2901 = vrcp.pop %v2868
      %v2902 = vmul.f32 1.0, %v2901
      %v2903 = vrcp.pop %v2869
      %v2904 = vmul.f32 1.0, %v2903
      %v2905 = vrcp.pop %v2870
      %v2906 = vmul.f32 1.0, %v2905
      %v2907 = vrcp.pop %v2871
      %v2908 = vmul.f32 1.0, %v2907
      %v2909 = vrcp.pop %v2872
      %v2910 = vmul.f32 1.0, %v2909
      %v2911 = vrcp.pop %v2873
      %v2912 = vmul.f32 1.0, %v2911
      %v2913 = vrcp.pop %v2874
      %v2914 = vmul.f32 1.0, %v2913
      %v2915 = vrcp.pop %v2875
      %v2916 = vmul.f32 1.0, %v2915
      %v2917 = vrcp.pop %v2876
      %v2918 = vmul.f32 1.0, %v2917
      %v2919 = vrcp.pop %v2877
      %v2920 = vmul.f32 1.0, %v2919
      %v2921 = vrcp.pop %v2878
      %v2922 = vmul.f32 1.0, %v2921
      %v2923 = vrcp.pop %v2879
      %v2924 = vmul.f32 1.0, %v2923
      %v2925 = vrcp.pop %v2880
      %v2926 = vmul.f32 1.0, %v2925
      %v2927 = vrcp.pop %v2881
      %v2928 = vmul.f32 1.0, %v2927
      %v2929 = vrcp.pop %v2882
      %v2930 = vmul.f32 1.0, %v2929
      %v2931 = vrcp.pop %v2883
      %v2932 = vmul.f32 1.0, %v2931
      %v2933 = vrcp.pop %v2884
      %v2934 = vmul.f32 1.0, %v2933
      %v2935 = vrcp.pop %v2885
      %v2936 = vmul.f32 1.0, %v2935
      %v2937 = vrcp.pop %v2886
      %v2938 = vmul.f32 1.0, %v2937
      %v2939 = vrcp.pop %v2887
      %v2940 = vmul.f32 1.0, %v2939
      %v2941 = vrcp.pop %v2888
      %v2942 = vmul.f32 1.0, %v2941
      %v2943 = vrcp.pop %v2889
      %v2944 = vmul.f32 1.0, %v2943
      %v2945 = vrcp.pop %v2890
      %v2946 = vmul.f32 1.0, %v2945
      %v2947 = vrcp.pop %v2891
      %v2948 = vmul.f32 1.0, %v2947
      %v2949 = vrcp.pop %v2892
      %v2950 = vmul.f32 1.0, %v2949
      %v2951 = vrcp.pop %v2893
      %v2952 = vmul.f32 1.0, %v2951
      %v2953 = vrcp.pop %v2894
      %v2954 = vmul.f32 1.0, %v2953
      %v2955 = vrcp.pop %v2895
      %v2956 = vmul.f32 1.0, %v2955
      %v2957 = vrcp.pop %v2896
      %v2958 = vmul.f32 1.0, %v2957
      %v2959 = vrcp.pop %v2897
      %v2960 = vmul.f32 1.0, %v2959
      %v2961 = vrcp.pop %v2898
      %v2962 = vmul.f32 1.0, %v2961
      %v2963 = vmul.f32 %v2645, %v2900
      %v2964 = vmul.f32 %v2648, %v2902
      %v2965 = vmul.f32 %v2653, %v2904
      %v2966 = vmul.f32 %v2656, %v2906
      %v2967 = vmul.f32 %v2661, %v2908
      %v2968 = vmul.f32 %v2664, %v2910
      %v2969 = vmul.f32 %v2669, %v2912
      %v2970 = vmul.f32 %v2672, %v2914
      %v2971 = vmul.f32 %v2677, %v2916
      %v2972 = vmul.f32 %v2680, %v2918
      %v2973 = vmul.f32 %v2685, %v2920
      %v2974 = vmul.f32 %v2688, %v2922
      %v2975 = vmul.f32 %v2693, %v2924
      %v2976 = vmul.f32 %v2696, %v2926
      %v2977 = vmul.f32 %v2701, %v2928
      %v2978 = vmul.f32 %v2704, %v2930
      %v2979 = vmul.f32 %v2709, %v2932
      %v2980 = vmul.f32 %v2712, %v2934
      %v2981 = vmul.f32 %v2717, %v2936
      %v2982 = vmul.f32 %v2720, %v2938
      %v2983 = vmul.f32 %v2725, %v2940
      %v2984 = vmul.f32 %v2728, %v2942
      %v2985 = vmul.f32 %v2733, %v2944
      %v2986 = vmul.f32 %v2736, %v2946
      %v2987 = vmul.f32 %v2741, %v2948
      %v2988 = vmul.f32 %v2744, %v2950
      %v2989 = vmul.f32 %v2749, %v2952
      %v2990 = vmul.f32 %v2752, %v2954
      %v2991 = vmul.f32 %v2757, %v2956
      %v2992 = vmul.f32 %v2760, %v2958
      %v2993 = vmul.f32 %v2765, %v2960
      %v2994 = vmul.f32 %v2768, %v2962
      %v2995 = vpack.c.bf16 %v2964, %v2963
      %v2996 = vpack.c.bf16 %v2966, %v2965
      %v2997 = vpack.c.bf16 %v2968, %v2967
      %v2998 = vpack.c.bf16 %v2970, %v2969
      %v2999 = vpack.c.bf16 %v2972, %v2971
      %v3000 = vpack.c.bf16 %v2974, %v2973
      %v3001 = vpack.c.bf16 %v2976, %v2975
      %v3002 = vpack.c.bf16 %v2978, %v2977
      %v3003 = vpack.c.bf16 %v2980, %v2979
      %v3004 = vpack.c.bf16 %v2982, %v2981
      %v3005 = vpack.c.bf16 %v2984, %v2983
      %v3006 = vpack.c.bf16 %v2986, %v2985
      %v3007 = vpack.c.bf16 %v2988, %v2987
      %v3008 = vpack.c.bf16 %v2990, %v2989
      %v3009 = vpack.c.bf16 %v2992, %v2991
      %v3010 = vpack.c.bf16 %v2994, %v2993
      %v3027 = vunpack.c.l.b16 %v2995
      %v3028 = vunpack.c.h.b16 %v2995
      %v3029 = vunpack.c.l.b16 %v2996
      %v3030 = vunpack.c.h.b16 %v2996
      %v3031 = vunpack.c.l.b16 %v2997
      %v3032 = vunpack.c.h.b16 %v2997
      %v3033 = vunpack.c.l.b16 %v2998
      %v3034 = vunpack.c.h.b16 %v2998
      %v3035 = vunpack.c.l.b16 %v2999
      %v3036 = vunpack.c.h.b16 %v2999
      %v3037 = vunpack.c.l.b16 %v3000
      %v3038 = vunpack.c.h.b16 %v3000
      %v3039 = vunpack.c.l.b16 %v3001
      %v3040 = vunpack.c.h.b16 %v3001
      %v3041 = vunpack.c.l.b16 %v3002
      %v3042 = vunpack.c.h.b16 %v3002
      %v3043 = vunpack.c.l.b16 %v3003
      %v3044 = vunpack.c.h.b16 %v3003
      %v3045 = vunpack.c.l.b16 %v3004
      %v3046 = vunpack.c.h.b16 %v3004
      %v3047 = vunpack.c.l.b16 %v3005
      %v3048 = vunpack.c.h.b16 %v3005
      %v3049 = vunpack.c.l.b16 %v3006
      %v3050 = vunpack.c.h.b16 %v3006
      %v3051 = vunpack.c.l.b16 %v3007
      %v3052 = vunpack.c.h.b16 %v3007
      %v3053 = vunpack.c.l.b16 %v3008
      %v3054 = vunpack.c.h.b16 %v3008
      %v3055 = vunpack.c.l.b16 %v3009
      %v3056 = vunpack.c.h.b16 %v3009
      %v3057 = vunpack.c.l.b16 %v3010
      %v3058 = vunpack.c.h.b16 %v3010
      %v3059 = vpack.c.b16 %v3027, %v3027
      %v3060 = vpack.c.b16 %v3028, %v3028
      %v3061 = vpack.c.b16 %v3029, %v3029
      %v3062 = vpack.c.b16 %v3030, %v3030
      %v3063 = vpack.c.b16 %v3031, %v3031
      %v3064 = vpack.c.b16 %v3032, %v3032
      %v3065 = vpack.c.b16 %v3033, %v3033
      %v3066 = vpack.c.b16 %v3034, %v3034
      %v3067 = vpack.c.b16 %v3035, %v3035
      %v3068 = vpack.c.b16 %v3036, %v3036
      %v3069 = vpack.c.b16 %v3037, %v3037
      %v3070 = vpack.c.b16 %v3038, %v3038
      %v3071 = vpack.c.b16 %v3039, %v3039
      %v3072 = vpack.c.b16 %v3040, %v3040
      %v3073 = vpack.c.b16 %v3041, %v3041
      %v3074 = vpack.c.b16 %v3042, %v3042
      %v3075 = vpack.c.b16 %v3043, %v3043
      %v3076 = vpack.c.b16 %v3044, %v3044
      %v3077 = vpack.c.b16 %v3045, %v3045
      %v3078 = vpack.c.b16 %v3046, %v3046
      %v3079 = vpack.c.b16 %v3047, %v3047
      %v3080 = vpack.c.b16 %v3048, %v3048
      %v3081 = vpack.c.b16 %v3049, %v3049
      %v3082 = vpack.c.b16 %v3050, %v3050
      %v3083 = vpack.c.b16 %v3051, %v3051
      %v3084 = vpack.c.b16 %v3052, %v3052
      %v3085 = vpack.c.b16 %v3053, %v3053
      %v3086 = vpack.c.b16 %v3054, %v3054
      %v3087 = vpack.c.b16 %v3055, %v3055
      %v3088 = vpack.c.b16 %v3056, %v3056
      %v3089 = vpack.c.b16 %v3057, %v3057
      %v3090 = vpack.c.b16 %v3058, %v3058
      %3123 = vst [vmem:[%s535] sm:$0xf] %v3059
      %3124 = vst [vmem:[%s535 + $0x4] sm:$0xf] %v3060
      %3125 = vst [vmem:[%s535 + $0x8] sm:$0xf] %v3061
      %3126 = vst [vmem:[%s535 + $0xc] sm:$0xf] %v3062
      %3127 = vst [vmem:[%s535 + $0x10] sm:$0xf] %v3063
      %3128 = vst [vmem:[%s535 + $0x14] sm:$0xf] %v3064
      %3129 = vst [vmem:[%s535 + $0x18] sm:$0xf] %v3065
      %3130 = vst [vmem:[%s535 + $0x1c] sm:$0xf] %v3066
      %3131 = vst [vmem:[%s535 + $0x20] sm:$0xf] %v3067
      %3132 = vst [vmem:[%s535 + $0x24] sm:$0xf] %v3068
      %3133 = vst [vmem:[%s535 + $0x28] sm:$0xf] %v3069
      %3134 = vst [vmem:[%s535 + $0x2c] sm:$0xf] %v3070
      %3135 = vst [vmem:[%s535 + $0x30] sm:$0xf] %v3071
      %3136 = vst [vmem:[%s535 + $0x34] sm:$0xf] %v3072
      %3137 = vst [vmem:[%s535 + $0x38] sm:$0xf] %v3073
      %3138 = vst [vmem:[%s535 + $0x3c] sm:$0xf] %v3074
      %3139 = vst [vmem:[%s535 + $0x40] sm:$0xf] %v3075
      %3140 = vst [vmem:[%s535 + $0x44] sm:$0xf] %v3076
      %3141 = vst [vmem:[%s535 + $0x48] sm:$0xf] %v3077
      %3142 = vst [vmem:[%s535 + $0x4c] sm:$0xf] %v3078
      %3143 = vst [vmem:[%s535 + $0x50] sm:$0xf] %v3079
      %3144 = vst [vmem:[%s535 + $0x54] sm:$0xf] %v3080
      %3145 = vst [vmem:[%s535 + $0x58] sm:$0xf] %v3081
      %3146 = vst [vmem:[%s535 + $0x5c] sm:$0xf] %v3082
      %3147 = vst [vmem:[%s535 + $0x60] sm:$0xf] %v3083
      %3148 = vst [vmem:[%s535 + $0x64] sm:$0xf] %v3084
      %3149 = vst [vmem:[%s535 + $0x68] sm:$0xf] %v3085
      %3150 = vst [vmem:[%s535 + $0x6c] sm:$0xf] %v3086
      %3151 = vst [vmem:[%s535 + $0x70] sm:$0xf] %v3087
      %3152 = vst [vmem:[%s535 + $0x74] sm:$0xf] %v3088
      %3153 = vst [vmem:[%s535 + $0x78] sm:$0xf] %v3089
      %3154 = vst [vmem:[%s535 + $0x7c] sm:$0xf] %v3090
      %v3155 = vld [vmem:[%s523] sm:$0x3]
      %v3156 = vlaneseq
      %v3157 = vshrl.u32 %v3156, 7
      %v3158 = vadd.s32 %v3157, 8
      %v3159 = vadd.s32 %v3157, 16
      %v3160 = vadd.s32 %v3157, 24
      %v3161 = vadd.s32 %v3157, 32
      %v3162 = vadd.s32 %v3157, 40
      %v3163 = vadd.s32 %v3157, 48
      %v3164 = vadd.s32 %v3157, 56
      %v3165 = vadd.s32 %v3157, 64
      %v3166 = vadd.s32 %v3157, 72
      %v3167 = vadd.s32 %v3157, 80
      %v3168 = vadd.s32 %v3157, 88
      %v3169 = vadd.s32 %v3157, 96
      %v3170 = vadd.s32 %v3157, 104
      %v3171 = vadd.s32 %v3157, 112
      %v3172 = vadd.s32 %v3157, 120
      %v3173 = vlaneseq
      %v3174 = vshrl.u32 %v3173, 7
      %v3175 = vsub.s32 0, %v3174
      %v3176 = vrot.slane %v3155, %v3175
      %v3177 = vlaneseq
      %v3178 = vshrl.u32 %v3177, 7
      %v3179 = vsub.s32 1, %v3178
      %v3180 = vrot.slane %v3155, %v3179
      %vm3181 = vcmp.eq.s32.totalorder %v3157, %v3176
      %vm3182 = vcmp.eq.s32.totalorder %v3157, %v3180
      %vm3183 = vcmp.eq.s32.totalorder %v3158, %v3176
      %vm3184 = vcmp.eq.s32.totalorder %v3158, %v3180
      %vm3185 = vcmp.eq.s32.totalorder %v3159, %v3176
      %vm3186 = vcmp.eq.s32.totalorder %v3159, %v3180
      %vm3187 = vcmp.eq.s32.totalorder %v3160, %v3176
      %vm3188 = vcmp.eq.s32.totalorder %v3160, %v3180
      %vm3189 = vcmp.eq.s32.totalorder %v3161, %v3176
      %vm3190 = vcmp.eq.s32.totalorder %v3161, %v3180
      %vm3191 = vcmp.eq.s32.totalorder %v3162, %v3176
      %vm3192 = vcmp.eq.s32.totalorder %v3162, %v3180
      %vm3193 = vcmp.eq.s32.totalorder %v3163, %v3176
      %vm3194 = vcmp.eq.s32.totalorder %v3163, %v3180
      %vm3195 = vcmp.eq.s32.totalorder %v3164, %v3176
      %vm3196 = vcmp.eq.s32.totalorder %v3164, %v3180
      %vm3197 = vcmp.eq.s32.totalorder %v3165, %v3176
      %vm3198 = vcmp.eq.s32.totalorder %v3165, %v3180
      %vm3199 = vcmp.eq.s32.totalorder %v3166, %v3176
      %vm3200 = vcmp.eq.s32.totalorder %v3166, %v3180
      %vm3201 = vcmp.eq.s32.totalorder %v3167, %v3176
      %vm3202 = vcmp.eq.s32.totalorder %v3167, %v3180
      %vm3203 = vcmp.eq.s32.totalorder %v3168, %v3176
      %vm3204 = vcmp.eq.s32.totalorder %v3168, %v3180
      %vm3205 = vcmp.eq.s32.totalorder %v3169, %v3176
      %vm3206 = vcmp.eq.s32.totalorder %v3169, %v3180
      %vm3207 = vcmp.eq.s32.totalorder %v3170, %v3176
      %vm3208 = vcmp.eq.s32.totalorder %v3170, %v3180
      %vm3209 = vcmp.eq.s32.totalorder %v3171, %v3176
      %vm3210 = vcmp.eq.s32.totalorder %v3171, %v3180
      %vm3211 = vcmp.eq.s32.totalorder %v3172, %v3176
      %vm3212 = vcmp.eq.s32.totalorder %v3172, %v3180
      %v3213 = vsel %vm3181, 1, 0
      %v3214 = vsel %vm3182, 1, 0
      %v3215 = vsel %vm3183, 1, 0
      %v3216 = vsel %vm3184, 1, 0
      %v3217 = vsel %vm3185, 1, 0
      %v3218 = vsel %vm3186, 1, 0
      %v3219 = vsel %vm3187, 1, 0
      %v3220 = vsel %vm3188, 1, 0
      %v3221 = vsel %vm3189, 1, 0
      %v3222 = vsel %vm3190, 1, 0
      %v3223 = vsel %vm3191, 1, 0
      %v3224 = vsel %vm3192, 1, 0
      %v3225 = vsel %vm3193, 1, 0
      %v3226 = vsel %vm3194, 1, 0
      %v3227 = vsel %vm3195, 1, 0
      %v3228 = vsel %vm3196, 1, 0
      %v3229 = vsel %vm3197, 1, 0
      %v3230 = vsel %vm3198, 1, 0
      %v3231 = vsel %vm3199, 1, 0
      %v3232 = vsel %vm3200, 1, 0
      %v3233 = vsel %vm3201, 1, 0
      %v3234 = vsel %vm3202, 1, 0
      %v3235 = vsel %vm3203, 1, 0
      %v3236 = vsel %vm3204, 1, 0
      %v3237 = vsel %vm3205, 1, 0
      %v3238 = vsel %vm3206, 1, 0
      %v3239 = vsel %vm3207, 1, 0
      %v3240 = vsel %vm3208, 1, 0
      %v3241 = vsel %vm3209, 1, 0
      %v3242 = vsel %vm3210, 1, 0
      %v3243 = vsel %vm3211, 1, 0
      %v3244 = vsel %vm3212, 1, 0
      %v3245 = vcvt.s32.f32 %v3213
      %v3246 = vcvt.s32.f32 %v3214
      %v3247 = vcvt.s32.f32 %v3215
      %v3248 = vcvt.s32.f32 %v3216
      %v3249 = vcvt.s32.f32 %v3217
      %v3250 = vcvt.s32.f32 %v3218
      %v3251 = vcvt.s32.f32 %v3219
      %v3252 = vcvt.s32.f32 %v3220
      %v3253 = vcvt.s32.f32 %v3221
      %v3254 = vcvt.s32.f32 %v3222
      %v3255 = vcvt.s32.f32 %v3223
      %v3256 = vcvt.s32.f32 %v3224
      %v3257 = vcvt.s32.f32 %v3225
      %v3258 = vcvt.s32.f32 %v3226
      %v3259 = vcvt.s32.f32 %v3227
      %v3260 = vcvt.s32.f32 %v3228
      %v3261 = vcvt.s32.f32 %v3229
      %v3262 = vcvt.s32.f32 %v3230
      %v3263 = vcvt.s32.f32 %v3231
      %v3264 = vcvt.s32.f32 %v3232
      %v3265 = vcvt.s32.f32 %v3233
      %v3266 = vcvt.s32.f32 %v3234
      %v3267 = vcvt.s32.f32 %v3235
      %v3268 = vcvt.s32.f32 %v3236
      %v3269 = vcvt.s32.f32 %v3237
      %v3270 = vcvt.s32.f32 %v3238
      %v3271 = vcvt.s32.f32 %v3239
      %v3272 = vcvt.s32.f32 %v3240
      %v3273 = vcvt.s32.f32 %v3241
      %v3274 = vcvt.s32.f32 %v3242
      %v3275 = vcvt.s32.f32 %v3243
      %v3276 = vcvt.s32.f32 %v3244
      %v3277 = vpack.c.bf16 %v3247, %v3245
      %v3278 = vpack.c.bf16 %v3248, %v3246
      %v3279 = vpack.c.bf16 %v3251, %v3249
      %v3280 = vpack.c.bf16 %v3252, %v3250
      %v3281 = vpack.c.bf16 %v3255, %v3253
      %v3282 = vpack.c.bf16 %v3256, %v3254
      %v3283 = vpack.c.bf16 %v3259, %v3257
      %v3284 = vpack.c.bf16 %v3260, %v3258
      %v3285 = vpack.c.bf16 %v3263, %v3261
      %v3286 = vpack.c.bf16 %v3264, %v3262
      %v3287 = vpack.c.bf16 %v3267, %v3265
      %v3288 = vpack.c.bf16 %v3268, %v3266
      %v3289 = vpack.c.bf16 %v3271, %v3269
      %v3290 = vpack.c.bf16 %v3272, %v3270
      %v3291 = vpack.c.bf16 %v3275, %v3273
      %v3292 = vpack.c.bf16 %v3276, %v3274
      %v3293 = vld [vmem:[#allocation2] sm:$0xff]
      %v3294 = vld [vmem:[#allocation2 + $0x8] sm:$0xff]
      %v3295 = vld [vmem:[#allocation2 + $0x10] sm:$0xff]
      %v3296 = vld [vmem:[#allocation2 + $0x18] sm:$0xff]
      %v3297 = vld [vmem:[#allocation2 + $0x20] sm:$0xff]
      %v3298 = vld [vmem:[#allocation2 + $0x28] sm:$0xff]
      %v3299 = vld [vmem:[#allocation2 + $0x30] sm:$0xff]
      %v3300 = vld [vmem:[#allocation2 + $0x38] sm:$0xff]
      %v3301 = vld [vmem:[#allocation2 + $0x40] sm:$0xff]
      %v3302 = vld [vmem:[#allocation2 + $0x48] sm:$0xff]
      %v3303 = vld [vmem:[#allocation2 + $0x50] sm:$0xff]
      %v3304 = vld [vmem:[#allocation2 + $0x58] sm:$0xff]
      %v3305 = vld [vmem:[#allocation2 + $0x60] sm:$0xff]
      %v3306 = vld [vmem:[#allocation2 + $0x68] sm:$0xff]
      %v3307 = vld [vmem:[#allocation2 + $0x70] sm:$0xff]
      %v3308 = vld [vmem:[#allocation2 + $0x78] sm:$0xff]
      %3309 = vmatprep.subr.bf16.mxu0 0
      %3310 = vmatpush1.bf16.msra.mxu0 %v3002
      %3311 = vmatprep.subr.bf16.mxu0 0
      %3312 = vmatpush1.bf16.msra.mxu0 %v3001
      %3313 = vmatprep.subr.bf16.mxu0 0
      %3314 = vmatpush1.bf16.msra.mxu0 %v3000
      %3315 = vmatprep.subr.bf16.mxu0 0
      %3316 = vmatpush1.bf16.msra.mxu0 %v2999
      %3317 = vmatprep.subr.bf16.mxu0 0
      %3318 = vmatpush1.bf16.msra.mxu0 %v2998
      %3319 = vmatprep.subr.bf16.mxu0 0
      %3320 = vmatpush1.bf16.msra.mxu0 %v2997
      %3321 = vmatprep.subr.bf16.mxu0 0
      %3322 = vmatpush1.bf16.msra.mxu0 %v2996
      %3323 = vmatprep.subr.bf16.mxu0 0
      %3324 = vmatpush1.bf16.msra.mxu0 %v2995
      %3325 = vmatprep.subr.bf16.mxu0 0
      %3326 = vmatpush2.bf16.msra.mxu0 %v3010
      %3327 = vmatprep.subr.bf16.mxu0 0
      %3328 = vmatpush2.bf16.msra.mxu0 %v3009
      %3329 = vmatprep.subr.bf16.mxu0 0
      %3330 = vmatpush2.bf16.msra.mxu0 %v3008
      %3331 = vmatprep.subr.bf16.mxu0 0
      %3332 = vmatpush2.bf16.msra.mxu0 %v3007
      %3333 = vmatprep.subr.bf16.mxu0 0
      %3334 = vmatpush2.bf16.msra.mxu0 %v3006
      %3335 = vmatprep.subr.bf16.mxu0 0
      %3336 = vmatpush2.bf16.msra.mxu0 %v3005
      %3337 = vmatprep.subr.bf16.mxu0 0
      %3338 = vmatpush2.bf16.msra.mxu0 %v3004
      %3339 = vmatprep.subr.bf16.mxu0 0
      %3340 = vmatpush2.bf16.msra.mxu0 %v3003
      %3341 = vmatprep.mubr.bf16.mxu0 %v3278
      %3342 = vmatmul.mubr.bf16.gmra.mxu0 %v3277
      %v3343 = vpop.f32.mrf.mxu0
      %v3344 = vadd.f32 0.0, %v3343
      %v3345 = vpop.f32.mrf.mxu0
      %v3346 = vpop.f32.mrf.mxu0
      %v3347 = vadd.f32 0.0, %v3346
      %v3348 = vpop.f32.mrf.mxu0
      %3349 = vmatprep.mubr.bf16.mxu0 %v3280
      %3350 = vmatmul.mubr.bf16.gmra.mxu0 %v3279
      %v3351 = vpop.f32.mrf.mxu0
      %v3352 = vadd.f32 0.0, %v3351
      %v3353 = vpop.f32.mrf.mxu0
      %v3354 = vpop.f32.mrf.mxu0
      %v3355 = vadd.f32 0.0, %v3354
      %v3356 = vpop.f32.mrf.mxu0
      %3357 = vmatprep.mubr.bf16.mxu0 %v3282
      %3358 = vmatmul.mubr.bf16.gmra.mxu0 %v3281
      %v3359 = vpop.f32.mrf.mxu0
      %v3360 = vadd.f32 0.0, %v3359
      %v3361 = vpop.f32.mrf.mxu0
      %v3362 = vpop.f32.mrf.mxu0
      %v3363 = vadd.f32 0.0, %v3362
      %v3364 = vpop.f32.mrf.mxu0
      %3365 = vmatprep.mubr.bf16.mxu0 %v3284
      %3366 = vmatmul.mubr.bf16.gmra.mxu0 %v3283
      %v3367 = vpop.f32.mrf.mxu0
      %v3368 = vadd.f32 0.0, %v3367
      %v3369 = vpop.f32.mrf.mxu0
      %v3370 = vpop.f32.mrf.mxu0
      %v3371 = vadd.f32 0.0, %v3370
      %v3372 = vpop.f32.mrf.mxu0
      %3373 = vmatprep.mubr.bf16.mxu0 %v3286
      %3374 = vmatmul.mubr.bf16.gmra.mxu0 %v3285
      %v3375 = vpop.f32.mrf.mxu0
      %v3376 = vadd.f32 0.0, %v3375
      %v3377 = vpop.f32.mrf.mxu0
      %v3378 = vpop.f32.mrf.mxu0
      %v3379 = vadd.f32 0.0, %v3378
      %v3380 = vpop.f32.mrf.mxu0
      %3381 = vmatprep.mubr.bf16.mxu0 %v3288
      %3382 = vmatmul.mubr.bf16.gmra.mxu0 %v3287
      %v3383 = vpop.f32.mrf.mxu0
      %v3384 = vadd.f32 0.0, %v3383
      %v3385 = vpop.f32.mrf.mxu0
      %v3386 = vpop.f32.mrf.mxu0
      %v3387 = vadd.f32 0.0, %v3386
      %v3388 = vpop.f32.mrf.mxu0
      %3389 = vmatprep.mubr.bf16.mxu0 %v3290
      %3390 = vmatmul.mubr.bf16.gmra.mxu0 %v3289
      %v3391 = vpop.f32.mrf.mxu0
      %v3392 = vadd.f32 0.0, %v3391
      %v3393 = vpop.f32.mrf.mxu0
      %v3394 = vpop.f32.mrf.mxu0
      %v3395 = vadd.f32 0.0, %v3394
      %v3396 = vpop.f32.mrf.mxu0
      %3397 = vmatprep.mubr.bf16.mxu0 %v3292
      %3398 = vmatmul.mubr.bf16.gmra.mxu0 %v3291
      %v3399 = vpop.f32.mrf.mxu0
      %v3400 = vadd.f32 0.0, %v3399
      %v3401 = vpop.f32.mrf.mxu0
      %v3402 = vpop.f32.mrf.mxu0
      %v3403 = vadd.f32 0.0, %v3402
      %v3404 = vpop.f32.mrf.mxu0
      %3405 = vdwg.mxu0
      %v3406 = vadd.f32 %v3293, %v3344
      %v3407 = vadd.f32 %v3294, %v3347
      %v3408 = vadd.f32 %v3295, %v3352
      %v3409 = vadd.f32 %v3296, %v3355
      %v3410 = vadd.f32 %v3297, %v3360
      %v3411 = vadd.f32 %v3298, %v3363
      %v3412 = vadd.f32 %v3299, %v3368
      %v3413 = vadd.f32 %v3300, %v3371
      %v3414 = vadd.f32 %v3301, %v3376
      %v3415 = vadd.f32 %v3302, %v3379
      %v3416 = vadd.f32 %v3303, %v3384
      %v3417 = vadd.f32 %v3304, %v3387
      %v3418 = vadd.f32 %v3305, %v3392
      %v3419 = vadd.f32 %v3306, %v3395
      %v3420 = vadd.f32 %v3307, %v3400
      %v3421 = vadd.f32 %v3308, %v3403
      %3422 = vst [vmem:[#allocation2] sm:$0xff] %v3406
      %3423 = vst [vmem:[#allocation2 + $0x8] sm:$0xff] %v3407
      %3424 = vst [vmem:[#allocation2 + $0x10] sm:$0xff] %v3408
      %3425 = vst [vmem:[#allocation2 + $0x18] sm:$0xff] %v3409
      %3426 = vst [vmem:[#allocation2 + $0x20] sm:$0xff] %v3410
      %3427 = vst [vmem:[#allocation2 + $0x28] sm:$0xff] %v3411
      %3428 = vst [vmem:[#allocation2 + $0x30] sm:$0xff] %v3412
      %3429 = vst [vmem:[#allocation2 + $0x38] sm:$0xff] %v3413
      %3430 = vst [vmem:[#allocation2 + $0x40] sm:$0xff] %v3414
      %3431 = vst [vmem:[#allocation2 + $0x48] sm:$0xff] %v3415
      %3432 = vst [vmem:[#allocation2 + $0x50] sm:$0xff] %v3416
      %3433 = vst [vmem:[#allocation2 + $0x58] sm:$0xff] %v3417
      %3434 = vst [vmem:[#allocation2 + $0x60] sm:$0xff] %v3418
      %3435 = vst [vmem:[#allocation2 + $0x68] sm:$0xff] %v3419
      %3436 = vst [vmem:[#allocation2 + $0x70] sm:$0xff] %v3420
      %3437 = vst [vmem:[#allocation2 + $0x78] sm:$0xff] %v3421
      %p3438 = scmp.eq.s32.totalorder %s27, 1
      // Predicated region
      $region81: #{cogn_layer_forward.1} parent=75 // pred_check
        %p3439 = pneg %p3438
      $region82: #{cogn_layer_forward.1} parent=75 // pred_check_branch
        %3441 = sbr.rel (%p3439) target = $region84
      $region83: #{cogn_layer_forward.1} parent=75 // pred_region
        %v3442 = vld [vmem:[#allocation2] sm:$0xff]
        %v3443 = vld [vmem:[#allocation2 + $0x8] sm:$0xff]
        %v3444 = vld [vmem:[#allocation2 + $0x10] sm:$0xff]
        %v3445 = vld [vmem:[#allocation2 + $0x18] sm:$0xff]
        %v3446 = vld [vmem:[#allocation2 + $0x20] sm:$0xff]
        %v3447 = vld [vmem:[#allocation2 + $0x28] sm:$0xff]
        %v3448 = vld [vmem:[#allocation2 + $0x30] sm:$0xff]
        %v3449 = vld [vmem:[#allocation2 + $0x38] sm:$0xff]
        %v3450 = vld [vmem:[#allocation2 + $0x40] sm:$0xff]
        %v3451 = vld [vmem:[#allocation2 + $0x48] sm:$0xff]
        %v3452 = vld [vmem:[#allocation2 + $0x50] sm:$0xff]
        %v3453 = vld [vmem:[#allocation2 + $0x58] sm:$0xff]
        %v3454 = vld [vmem:[#allocation2 + $0x60] sm:$0xff]
        %v3455 = vld [vmem:[#allocation2 + $0x68] sm:$0xff]
        %v3456 = vld [vmem:[#allocation2 + $0x70] sm:$0xff]
        %v3457 = vld [vmem:[#allocation2 + $0x78] sm:$0xff]
        %v3458 = vpack.c.bf16 %v3443, %v3442
        %v3459 = vpack.c.bf16 %v3445, %v3444
        %v3460 = vpack.c.bf16 %v3447, %v3446
        %v3461 = vpack.c.bf16 %v3449, %v3448
        %v3462 = vpack.c.bf16 %v3451, %v3450
        %v3463 = vpack.c.bf16 %v3453, %v3452
        %v3464 = vpack.c.bf16 %v3455, %v3454
        %v3465 = vpack.c.bf16 %v3457, %v3456
        %v3466 = vld [vmem:[%s10] sm:$0xf]
        %v3467 = vld [vmem:[%s10 + $0x4] sm:$0xf]
        %v3468 = vld [vmem:[%s10 + $0x8] sm:$0xf]
        %v3469 = vld [vmem:[%s10 + $0xc] sm:$0xf]
        %v3470 = vld [vmem:[%s10 + $0x10] sm:$0xf]
        %v3471 = vld [vmem:[%s10 + $0x14] sm:$0xf]
        %v3472 = vld [vmem:[%s10 + $0x18] sm:$0xf]
        %v3473 = vld [vmem:[%s10 + $0x1c] sm:$0xf]
        %v3474 = vld [vmem:[%s10 + $0x20] sm:$0xf]
        %v3475 = vld [vmem:[%s10 + $0x24] sm:$0xf]
        %v3476 = vld [vmem:[%s10 + $0x28] sm:$0xf]
        %v3477 = vld [vmem:[%s10 + $0x2c] sm:$0xf]
        %v3478 = vld [vmem:[%s10 + $0x30] sm:$0xf]
        %v3479 = vld [vmem:[%s10 + $0x34] sm:$0xf]
        %v3480 = vld [vmem:[%s10 + $0x38] sm:$0xf]
        %v3481 = vld [vmem:[%s10 + $0x3c] sm:$0xf]
        %v3482 = vld [vmem:[%s11] sm:$0x1]
        %v3484 = vlaneseq
        %v3485 = vshrl.u32 %v3484, 7
        %v3486 = vsub.s32 0, %v3485
        %v3487 = vrot.slane %v3482, %v3486
        %v3505 = vunpack.c.l.b16 %v3466
        %v3506 = vunpack.c.l.b16 %v3467
        %v3507 = vunpack.c.l.b16 %v3468
        %v3508 = vunpack.c.l.b16 %v3469
        %v3509 = vunpack.c.l.b16 %v3470
        %v3510 = vunpack.c.l.b16 %v3471
        %v3511 = vunpack.c.l.b16 %v3472
        %v3512 = vunpack.c.l.b16 %v3473
        %v3513 = vunpack.c.l.b16 %v3474
        %v3514 = vunpack.c.l.b16 %v3475
        %v3515 = vunpack.c.l.b16 %v3476
        %v3516 = vunpack.c.l.b16 %v3477
        %v3517 = vunpack.c.l.b16 %v3478
        %v3518 = vunpack.c.l.b16 %v3479
        %v3519 = vunpack.c.l.b16 %v3480
        %v3520 = vunpack.c.l.b16 %v3481
        %v3521 = vpack.c.b16 %v3506, %v3505
        %v3522 = vpack.c.b16 %v3508, %v3507
        %v3523 = vpack.c.b16 %v3510, %v3509
        %v3524 = vpack.c.b16 %v3512, %v3511
        %v3525 = vpack.c.b16 %v3514, %v3513
        %v3526 = vpack.c.b16 %v3516, %v3515
        %v3527 = vpack.c.b16 %v3518, %v3517
        %v3528 = vpack.c.b16 %v3520, %v3519
        %3537 = vmatprep.subr.bf16.mxu0 0
        %3538 = vmatpush1.bf16.msra.mxu0 %v3528
        %3539 = vmatprep.subr.bf16.mxu0 0
        %3540 = vmatpush1.bf16.msra.mxu0 %v3527
        %3541 = vmatprep.subr.bf16.mxu0 0
        %3542 = vmatpush1.bf16.msra.mxu0 %v3526
        %3543 = vmatprep.subr.bf16.mxu0 0
        %3544 = vmatpush1.bf16.msra.mxu0 %v3525
        %3545 = vmatprep.subr.bf16.mxu0 0
        %3546 = vmatpush1.bf16.msra.mxu0 %v3524
        %3547 = vmatprep.subr.bf16.mxu0 0
        %3548 = vmatpush1.bf16.msra.mxu0 %v3523
        %3549 = vmatprep.subr.bf16.mxu0 0
        %3550 = vmatpush1.bf16.msra.mxu0 %v3522
        %3551 = vmatprep.subr.bf16.mxu0 0
        %3552 = vmatpush1.bf16.msra.mxu0 %v3521
        %3553 = vmatprep.subr.bf16.mxu0 0
        %3554 = vmatpush2.bf16.msra.mxu0 0
        %3555 = vmatprep.subr.bf16.mxu0 0
        %3556 = vmatpush2.bf16.msra.mxu0 0
        %3557 = vmatprep.subr.bf16.mxu0 0
        %3558 = vmatpush2.bf16.msra.mxu0 0
        %3559 = vmatprep.subr.bf16.mxu0 0
        %3560 = vmatpush2.bf16.msra.mxu0 0
        %3561 = vmatprep.subr.bf16.mxu0 0
        %3562 = vmatpush2.bf16.msra.mxu0 0
        %3563 = vmatprep.subr.bf16.mxu0 0
        %3564 = vmatpush2.bf16.msra.mxu0 0
        %3565 = vmatprep.subr.bf16.mxu0 0
        %3566 = vmatpush2.bf16.msra.mxu0 0
        %3567 = vmatprep.subr.bf16.mxu0 0
        %3568 = vmatpush2.bf16.msra.mxu0 0
        %3569 = vmatprep.mubr.bf16.mxu0 0
        %3570 = vmatmul.mubr.bf16.gmra.mxu0 %v3458
        %v3571 = vpop.f32.mrf.mxu0
        %v3572 = vadd.f32 %v3487, %v3571
        %v3573 = vpop.f32.mrf.mxu0
        %v3574 = vpop.f32.mrf.mxu0
        %v3575 = vadd.f32 %v3487, %v3574
        %v3576 = vpop.f32.mrf.mxu0
        %3577 = vmatprep.mubr.bf16.mxu0 0
        %3578 = vmatmul.mubr.bf16.gmra.mxu0 %v3459
        %v3579 = vpop.f32.mrf.mxu0
        %v3580 = vadd.f32 %v3487, %v3579
        %v3581 = vpop.f32.mrf.mxu0
        %v3582 = vpop.f32.mrf.mxu0
        %v3583 = vadd.f32 %v3487, %v3582
        %v3584 = vpop.f32.mrf.mxu0
        %3585 = vmatprep.mubr.bf16.mxu0 0
        %3586 = vmatmul.mubr.bf16.gmra.mxu0 %v3460
        %v3587 = vpop.f32.mrf.mxu0
        %v3588 = vadd.f32 %v3487, %v3587
        %v3589 = vpop.f32.mrf.mxu0
        %v3590 = vpop.f32.mrf.mxu0
        %v3591 = vadd.f32 %v3487, %v3590
        %v3592 = vpop.f32.mrf.mxu0
        %3593 = vmatprep.mubr.bf16.mxu0 0
        %3594 = vmatmul.mubr.bf16.gmra.mxu0 %v3461
        %v3595 = vpop.f32.mrf.mxu0
        %v3596 = vadd.f32 %v3487, %v3595
        %v3597 = vpop.f32.mrf.mxu0
        %v3598 = vpop.f32.mrf.mxu0
        %v3599 = vadd.f32 %v3487, %v3598
        %v3600 = vpop.f32.mrf.mxu0
        %3601 = vmatprep.mubr.bf16.mxu0 0
        %3602 = vmatmul.mubr.bf16.gmra.mxu0 %v3462
        %v3603 = vpop.f32.mrf.mxu0
        %v3604 = vadd.f32 %v3487, %v3603
        %v3605 = vpop.f32.mrf.mxu0
        %v3606 = vpop.f32.mrf.mxu0
        %v3607 = vadd.f32 %v3487, %v3606
        %v3608 = vpop.f32.mrf.mxu0
        %3609 = vmatprep.mubr.bf16.mxu0 0
        %3610 = vmatmul.mubr.bf16.gmra.mxu0 %v3463
        %v3611 = vpop.f32.mrf.mxu0
        %v3612 = vadd.f32 %v3487, %v3611
        %v3613 = vpop.f32.mrf.mxu0
        %v3614 = vpop.f32.mrf.mxu0
        %v3615 = vadd.f32 %v3487, %v3614
        %v3616 = vpop.f32.mrf.mxu0
        %3617 = vmatprep.mubr.bf16.mxu0 0
        %3618 = vmatmul.mubr.bf16.gmra.mxu0 %v3464
        %v3619 = vpop.f32.mrf.mxu0
        %v3620 = vadd.f32 %v3487, %v3619
        %v3621 = vpop.f32.mrf.mxu0
        %v3622 = vpop.f32.mrf.mxu0
        %v3623 = vadd.f32 %v3487, %v3622
        %v3624 = vpop.f32.mrf.mxu0
        %3625 = vmatprep.mubr.bf16.mxu0 0
        %3626 = vmatmul.mubr.bf16.gmra.mxu0 %v3465
        %v3627 = vpop.f32.mrf.mxu0
        %v3628 = vadd.f32 %v3487, %v3627
        %v3629 = vpop.f32.mrf.mxu0
        %v3630 = vpop.f32.mrf.mxu0
        %v3631 = vadd.f32 %v3487, %v3630
        %v3632 = vpop.f32.mrf.mxu0
        %3633 = vdwg.mxu0
        %v3634 = vxor.u32 %v3572, 2147483648
        %v3635 = vxor.u32 %v3575, 2147483648
        %v3636 = vxor.u32 %v3580, 2147483648
        %v3637 = vxor.u32 %v3583, 2147483648
        %v3638 = vxor.u32 %v3588, 2147483648
        %v3639 = vxor.u32 %v3591, 2147483648
        %v3640 = vxor.u32 %v3596, 2147483648
        %v3641 = vxor.u32 %v3599, 2147483648
        %v3642 = vxor.u32 %v3604, 2147483648
        %v3643 = vxor.u32 %v3607, 2147483648
        %v3644 = vxor.u32 %v3612, 2147483648
        %v3645 = vxor.u32 %v3615, 2147483648
        %v3646 = vxor.u32 %v3620, 2147483648
        %v3647 = vxor.u32 %v3623, 2147483648
        %v3648 = vxor.u32 %v3628, 2147483648
        %v3649 = vxor.u32 %v3631, 2147483648
        %v3650 = vmul.f32 %v3634, 1.442695
        %v3651 = vpow.pop %v3650
        %v3652 = vmul.f32 %v3635, 1.442695
        %v3653 = vpow.pop %v3652
        %v3654 = vmul.f32 %v3636, 1.442695
        %v3655 = vpow.pop %v3654
        %v3656 = vmul.f32 %v3637, 1.442695
        %v3657 = vpow.pop %v3656
        %v3658 = vmul.f32 %v3638, 1.442695
        %v3659 = vpow.pop %v3658
        %v3660 = vmul.f32 %v3639, 1.442695
        %v3661 = vpow.pop %v3660
        %v3662 = vmul.f32 %v3640, 1.442695
        %v3663 = vpow.pop %v3662
        %v3664 = vmul.f32 %v3641, 1.442695
        %v3665 = vpow.pop %v3664
        %v3666 = vmul.f32 %v3642, 1.442695
        %v3667 = vpow.pop %v3666
        %v3668 = vmul.f32 %v3643, 1.442695
        %v3669 = vpow.pop %v3668
        %v3670 = vmul.f32 %v3644, 1.442695
        %v3671 = vpow.pop %v3670
        %v3672 = vmul.f32 %v3645, 1.442695
        %v3673 = vpow.pop %v3672
        %v3674 = vmul.f32 %v3646, 1.442695
        %v3675 = vpow.pop %v3674
        %v3676 = vmul.f32 %v3647, 1.442695
        %v3677 = vpow.pop %v3676
        %v3678 = vmul.f32 %v3648, 1.442695
        %v3679 = vpow.pop %v3678
        %v3680 = vmul.f32 %v3649, 1.442695
        %v3681 = vpow.pop %v3680
        %v3682 = vadd.f32 %v3651, 1.0
        %v3683 = vadd.f32 %v3653, 1.0
        %v3684 = vadd.f32 %v3655, 1.0
        %v3685 = vadd.f32 %v3657, 1.0
        %v3686 = vadd.f32 %v3659, 1.0
        %v3687 = vadd.f32 %v3661, 1.0
        %v3688 = vadd.f32 %v3663, 1.0
        %v3689 = vadd.f32 %v3665, 1.0
        %v3690 = vadd.f32 %v3667, 1.0
        %v3691 = vadd.f32 %v3669, 1.0
        %v3692 = vadd.f32 %v3671, 1.0
        %v3693 = vadd.f32 %v3673, 1.0
        %v3694 = vadd.f32 %v3675, 1.0
        %v3695 = vadd.f32 %v3677, 1.0
        %v3696 = vadd.f32 %v3679, 1.0
        %v3697 = vadd.f32 %v3681, 1.0
        %v3698 = vrcp.pop %v3682
        %v3699 = vmul.f32 1.0, %v3698
        %v3700 = vrcp.pop %v3683
        %v3701 = vmul.f32 1.0, %v3700
        %v3702 = vrcp.pop %v3684
        %v3703 = vmul.f32 1.0, %v3702
        %v3704 = vrcp.pop %v3685
        %v3705 = vmul.f32 1.0, %v3704
        %v3706 = vrcp.pop %v3686
        %v3707 = vmul.f32 1.0, %v3706
        %v3708 = vrcp.pop %v3687
        %v3709 = vmul.f32 1.0, %v3708
        %v3710 = vrcp.pop %v3688
        %v3711 = vmul.f32 1.0, %v3710
        %v3712 = vrcp.pop %v3689
        %v3713 = vmul.f32 1.0, %v3712
        %v3714 = vrcp.pop %v3690
        %v3715 = vmul.f32 1.0, %v3714
        %v3716 = vrcp.pop %v3691
        %v3717 = vmul.f32 1.0, %v3716
        %v3718 = vrcp.pop %v3692
        %v3719 = vmul.f32 1.0, %v3718
        %v3720 = vrcp.pop %v3693
        %v3721 = vmul.f32 1.0, %v3720
        %v3722 = vrcp.pop %v3694
        %v3723 = vmul.f32 1.0, %v3722
        %v3724 = vrcp.pop %v3695
        %v3725 = vmul.f32 1.0, %v3724
        %v3726 = vrcp.pop %v3696
        %v3727 = vmul.f32 1.0, %v3726
        %v3728 = vrcp.pop %v3697
        %v3729 = vmul.f32 1.0, %v3728
        %v3730 = vmul.f32 %v3572, %v3699
        %v3731 = vmul.f32 %v3575, %v3701
        %v3732 = vmul.f32 %v3580, %v3703
        %v3733 = vmul.f32 %v3583, %v3705
        %v3734 = vmul.f32 %v3588, %v3707
        %v3735 = vmul.f32 %v3591, %v3709
        %v3736 = vmul.f32 %v3596, %v3711
        %v3737 = vmul.f32 %v3599, %v3713
        %v3738 = vmul.f32 %v3604, %v3715
        %v3739 = vmul.f32 %v3607, %v3717
        %v3740 = vmul.f32 %v3612, %v3719
        %v3741 = vmul.f32 %v3615, %v3721
        %v3742 = vmul.f32 %v3620, %v3723
        %v3743 = vmul.f32 %v3623, %v3725
        %v3744 = vmul.f32 %v3628, %v3727
        %v3745 = vmul.f32 %v3631, %v3729
        %v3746 = vpack.c.bf16 %v3731, %v3730
        %v3747 = vpack.c.bf16 %v3733, %v3732
        %v3748 = vpack.c.bf16 %v3735, %v3734
        %v3749 = vpack.c.bf16 %v3737, %v3736
        %v3750 = vpack.c.bf16 %v3739, %v3738
        %v3751 = vpack.c.bf16 %v3741, %v3740
        %v3752 = vpack.c.bf16 %v3743, %v3742
        %v3753 = vpack.c.bf16 %v3745, %v3744
        %v3754 = vld [vmem:[%s12] sm:$0xf]
        %v3755 = vld [vmem:[%s12 + $0x4] sm:$0xf]
        %v3756 = vld [vmem:[%s12 + $0x8] sm:$0xf]
        %v3757 = vld [vmem:[%s12 + $0xc] sm:$0xf]
        %v3758 = vld [vmem:[%s12 + $0x10] sm:$0xf]
        %v3759 = vld [vmem:[%s12 + $0x14] sm:$0xf]
        %v3760 = vld [vmem:[%s12 + $0x18] sm:$0xf]
        %v3761 = vld [vmem:[%s12 + $0x1c] sm:$0xf]
        %v3762 = vld [vmem:[%s12 + $0x20] sm:$0xf]
        %v3763 = vld [vmem:[%s12 + $0x24] sm:$0xf]
        %v3764 = vld [vmem:[%s12 + $0x28] sm:$0xf]
        %v3765 = vld [vmem:[%s12 + $0x2c] sm:$0xf]
        %v3766 = vld [vmem:[%s12 + $0x30] sm:$0xf]
        %v3767 = vld [vmem:[%s12 + $0x34] sm:$0xf]
        %v3768 = vld [vmem:[%s12 + $0x38] sm:$0xf]
        %v3769 = vld [vmem:[%s12 + $0x3c] sm:$0xf]
        %v3770 = vld [vmem:[%s13] sm:$0x1]
        %v3772 = vlaneseq
        %v3773 = vshrl.u32 %v3772, 7
        %v3774 = vsub.s32 0, %v3773
        %v3775 = vrot.slane %v3770, %v3774
        %v3793 = vunpack.c.l.b16 %v3754
        %v3794 = vunpack.c.l.b16 %v3755
        %v3795 = vunpack.c.l.b16 %v3756
        %v3796 = vunpack.c.l.b16 %v3757
        %v3797 = vunpack.c.l.b16 %v3758
        %v3798 = vunpack.c.l.b16 %v3759
        %v3799 = vunpack.c.l.b16 %v3760
        %v3800 = vunpack.c.l.b16 %v3761
        %v3801 = vunpack.c.l.b16 %v3762
        %v3802 = vunpack.c.l.b16 %v3763
        %v3803 = vunpack.c.l.b16 %v3764
        %v3804 = vunpack.c.l.b16 %v3765
        %v3805 = vunpack.c.l.b16 %v3766
        %v3806 = vunpack.c.l.b16 %v3767
        %v3807 = vunpack.c.l.b16 %v3768
        %v3808 = vunpack.c.l.b16 %v3769
        %v3809 = vpack.c.b16 %v3794, %v3793
        %v3810 = vpack.c.b16 %v3796, %v3795
        %v3811 = vpack.c.b16 %v3798, %v3797
        %v3812 = vpack.c.b16 %v3800, %v3799
        %v3813 = vpack.c.b16 %v3802, %v3801
        %v3814 = vpack.c.b16 %v3804, %v3803
        %v3815 = vpack.c.b16 %v3806, %v3805
        %v3816 = vpack.c.b16 %v3808, %v3807
        %3825 = vmatprep.subr.bf16.mxu0 0
        %3826 = vmatpush1.bf16.msra.mxu0 %v3816
        %3827 = vmatprep.subr.bf16.mxu0 0
        %3828 = vmatpush1.bf16.msra.mxu0 %v3815
        %3829 = vmatprep.subr.bf16.mxu0 0
        %3830 = vmatpush1.bf16.msra.mxu0 %v3814
        %3831 = vmatprep.subr.bf16.mxu0 0
        %3832 = vmatpush1.bf16.msra.mxu0 %v3813
        %3833 = vmatprep.subr.bf16.mxu0 0
        %3834 = vmatpush1.bf16.msra.mxu0 %v3812
        %3835 = vmatprep.subr.bf16.mxu0 0
        %3836 = vmatpush1.bf16.msra.mxu0 %v3811
        %3837 = vmatprep.subr.bf16.mxu0 0
        %3838 = vmatpush1.bf16.msra.mxu0 %v3810
        %3839 = vmatprep.subr.bf16.mxu0 0
        %3840 = vmatpush1.bf16.msra.mxu0 %v3809
        %3841 = vmatprep.subr.bf16.mxu0 0
        %3842 = vmatpush2.bf16.msra.mxu0 0
        %3843 = vmatprep.subr.bf16.mxu0 0
        %3844 = vmatpush2.bf16.msra.mxu0 0
        %3845 = vmatprep.subr.bf16.mxu0 0
        %3846 = vmatpush2.bf16.msra.mxu0 0
        %3847 = vmatprep.subr.bf16.mxu0 0
        %3848 = vmatpush2.bf16.msra.mxu0 0
        %3849 = vmatprep.subr.bf16.mxu0 0
        %3850 = vmatpush2.bf16.msra.mxu0 0
        %3851 = vmatprep.subr.bf16.mxu0 0
        %3852 = vmatpush2.bf16.msra.mxu0 0
        %3853 = vmatprep.subr.bf16.mxu0 0
        %3854 = vmatpush2.bf16.msra.mxu0 0
        %3855 = vmatprep.subr.bf16.mxu0 0
        %3856 = vmatpush2.bf16.msra.mxu0 0
        %3857 = vmatprep.mubr.bf16.mxu0 0
        %3858 = vmatmul.mubr.bf16.gmra.mxu0 %v3746
        %v3859 = vpop.f32.mrf.mxu0
        %v3860 = vadd.f32 %v3775, %v3859
        %v3861 = vpop.f32.mrf.mxu0
        %v3862 = vpop.f32.mrf.mxu0
        %v3863 = vadd.f32 %v3775, %v3862
        %v3864 = vpop.f32.mrf.mxu0
        %3865 = vmatprep.mubr.bf16.mxu0 0
        %3866 = vmatmul.mubr.bf16.gmra.mxu0 %v3747
        %v3867 = vpop.f32.mrf.mxu0
        %v3868 = vadd.f32 %v3775, %v3867
        %v3869 = vpop.f32.mrf.mxu0
        %v3870 = vpop.f32.mrf.mxu0
        %v3871 = vadd.f32 %v3775, %v3870
        %v3872 = vpop.f32.mrf.mxu0
        %3873 = vmatprep.mubr.bf16.mxu0 0
        %3874 = vmatmul.mubr.bf16.gmra.mxu0 %v3748
        %v3875 = vpop.f32.mrf.mxu0
        %v3876 = vadd.f32 %v3775, %v3875
        %v3877 = vpop.f32.mrf.mxu0
        %v3878 = vpop.f32.mrf.mxu0
        %v3879 = vadd.f32 %v3775, %v3878
        %v3880 = vpop.f32.mrf.mxu0
        %3881 = vmatprep.mubr.bf16.mxu0 0
        %3882 = vmatmul.mubr.bf16.gmra.mxu0 %v3749
        %v3883 = vpop.f32.mrf.mxu0
        %v3884 = vadd.f32 %v3775, %v3883
        %v3885 = vpop.f32.mrf.mxu0
        %v3886 = vpop.f32.mrf.mxu0
        %v3887 = vadd.f32 %v3775, %v3886
        %v3888 = vpop.f32.mrf.mxu0
        %3889 = vmatprep.mubr.bf16.mxu0 0
        %3890 = vmatmul.mubr.bf16.gmra.mxu0 %v3750
        %v3891 = vpop.f32.mrf.mxu0
        %v3892 = vadd.f32 %v3775, %v3891
        %v3893 = vpop.f32.mrf.mxu0
        %v3894 = vpop.f32.mrf.mxu0
        %v3895 = vadd.f32 %v3775, %v3894
        %v3896 = vpop.f32.mrf.mxu0
        %3897 = vmatprep.mubr.bf16.mxu0 0
        %3898 = vmatmul.mubr.bf16.gmra.mxu0 %v3751
        %v3899 = vpop.f32.mrf.mxu0
        %v3900 = vadd.f32 %v3775, %v3899
        %v3901 = vpop.f32.mrf.mxu0
        %v3902 = vpop.f32.mrf.mxu0
        %v3903 = vadd.f32 %v3775, %v3902
        %v3904 = vpop.f32.mrf.mxu0
        %3905 = vmatprep.mubr.bf16.mxu0 0
        %3906 = vmatmul.mubr.bf16.gmra.mxu0 %v3752
        %v3907 = vpop.f32.mrf.mxu0
        %v3908 = vadd.f32 %v3775, %v3907
        %v3909 = vpop.f32.mrf.mxu0
        %v3910 = vpop.f32.mrf.mxu0
        %v3911 = vadd.f32 %v3775, %v3910
        %v3912 = vpop.f32.mrf.mxu0
        %3913 = vmatprep.mubr.bf16.mxu0 0
        %3914 = vmatmul.mubr.bf16.gmra.mxu0 %v3753
        %v3915 = vpop.f32.mrf.mxu0
        %v3916 = vadd.f32 %v3775, %v3915
        %v3917 = vpop.f32.mrf.mxu0
        %v3918 = vpop.f32.mrf.mxu0
        %v3919 = vadd.f32 %v3775, %v3918
        %v3920 = vpop.f32.mrf.mxu0
        %3921 = vdwg.mxu0
        %v3922 = vxor.u32 %v3860, 2147483648
        %v3923 = vxor.u32 %v3863, 2147483648
        %v3924 = vxor.u32 %v3868, 2147483648
        %v3925 = vxor.u32 %v3871, 2147483648
        %v3926 = vxor.u32 %v3876, 2147483648
        %v3927 = vxor.u32 %v3879, 2147483648
        %v3928 = vxor.u32 %v3884, 2147483648
        %v3929 = vxor.u32 %v3887, 2147483648
        %v3930 = vxor.u32 %v3892, 2147483648
        %v3931 = vxor.u32 %v3895, 2147483648
        %v3932 = vxor.u32 %v3900, 2147483648
        %v3933 = vxor.u32 %v3903, 2147483648
        %v3934 = vxor.u32 %v3908, 2147483648
        %v3935 = vxor.u32 %v3911, 2147483648
        %v3936 = vxor.u32 %v3916, 2147483648
        %v3937 = vxor.u32 %v3919, 2147483648
        %v3938 = vmul.f32 %v3922, 1.442695
        %v3939 = vpow.pop %v3938
        %v3940 = vmul.f32 %v3923, 1.442695
        %v3941 = vpow.pop %v3940
        %v3942 = vmul.f32 %v3924, 1.442695
        %v3943 = vpow.pop %v3942
        %v3944 = vmul.f32 %v3925, 1.442695
        %v3945 = vpow.pop %v3944
        %v3946 = vmul.f32 %v3926, 1.442695
        %v3947 = vpow.pop %v3946
        %v3948 = vmul.f32 %v3927, 1.442695
        %v3949 = vpow.pop %v3948
        %v3950 = vmul.f32 %v3928, 1.442695
        %v3951 = vpow.pop %v3950
        %v3952 = vmul.f32 %v3929, 1.442695
        %v3953 = vpow.pop %v3952
        %v3954 = vmul.f32 %v3930, 1.442695
        %v3955 = vpow.pop %v3954
        %v3956 = vmul.f32 %v3931, 1.442695
        %v3957 = vpow.pop %v3956
        %v3958 = vmul.f32 %v3932, 1.442695
        %v3959 = vpow.pop %v3958
        %v3960 = vmul.f32 %v3933, 1.442695
        %v3961 = vpow.pop %v3960
        %v3962 = vmul.f32 %v3934, 1.442695
        %v3963 = vpow.pop %v3962
        %v3964 = vmul.f32 %v3935, 1.442695
        %v3965 = vpow.pop %v3964
        %v3966 = vmul.f32 %v3936, 1.442695
        %v3967 = vpow.pop %v3966
        %v3968 = vmul.f32 %v3937, 1.442695
        %v3969 = vpow.pop %v3968
        %v3970 = vadd.f32 %v3939, 1.0
        %v3971 = vadd.f32 %v3941, 1.0
        %v3972 = vadd.f32 %v3943, 1.0
        %v3973 = vadd.f32 %v3945, 1.0
        %v3974 = vadd.f32 %v3947, 1.0
        %v3975 = vadd.f32 %v3949, 1.0
        %v3976 = vadd.f32 %v3951, 1.0
        %v3977 = vadd.f32 %v3953, 1.0
        %v3978 = vadd.f32 %v3955, 1.0
        %v3979 = vadd.f32 %v3957, 1.0
        %v3980 = vadd.f32 %v3959, 1.0
        %v3981 = vadd.f32 %v3961, 1.0
        %v3982 = vadd.f32 %v3963, 1.0
        %v3983 = vadd.f32 %v3965, 1.0
        %v3984 = vadd.f32 %v3967, 1.0
        %v3985 = vadd.f32 %v3969, 1.0
        %v3986 = vrcp.pop %v3970
        %v3987 = vmul.f32 1.0, %v3986
        %v3988 = vrcp.pop %v3971
        %v3989 = vmul.f32 1.0, %v3988
        %v3990 = vrcp.pop %v3972
        %v3991 = vmul.f32 1.0, %v3990
        %v3992 = vrcp.pop %v3973
        %v3993 = vmul.f32 1.0, %v3992
        %v3994 = vrcp.pop %v3974
        %v3995 = vmul.f32 1.0, %v3994
        %v3996 = vrcp.pop %v3975
        %v3997 = vmul.f32 1.0, %v3996
        %v3998 = vrcp.pop %v3976
        %v3999 = vmul.f32 1.0, %v3998
        %v4000 = vrcp.pop %v3977
        %v4001 = vmul.f32 1.0, %v4000
        %v4002 = vrcp.pop %v3978
        %v4003 = vmul.f32 1.0, %v4002
        %v4004 = vrcp.pop %v3979
        %v4005 = vmul.f32 1.0, %v4004
        %v4006 = vrcp.pop %v3980
        %v4007 = vmul.f32 1.0, %v4006
        %v4008 = vrcp.pop %v3981
        %v4009 = vmul.f32 1.0, %v4008
        %v4010 = vrcp.pop %v3982
        %v4011 = vmul.f32 1.0, %v4010
        %v4012 = vrcp.pop %v3983
        %v4013 = vmul.f32 1.0, %v4012
        %v4014 = vrcp.pop %v3984
        %v4015 = vmul.f32 1.0, %v4014
        %v4016 = vrcp.pop %v3985
        %v4017 = vmul.f32 1.0, %v4016
        %v4018 = vmul.f32 %v3860, %v3987
        %v4019 = vmul.f32 %v3863, %v3989
        %v4020 = vmul.f32 %v3868, %v3991
        %v4021 = vmul.f32 %v3871, %v3993
        %v4022 = vmul.f32 %v3876, %v3995
        %v4023 = vmul.f32 %v3879, %v3997
        %v4024 = vmul.f32 %v3884, %v3999
        %v4025 = vmul.f32 %v3887, %v4001
        %v4026 = vmul.f32 %v3892, %v4003
        %v4027 = vmul.f32 %v3895, %v4005
        %v4028 = vmul.f32 %v3900, %v4007
        %v4029 = vmul.f32 %v3903, %v4009
        %v4030 = vmul.f32 %v3908, %v4011
        %v4031 = vmul.f32 %v3911, %v4013
        %v4032 = vmul.f32 %v3916, %v4015
        %v4033 = vmul.f32 %v3919, %v4017
        %4034 = vst [vmem:[%s15] sm:$0xff] %v4018
        %4035 = vst [vmem:[%s15 + $0x8] sm:$0xff] %v4019
        %4036 = vst [vmem:[%s15 + $0x10] sm:$0xff] %v4020
        %4037 = vst [vmem:[%s15 + $0x18] sm:$0xff] %v4021
        %4038 = vst [vmem:[%s15 + $0x20] sm:$0xff] %v4022
        %4039 = vst [vmem:[%s15 + $0x28] sm:$0xff] %v4023
        %4040 = vst [vmem:[%s15 + $0x30] sm:$0xff] %v4024
        %4041 = vst [vmem:[%s15 + $0x38] sm:$0xff] %v4025
        %4042 = vst [vmem:[%s15 + $0x40] sm:$0xff] %v4026
        %4043 = vst [vmem:[%s15 + $0x48] sm:$0xff] %v4027
        %4044 = vst [vmem:[%s15 + $0x50] sm:$0xff] %v4028
        %4045 = vst [vmem:[%s15 + $0x58] sm:$0xff] %v4029
        %4046 = vst [vmem:[%s15 + $0x60] sm:$0xff] %v4030
        %4047 = vst [vmem:[%s15 + $0x68] sm:$0xff] %v4031
        %4048 = vst [vmem:[%s15 + $0x70] sm:$0xff] %v4032
        %4049 = vst [vmem:[%s15 + $0x78] sm:$0xff] %v4033
      $region84: #{cogn_layer_forward.1} parent=75 // pred_fallthru
        _
      %s4050 = smul.u32 32, %s27
      %p4051 = scmp.lt.s32.totalorder %s4050, 63
      %s4052 = scalar_select %p4051, %s4050, 63
      %s4053 = smul.addr %s4052, 4
      %s4054 = scalar_lea.vmem %s14, %s4053
      // Predicated region
      $region85: #{cogn_layer_forward.1} parent=75 // pred_check
        %p4055 = pneg %p354
      $region86: #{cogn_layer_forward.1} parent=75 // pred_check_branch
        %4057 = sbr.rel (%p4055) target = $region88
      $region87: #{cogn_layer_forward.1} parent=75 // pred_region
        %s4058 = smul.u32 32, %s27
      $region88: #{cogn_layer_forward.1} parent=75 // pred_fallthru
        _
      // Predicated region
      $region89: #{cogn_layer_forward.1} parent=75 // pred_check
        %p4059 = pneg %p375
      $region90: #{cogn_layer_forward.1} parent=75 // pred_check_branch
        %4061 = sbr.rel (%p4059) target = $region92
      $region91: #{cogn_layer_forward.1} parent=75 // pred_region
        _
      $region92: #{cogn_layer_forward.1} parent=75 // pred_fallthru
        _
      // Predicated region
      $region93: #{cogn_layer_forward.1} parent=75 // pred_check
        %p4062 = pneg %p375
      $region94: #{cogn_layer_forward.1} parent=75 // pred_check_branch
        %4064 = sbr.rel (%p4062) target = $region96
      $region95: #{cogn_layer_forward.1} parent=75 // pred_region
        _
      $region96: #{cogn_layer_forward.1} parent=75 // pred_fallthru
        _
    $region76: #{cogn_layer_forward.1} parent=5 // pred_fallthru
      _
    %p4065 = scmp.le.s32.totalorder 2, %s22
    // Predicated region
    $region97: #{cogn_layer_forward.1} parent=5 // pred_check
      %p4066 = pneg %p4065
    $region98: #{cogn_layer_forward.1} parent=5 // pred_check_branch
      %4068 = sbr.rel (%p4066) target = $region100
    $region99: #{cogn_layer_forward.1} parent=5 // pred_region
      %s4069 = ssub.s32 %s22, 2
      // Predicated region
      $region101: #{cogn_layer_forward.1} parent=99 // pred_check
        %p4070 = pneg %p360
      $region102: #{cogn_layer_forward.1} parent=99 // pred_check_branch
        %4072 = sbr.rel (%p4070) target = $region104
      $region103: #{cogn_layer_forward.1} parent=99 // pred_region
        %s4073 = smul.u32 32, %s28
        %p4074 = scmp.lt.s32.totalorder %s4073, 63
        %s4075 = scalar_select %p4074, %s4073, 63
        %s4076 = smul.addr %s4075, 4
        %s4077 = scalar_lea.vmem %s14, %s4076
      $region104: #{cogn_layer_forward.1} parent=99 // pred_fallthru
        _
    $region100: #{cogn_layer_forward.1} parent=5 // pred_fallthru
      _
  $region6: #{cogn_layer_forward.1} parent=0 // loop_footer
    %s26 = sadd.s32 1, %s22
  $region7: #{cogn_layer_forward.1} parent=0 // loop_footer_branch
    %21 = sbr.rel target = $region3
  $region8: #{cogn_layer_forward.1} parent=0 // loop_exit
    _

</llo_original>
